<compile_context>
chip_gen: v7x
topology: tpu7x:2x2x1
jax: 0.10.0
libtpu: 0.0.40
codegen_flags: <defaults>
</compile_context>

<pallas_src>
import functools
import math

import jax
import jax.numpy as jnp
from jax import lax
from jax.experimental import pallas as pl
from jax.experimental.pallas import tpu as pltpu

DROPOUT_P = 0.2
_INV_SQRT2 = 1.0 / math.sqrt(2.0)

# Conservative budget for keeping the weights resident in VMEM (v7x has
# 64 MiB per TensorCore; v5e/v6e have 128 MiB).
_RESIDENT_VMEM_BUDGET = 40 * 1024 * 1024


def _round_up(x, m):
    return ((x + m - 1) // m) * m


def _gelu_exact(h):
    # Exact (erf-based) GELU, matching torch.nn.functional.gelu default.
    # TODO(synk): if bit-parity with torch's exact GELU is not required, the
    # tanh-approximate form moves this work from the VPU to the EUP slot.
    return 0.5 * h * (1.0 + lax.erf(h * _INV_SQRT2))


def _ffwd_resident_kernel(x_ref, w1_ref, b1_ref, w2_ref, b2_ref, *rest, training):
    # x_ref: (tm, C), w1_ref: (C, H), b1_ref: (1, H), w2_ref: (H, C),
    # b2_ref: (1, C), [scale_ref: (tm, C)], o_ref: (tm, C)
    if training:
        scale_ref, o_ref = rest
    else:
        (o_ref,) = rest

    h = jnp.dot(x_ref[...], w1_ref[...], preferred_element_type=jnp.float32)
    h = h + b1_ref[...].astype(jnp.float32)
    h = _gelu_exact(h)

    out = jnp.dot(h.astype(w2_ref.dtype), w2_ref[...],
                  preferred_element_type=jnp.float32)
    out = out + b2_ref[...].astype(jnp.float32)

    if training:
        out = out * scale_ref[...].astype(jnp.float32)

    o_ref[...] = out.astype(o_ref.dtype)


def _ffwd_chunked_kernel(x_ref, w1_ref, b1_ref, w2_ref, b2_ref, *rest, training):
    # x_ref: (tm, C), w1_ref: (C, th), b1_ref: (1, th), w2_ref: (th, C),
    # b2_ref: (1, C), [scale_ref: (tm, C)], o_ref: (tm, C), acc_ref: (tm, C) f32
    if training:
        scale_ref, o_ref, acc_ref = rest
    else:
        o_ref, acc_ref = rest

    k = pl.program_id(1)

    @pl.when(k == 0)
    def _():
        # Fold b2 into the accumulator init (saves an add in the finalize).
        acc_ref[...] = jnp.broadcast_to(b2_ref[...].astype(jnp.float32),
                                        acc_ref.shape)

    h = jnp.dot(x_ref[...], w1_ref[...], preferred_element_type=jnp.float32)
    h = h + b1_ref[...].astype(jnp.float32)
    h = _gelu_exact(h)

    acc_ref[...] += jnp.dot(h.astype(w2_ref.dtype), w2_ref[...],
                            preferred_element_type=jnp.float32)

    @pl.when(k == pl.num_programs(1) - 1)
    def _():
        out = acc_ref[...]
        if training:
            out = out * scale_ref[...].astype(jnp.float32)
        o_ref[...] = out.astype(o_ref.dtype)


def feed_forward(x, w1, b1, w2, b2, *, training=False, dropout_p=DROPOUT_P,
                 rng=None, tm=512, th=None, compute_dtype=jnp.bfloat16,
                 max_resident_bytes=_RESIDENT_VMEM_BUDGET):
    """x: (B, T, C) -> (B, T, C).  Eval mode (training=False) is deterministic."""
    B, T, C = x.shape
    H = w1.shape[1]
    M = B * T
    out_dtype = x.dtype
    c_itemsize = jnp.dtype(compute_dtype).itemsize
    o_itemsize = jnp.dtype(out_dtype).itemsize

    # bf16 operands to the MXU; f32 accumulation via preferred_element_type.
    x2 = x.reshape(M, C).astype(compute_dtype)
    w1c = w1.astype(compute_dtype)
    w2c = w2.astype(compute_dtype)
    b1_2 = b1.reshape(1, H).astype(jnp.float32)
    b2_2 = b2.reshape(1, C).astype(jnp.float32)

    # Row tile: clamp for small M, then make sure the parallel axis has >= 2
    # tiles so both v7x TensorCores get work on small batches.
    tm = min(tm, _round_up(M, 8))
    if M > 8 and _round_up(M, tm) // tm < 2:
        tm = max(8, _round_up(-(-M // 2), 8))
    m_pad = _round_up(M, tm)
    if m_pad != M:
        # TODO(synk): mask the ragged tile in-kernel instead of this HBM pad.
        x2 = jnp.pad(x2, ((0, m_pad - M), (0, 0)))

    # Inverted-dropout scale drawn host-side (works in interpret mode and on
    # TPU). TODO(synk): mask is not bit-matched to torch's RNG stream.
    inputs = [x2, w1c, b1_2, w2c, b2_2]
    if training:
        if rng is None:
            rng = jax.random.PRNGKey(0)
        keep = jax.random.bernoulli(rng, 1.0 - dropout_p, (m_pad, C))
        scale = keep.astype(compute_dtype) * jnp.asarray(1.0 / (1.0 - dropout_p),
                                                         compute_dtype)
        inputs.append(scale)

    # --- decide resident-weight vs chunked path from the VMEM footprint -----
    weight_bytes = 2 * C * H * c_itemsize
    row_tile_bytes = tm * C * (2 * c_itemsize + 2 * o_itemsize)  # x + out, dbl-buf
    if training:
        row_tile_bytes += 2 * tm * C * c_itemsize                # scale, dbl-buf
    inter_bytes = tm * H * 4                                     # (tm, H) f32
    bias_bytes = 2 * (H + C) * 4
    need_resident = weight_bytes + row_tile_bytes + inter_bytes + bias_bytes
    use_resident = need_resident <= max_resident_bytes

    if use_resident:
        kernel = functools.partial(_ffwd_resident_kernel, training=training)
        grid = (m_pad // tm,)
        in_specs = [
            pl.BlockSpec((tm, C), lambda i: (i, 0)),   # x rows (streamed)
            pl.BlockSpec((C, H), lambda i: (0, 0)),    # W1 resident
            pl.BlockSpec((1, H), lambda i: (0, 0)),    # b1 resident
            pl.BlockSpec((H, C), lambda i: (0, 0)),    # W2 resident
            pl.BlockSpec((1, C), lambda i: (0, 0)),    # b2 resident
        ]
        if training:
            in_specs.append(pl.BlockSpec((tm, C), lambda i: (i, 0)))
        out_specs = pl.BlockSpec((tm, C), lambda i: (i, 0))
        scratch_shapes = []
        dim_sem = ("parallel",)
        need_bytes = need_resident
    else:
        # Hidden-dim chunk: prefer 512 / 256 (full 256x256 MXU on v6e/v7x).
        if th is None:
            th = next((c for c in (512, 256) if H % c == 0), H)
        assert H % th == 0, "hidden chunk must divide H"
        kernel = functools.partial(_ffwd_chunked_kernel, training=training)
        grid = (m_pad // tm, H // th)
        in_specs = [
            pl.BlockSpec((tm, C), lambda i, k: (i, 0)),   # x rows (resident over k)
            pl.BlockSpec((C, th), lambda i, k: (0, k)),   # W1 chunk (streamed)
            pl.BlockSpec((1, th), lambda i, k: (0, k)),   # b1 chunk
            pl.BlockSpec((th, C), lambda i, k: (k, 0)),   # W2 chunk (streamed)
            pl.BlockSpec((1, C), lambda i, k: (0, 0)),    # b2
        ]
        if training:
            in_specs.append(pl.BlockSpec((tm, C), lambda i, k: (i, 0)))
        out_specs = pl.BlockSpec((tm, C), lambda i, k: (i, 0))
        scratch_shapes = [pltpu.VMEM((tm, C), jnp.float32)]
        dim_sem = ("parallel", "arbitrary")
        need_bytes = (2 * 2 * C * th * c_itemsize        # W1/W2 chunks, dbl-buf
                      + row_tile_bytes
                      + tm * C * 4                       # acc scratch
                      + tm * th * 4                      # (tm, th) f32 intermediate
                      + bias_bytes)

    # Headroom for compiler scratch; stay below v7x's 64 MiB physical VMEM.
    vmem_limit = int(min(max(2 * need_bytes, 32 << 20), 56 << 20))

    out = pl.pallas_call(
        kernel,
        out_shape=jax.ShapeDtypeStruct((m_pad, C), out_dtype),
        grid_spec=pltpu.PrefetchScalarGridSpec(
            num_scalar_prefetch=0,
            grid=grid,
            in_specs=in_specs,
            out_specs=out_specs,
            scratch_shapes=scratch_shapes,
        ),
        compiler_params=pltpu.CompilerParams(
            dimension_semantics=dim_sem,
            vmem_limit_bytes=vmem_limit,
        ),
    )(*inputs)

    if m_pad != M:
        out = out[:M]
    return out.reshape(B, T, C)


def _init_linear(key, in_f, out_f, dtype=jnp.float32):
    # PyTorch nn.Linear default init: U(-1/sqrt(in_f), 1/sqrt(in_f))
    kw, kb = jax.random.split(key)
    bound = 1.0 / math.sqrt(in_f)
    w = jax.random.uniform(kw, (in_f, out_f), dtype, minval=-bound, maxval=bound)
    b = jax.random.uniform(kb, (out_f,), dtype, minval=-bound, maxval=bound)
    return w, b


if __name__ == "__main__":
    # Shapes consistent with the module (n_embd=384, hidden=4*n_embd).
    B, T, C = 2, 64, 384
    H = 4 * C

    key = jax.random.PRNGKey(0)
    kx, k1, k2 = jax.random.split(key, 3)

    x = jax.random.normal(kx, (B, T, C), jnp.float32)
    w1, b1 = _init_linear(k1, C, H)
    w2, b2 = _init_linear(k2, H, C)

    # Eval-mode forward on the resident-weight path.
    out = feed_forward(x, w1, b1, w2, b2, training=False)
    out = jax.block_until_ready(out)

    # Reference with matching bf16 matmul operands / f32 accumulation.
    xb = x.reshape(-1, C).astype(jnp.bfloat16)
    h = jnp.dot(xb, w1.astype(jnp.bfloat16), preferred_element_type=jnp.float32) + b1
    h = 0.5 * h * (1.0 + lax.erf(h * _INV_SQRT2))
    ref = jnp.dot(h.astype(jnp.bfloat16), w2.astype(jnp.bfloat16),
                  preferred_element_type=jnp.float32) + b2
    ref = ref.reshape(B, T, C).astype(x.dtype)
    assert jnp.allclose(out, ref, atol=1e-2, rtol=1e-2), "resident path mismatch"

    # Exercise the chunked fallback path (forced by a zero resident budget).
    out_chunked = feed_forward(x, w1, b1, w2, b2, training=False,
                               max_resident_bytes=0)
    out_chunked = jax.block_until_ready(out_chunked)
    assert jnp.allclose(out_chunked, ref, atol=1e-2, rtol=1e-2), "chunked path mismatch"

    # Training-mode dropout (mask drawn host-side with jax.random).
    out_train = feed_forward(x, w1, b1, w2, b2, training=True,
                             rng=jax.random.PRNGKey(123))
    out_train = jax.block_until_ready(out_train)
    assert out_train.shape == (B, T, C)
    assert bool(jnp.all(jnp.isfinite(out_train)))

    print("KERNEL_OK")
</pallas_src>

<mosaic_0001>
module attributes {stable_mosaic.version = 11 : i64} {
  func.func @_ffwd_resident_kernel(%arg0: i32, %arg1: memref<64x384xbf16, #tpu.memory_space<vmem>>, %arg2: memref<384x1536xbf16, #tpu.memory_space<vmem>>, %arg3: memref<1x1536xf32, #tpu.memory_space<vmem>>, %arg4: memref<1536x384xbf16, #tpu.memory_space<vmem>>, %arg5: memref<1x384xf32, #tpu.memory_space<vmem>>, %arg6: memref<64x384xf32, #tpu.memory_space<vmem>>) attributes {dimension_semantics = [#tpu.dimension_semantics<parallel>], iteration_bounds = array<i64: 2>, scalar_prefetch = 0 : i64, scratch_operands = 0 : i64, tpu.core_type = #tpu.core_type<tc>, window_params = [{transform_indices = @transform_0, window_bounds = array<i64: 64, 384>}, {pipeline_mode = #tpu.pipeline_mode<synchronous>, transform_indices = @transform_1, window_bounds = array<i64: 384, 1536>}, {pipeline_mode = #tpu.pipeline_mode<synchronous>, transform_indices = @transform_2, window_bounds = array<i64: 1, 1536>}, {pipeline_mode = #tpu.pipeline_mode<synchronous>, transform_indices = @transform_3, window_bounds = array<i64: 1536, 384>}, {pipeline_mode = #tpu.pipeline_mode<synchronous>, transform_indices = @transform_4, window_bounds = array<i64: 1, 384>}, {transform_indices = @transform_5, window_bounds = array<i64: 64, 384>}]} {
    %c0 = arith.constant 0 : index
    %c0_0 = arith.constant 0 : index
    %0 = vector.load %arg1[%c0, %c0_0] : memref<64x384xbf16, #tpu.memory_space<vmem>>, vector<64x384xbf16>
    %c0_1 = arith.constant 0 : index
    %c0_2 = arith.constant 0 : index
    %1 = vector.load %arg2[%c0_1, %c0_2] : memref<384x1536xbf16, #tpu.memory_space<vmem>>, vector<384x1536xbf16>
    %cst = arith.constant dense<0.000000e+00> : vector<64x1536xf32>
    %2 = tpu.matmul %0, %1, %cst {dimension_numbers = #tpu.dot_dimension_numbers<[1], [0], [0], [1], [0, 0, 1, 1], [], []>} : vector<64x384xbf16>, vector<384x1536xbf16>, vector<64x1536xf32> -> vector<64x1536xf32>
    %c0_3 = arith.constant 0 : index
    %c0_4 = arith.constant 0 : index
    %3 = vector.load %arg3[%c0_3, %c0_4] : memref<1x1536xf32, #tpu.memory_space<vmem>>, vector<1x1536xf32>
    %4 = vector.broadcast %3 : vector<1x1536xf32> to vector<64x1536xf32>
    %5 = arith.addf %2, %4 : vector<64x1536xf32>
    %cst_5 = arith.constant 5.000000e-01 : f32
    %6 = vector.broadcast %cst_5 : f32 to vector<64x1536xf32>
    %7 = arith.mulf %6, %5 : vector<64x1536xf32>
    %cst_6 = arith.constant 0.707106769 : f32
    %8 = vector.broadcast %cst_6 : f32 to vector<64x1536xf32>
    %9 = arith.mulf %5, %8 : vector<64x1536xf32>
    %10 = math.erf %9 : vector<64x1536xf32>
    %cst_7 = arith.constant 1.000000e+00 : f32
    %11 = vector.broadcast %cst_7 : f32 to vector<64x1536xf32>
    %12 = arith.addf %11, %10 : vector<64x1536xf32>
    %13 = arith.mulf %7, %12 : vector<64x1536xf32>
    %14 = arith.truncf %13 : vector<64x1536xf32> to vector<64x1536xbf16>
    %c0_8 = arith.constant 0 : index
    %c0_9 = arith.constant 0 : index
    %15 = vector.load %arg4[%c0_8, %c0_9] : memref<1536x384xbf16, #tpu.memory_space<vmem>>, vector<1536x384xbf16>
    %cst_10 = arith.constant dense<0.000000e+00> : vector<64x384xf32>
    %16 = tpu.matmul %14, %15, %cst_10 {dimension_numbers = #tpu.dot_dimension_numbers<[1], [0], [0], [1], [0, 0, 1, 1], [], []>} : vector<64x1536xbf16>, vector<1536x384xbf16>, vector<64x384xf32> -> vector<64x384xf32>
    %c0_11 = arith.constant 0 : index
    %c0_12 = arith.constant 0 : index
    %17 = vector.load %arg5[%c0_11, %c0_12] : memref<1x384xf32, #tpu.memory_space<vmem>>, vector<1x384xf32>
    %18 = vector.broadcast %17 : vector<1x384xf32> to vector<64x384xf32>
    %19 = arith.addf %16, %18 : vector<64x384xf32>
    %c0_13 = arith.constant 0 : index
    %c0_14 = arith.constant 0 : index
    %20 = vector.load %arg6[%c0_13, %c0_14] : memref<64x384xf32, #tpu.memory_space<vmem>>, vector<64x384xf32>
    tpu.vector_store %arg6[%c0_13, %c0_14], %19 {strides = array<i32>} : memref<64x384xf32, #tpu.memory_space<vmem>>, vector<64x384xf32>,
    return
  }
  func.func @transform_0(%arg0: i32) -> (i32, i32) {
    %c0_i32 = arith.constant 0 : i32
    %c0_i32_0 = arith.constant 0 : i32
    return %arg0, %c0_i32 : i32, i32
  }
  func.func @transform_1(%arg0: i32) -> (i32, i32) {
    %c0_i32 = arith.constant 0 : i32
    %c0_i32_0 = arith.constant 0 : i32
    %c0_i32_1 = arith.constant 0 : i32
    return %c0_i32, %c0_i32_0 : i32, i32
  }
  func.func @transform_2(%arg0: i32) -> (i32, i32) {
    %c0_i32 = arith.constant 0 : i32
    %c0_i32_0 = arith.constant 0 : i32
    %c0_i32_1 = arith.constant 0 : i32
    return %c0_i32, %c0_i32_0 : i32, i32
  }
  func.func @transform_3(%arg0: i32) -> (i32, i32) {
    %c0_i32 = arith.constant 0 : i32
    %c0_i32_0 = arith.constant 0 : i32
    %c0_i32_1 = arith.constant 0 : i32
    return %c0_i32, %c0_i32_0 : i32, i32
  }
  func.func @transform_4(%arg0: i32) -> (i32, i32) {
    %c0_i32 = arith.constant 0 : i32
    %c0_i32_0 = arith.constant 0 : i32
    %c0_i32_1 = arith.constant 0 : i32
    return %c0_i32, %c0_i32_0 : i32, i32
  }
  func.func @transform_5(%arg0: i32) -> (i32, i32) {
    %c0_i32 = arith.constant 0 : i32
    %c0_i32_0 = arith.constant 0 : i32
    return %arg0, %c0_i32 : i32, i32
  }
}

</mosaic_0001>

<llo_original>
// kernel: tpu_custom_call.1
$region0: #{tpu_custom_call.1}
  #allocation0 [shape = 'u32[]', space=smem, size = 0x4, offset = 0x4, fixed_abs, tag = 'smem constant byte address 0x4 - core index']
  #allocation1 [shape = 'u32[144,128]{1,0:T(1,128)}', space=vmem, size = 0x12000, scoped, tag = 'internal scratch']
  %s0 = inlined_call_operand.hbm [shape: bf16[128,384], index: 0, kind: input, shape index: {}]
  %s1 = inlined_call_operand.hbm [shape: bf16[384,1536], index: 1, kind: input, shape index: {}]
  %s2 = inlined_call_operand.hbm [shape: f32[1,1536], index: 2, kind: input, shape index: {}]
  %s3 = inlined_call_operand.hbm [shape: bf16[1536,384], index: 3, kind: input, shape index: {}]
  %s4 = inlined_call_operand.hbm [shape: f32[1,384], index: 4, kind: input, shape index: {}]
  %s5 = inlined_call_operand.hbm [shape: f32[128,384], index: 5, kind: output, shape index: {}]
  %s6 = sld [smem:[#allocation0]]
  $region73: #{tpu_custom_call.1} parent=0
    _
  %s8 = ssub.s32 1, %s6
  %s9 = scalar_select 0, %s8, %s6
  $region1: #{tpu_custom_call.1} parent=0
    #allocation2 [shape = 'u8[98304]{0}', space=vmem, size = 0x18000, scoped, tag = 'input window, operand 0']
    #allocation3 [shape = 's32[2]{0}', space=sflag, size = 0x8, scoped, tag = 'scoped memory for tpu_custom_call.1']
    #allocation4 [shape = 's32[2]{0}', space=sflag, size = 0x8, scoped, tag = 'scoped memory for tpu_custom_call.1']
    #allocation5 [shape = 'u8[1179648]{0}', space=vmem, size = 0x120000, scoped, tag = 'input window, operand 1, single buffered']
    #allocation6 [shape = 's32[1]{0}', space=sflag, size = 0x4, scoped, tag = 'scoped memory for tpu_custom_call.1']
    #allocation7 [shape = 'u8[6144]{0}', space=vmem, size = 0x1800, scoped, tag = 'input window, operand 2, single buffered']
    #allocation8 [shape = 'u8[1179648]{0}', space=vmem, size = 0x120000, scoped, tag = 'input window, operand 3, single buffered']
    #allocation9 [shape = 's32[1]{0}', space=sflag, size = 0x4, scoped, tag = 'scoped memory for tpu_custom_call.1']
    #allocation10 [shape = 'u8[1536]{0}', space=vmem, size = 0x800, scoped, tag = 'input window, operand 4, single buffered']
    #allocation11 [shape = 'u8[196608]{0}', space=vmem, size = 0x30000, scoped, tag = 'output window, operand 0']
    %10 = vsyncpa [#allocation3], 0
    %s11 = scalar_lea.sflag [#allocation3], 1
    %12 = vsyncpa %s11, 0
    %13 = vsyncpa [#allocation6], 0
    %14 = vsyncpa [#allocation9], 0
    %15 = vsyncpa [#allocation4], 0
    %s16 = scalar_lea.sflag [#allocation4], 1
    %17 = vsyncpa %s16, 0
    loop: start=0, step=1, limit=4
    $region2: #{tpu_custom_call.1} parent=1 // loop_pre_header
      _
    $region3: #{tpu_custom_call.1} parent=1 // loop_header
      %s19 = sphi 0, %s23
      %p20 = scmp.ge.s32.totalorder %s19, 4
      %s29 = sphi 0, %s31
      %s32 = sphi 0, %s29
      %s33 = sphi 0, %s32
      %s49 = sphi 0, %s33
      %s53 = sphi 0, %s53
      %s55 = sphi 0, %s53
      %s56 = sphi 0, %s55
      %s70 = sphi 0, %s56
      %s74 = sphi 0, %s74
      %s76 = sphi 0, %s74
      %s77 = sphi 0, %s76
      %s91 = sphi 0, %s77
      %s95 = sphi 0, %s95
      %s97 = sphi 0, %s95
      %s98 = sphi 0, %s97
      %s112 = sphi 0, %s98
      %s116 = sphi 0, %s116
      %s118 = sphi 0, %s116
      %s119 = sphi 0, %s118
      %s133 = sphi 0, %s119
      %s139 = sphi 0, %s141
      %s142 = sphi 0, %s139
      %s143 = sphi 0, %s142
      %s159 = sphi 0, %s143
    $region4: #{tpu_custom_call.1} parent=1 // loop_header_branch
      %22 = sbr.rel (%p20) target = $region8
    $region5: #{tpu_custom_call.1} parent=1 // loop_body
      %s24 = ssub.s32 %s19, 1
      %s25 = ssub.s32 %s19, 2
      %s26 = sadd.s32 %s19, 1
      %s27 = ssub.s32 %s19, %s26
      %p28 = scmp.eq.s32.totalorder %s27, 0
      %s30 = sadd.s32 %s29, 1
      %s31 = scalar_select %p28, %s29, %s30
      %p34 = pneg %p28
      %p35 = scmp.eq.s32.totalorder %s19, 1
      %p36 = por %p34, %p35
      %p37 = scmp.ne.s32.totalorder %s29, %s32
      %p38 = scmp.eq.s32.totalorder %s19, 0
      %p39 = por %p37, %p38
      %p40 = scmp.ne.s32.totalorder %s29, %s32
      %p41 = scmp.eq.s32.totalorder %s24, 1
      %p42 = por %p40, %p41
      %p43 = scmp.ne.s32.totalorder %s32, %s33
      %p44 = scmp.eq.s32.totalorder %s24, 0
      %p45 = por %p43, %p44
      %p46 = scmp.ne.s32.totalorder %s32, %s33
      %p47 = scmp.eq.s32.totalorder %s25, 1
      %p48 = por %p46, %p47
      %p50 = scmp.ne.s32.totalorder %s33, %s49
      %p51 = scmp.eq.s32.totalorder %s25, 0
      %p52 = por %p50, %p51
      %s54 = sadd.s32 %s53, 1
      %p57 = scmp.eq.s32.totalorder %s19, 1
      %p58 = scmp.ne.s32.totalorder %s53, %s55
      %p59 = scmp.eq.s32.totalorder %s19, 0
      %p60 = por %p58, %p59
      %p61 = scmp.ne.s32.totalorder %s53, %s55
      %p62 = scmp.eq.s32.totalorder %s24, 1
      %p63 = por %p61, %p62
      %p64 = scmp.ne.s32.totalorder %s55, %s56
      %p65 = scmp.eq.s32.totalorder %s24, 0
      %p66 = por %p64, %p65
      %p67 = scmp.ne.s32.totalorder %s55, %s56
      %p68 = scmp.eq.s32.totalorder %s25, 1
      %p69 = por %p67, %p68
      %p71 = scmp.ne.s32.totalorder %s56, %s70
      %p72 = scmp.eq.s32.totalorder %s25, 0
      %p73 = por %p71, %p72
      %s75 = sadd.s32 %s74, 1
      %p78 = scmp.eq.s32.totalorder %s19, 1
      %p79 = scmp.ne.s32.totalorder %s74, %s76
      %p80 = scmp.eq.s32.totalorder %s19, 0
      %p81 = por %p79, %p80
      %p82 = scmp.ne.s32.totalorder %s74, %s76
      %p83 = scmp.eq.s32.totalorder %s24, 1
      %p84 = por %p82, %p83
      %p85 = scmp.ne.s32.totalorder %s76, %s77
      %p86 = scmp.eq.s32.totalorder %s24, 0
      %p87 = por %p85, %p86
      %p88 = scmp.ne.s32.totalorder %s76, %s77
      %p89 = scmp.eq.s32.totalorder %s25, 1
      %p90 = por %p88, %p89
      %p92 = scmp.ne.s32.totalorder %s77, %s91
      %p93 = scmp.eq.s32.totalorder %s25, 0
      %p94 = por %p92, %p93
      %s96 = sadd.s32 %s95, 1
      %p99 = scmp.eq.s32.totalorder %s19, 1
      %p100 = scmp.ne.s32.totalorder %s95, %s97
      %p101 = scmp.eq.s32.totalorder %s19, 0
      %p102 = por %p100, %p101
      %p103 = scmp.ne.s32.totalorder %s95, %s97
      %p104 = scmp.eq.s32.totalorder %s24, 1
      %p105 = por %p103, %p104
      %p106 = scmp.ne.s32.totalorder %s97, %s98
      %p107 = scmp.eq.s32.totalorder %s24, 0
      %p108 = por %p106, %p107
      %p109 = scmp.ne.s32.totalorder %s97, %s98
      %p110 = scmp.eq.s32.totalorder %s25, 1
      %p111 = por %p109, %p110
      %p113 = scmp.ne.s32.totalorder %s98, %s112
      %p114 = scmp.eq.s32.totalorder %s25, 0
      %p115 = por %p113, %p114
      %s117 = sadd.s32 %s116, 1
      %p120 = scmp.eq.s32.totalorder %s19, 1
      %p121 = scmp.ne.s32.totalorder %s116, %s118
      %p122 = scmp.eq.s32.totalorder %s19, 0
      %p123 = por %p121, %p122
      %p124 = scmp.ne.s32.totalorder %s116, %s118
      %p125 = scmp.eq.s32.totalorder %s24, 1
      %p126 = por %p124, %p125
      %p127 = scmp.ne.s32.totalorder %s118, %s119
      %p128 = scmp.eq.s32.totalorder %s24, 0
      %p129 = por %p127, %p128
      %p130 = scmp.ne.s32.totalorder %s118, %s119
      %p131 = scmp.eq.s32.totalorder %s25, 1
      %p132 = por %p130, %p131
      %p134 = scmp.ne.s32.totalorder %s119, %s133
      %p135 = scmp.eq.s32.totalorder %s25, 0
      %p136 = por %p134, %p135
      %s137 = ssub.s32 %s19, %s26
      %p138 = scmp.eq.s32.totalorder %s137, 0
      %s140 = sadd.s32 %s139, 1
      %s141 = scalar_select %p138, %s139, %s140
      %p144 = pneg %p138
      %p145 = scmp.eq.s32.totalorder %s19, 1
      %p146 = por %p144, %p145
      %p147 = scmp.ne.s32.totalorder %s139, %s142
      %p148 = scmp.eq.s32.totalorder %s19, 0
      %p149 = por %p147, %p148
      %p150 = scmp.ne.s32.totalorder %s139, %s142
      %p151 = scmp.eq.s32.totalorder %s24, 1
      %p152 = por %p150, %p151
      %p153 = scmp.ne.s32.totalorder %s142, %s143
      %p154 = scmp.eq.s32.totalorder %s24, 0
      %p155 = por %p153, %p154
      %p156 = scmp.ne.s32.totalorder %s142, %s143
      %p157 = scmp.eq.s32.totalorder %s25, 1
      %p158 = por %p156, %p157
      %p160 = scmp.ne.s32.totalorder %s143, %s159
      %p161 = scmp.eq.s32.totalorder %s25, 0
      %p162 = por %p160, %p161
      %p163 = scmp.le.s32.totalorder 1, %s19
      %p164 = scmp.lt.s32.totalorder %s19, 3
      %p165 = pnand %p163, %p164
      %p166 = pneg %p165
      // Predicated region
      $region9: #{tpu_custom_call.1} parent=5 // pred_check
        _
      $region10: #{tpu_custom_call.1} parent=5 // pred_check_branch
        %168 = sbr.rel (%p165) target = $region12
      $region11: #{tpu_custom_call.1} parent=5 // pred_region
        %s169 = ssub.s32 %s19, 1
        // Predicated region
        $region13: #{tpu_custom_call.1} parent=11 // pred_check
          %p170 = pneg %p66
        $region14: #{tpu_custom_call.1} parent=11 // pred_check_branch
          %172 = sbr.rel (%p170) target = $region16
        $region15: #{tpu_custom_call.1} parent=11 // pred_region
          %s174 = ssub.s32 36864, 36864
          %175 = vsyncadd [#allocation6], %s174
          %s176 = sshll.u32 [#allocation5], 4
          %s177 = int_to_ptr.vmem [resolvable:$true] %s176
          %182 = dma.hbm_to_vmem [thread:$0]  %s1, 36864, %s177, [#allocation6], 768, 768, 48
        $region16: #{tpu_custom_call.1} parent=11 // pred_fallthru
          _
        // Predicated region
        $region17: #{tpu_custom_call.1} parent=11 // pred_check
          %p183 = pneg %p87
        $region18: #{tpu_custom_call.1} parent=11 // pred_check_branch
          %185 = sbr.rel (%p183) target = $region20
        $region19: #{tpu_custom_call.1} parent=11 // pred_region
          %s187 = ssub.s32 192, 192
          %188 = vsyncadd [#allocation6], %s187
          %s190 = sshll.u32 [#allocation7], 4
          %s191 = int_to_ptr.vmem [resolvable:$true] %s190
          %193 = dma.hbm_to_vmem [thread:$0]  %s2, 192, %s191, [#allocation6]
        $region20: #{tpu_custom_call.1} parent=11 // pred_fallthru
          _
        // Predicated region
        $region21: #{tpu_custom_call.1} parent=11 // pred_check
          %p194 = pneg %p108
        $region22: #{tpu_custom_call.1} parent=11 // pred_check_branch
          %196 = sbr.rel (%p194) target = $region24
        $region23: #{tpu_custom_call.1} parent=11 // pred_region
          %s198 = ssub.s32 36864, 36864
          %199 = vsyncadd [#allocation9], %s198
          %s200 = sshll.u32 [#allocation8], 4
          %s201 = int_to_ptr.vmem [resolvable:$true] %s200
          %206 = dma.hbm_to_vmem [thread:$0]  %s3, 36864, %s201, [#allocation9], 192, 192, 12
        $region24: #{tpu_custom_call.1} parent=11 // pred_fallthru
          _
        // Predicated region
        $region25: #{tpu_custom_call.1} parent=11 // pred_check
          %p207 = pneg %p129
        $region26: #{tpu_custom_call.1} parent=11 // pred_check_branch
          %209 = sbr.rel (%p207) target = $region28
        $region27: #{tpu_custom_call.1} parent=11 // pred_region
          %s211 = ssub.s32 48, 48
          %212 = vsyncadd [#allocation9], %s211
          %s214 = sshll.u32 [#allocation10], 4
          %s215 = int_to_ptr.vmem [resolvable:$true] %s214
          %217 = dma.hbm_to_vmem [thread:$0]  %s4, 48, %s215, [#allocation9]
        $region28: #{tpu_custom_call.1} parent=11 // pred_fallthru
          _
      $region12: #{tpu_custom_call.1} parent=5 // pred_fallthru
        _
      %p218 = scmp.lt.s32.totalorder %s19, 2
      // Predicated region
      $region29: #{tpu_custom_call.1} parent=5 // pred_check
        %p219 = pneg %p218
      $region30: #{tpu_custom_call.1} parent=5 // pred_check_branch
        %221 = sbr.rel (%p219) target = $region32
      $region31: #{tpu_custom_call.1} parent=5 // pred_region
        // Predicated region
        $region33: #{tpu_custom_call.1} parent=31 // pred_check
          %p222 = pneg %p39
        $region34: #{tpu_custom_call.1} parent=31 // pred_check_branch
          %224 = sbr.rel (%p222) target = $region36
        $region35: #{tpu_custom_call.1} parent=31 // pred_region
          %s225 = sand.u32 %s29, 1
          %s226 = scalar_lea.sflag [#allocation3], %s225
          %s227 = sand.u32 %s29, 1
          %s228 = smul.addr %s227, 96
          %s229 = scalar_lea.vmem [#allocation2], %s228
          %s230 = smul.u32 8, %s19
          %s232 = ssub.s32 1536, 1536
          %233 = vsyncadd %s226, %s232
          %s234 = smul.addr %s230, 3
          %s235 = smul.addr %s234, 64
          %s236 = scalar_lea.hbm %s0, %s235
          %s237 = sshll.u32 %s229, 4
          %s238 = int_to_ptr.vmem [resolvable:$true] %s237
          %243 = dma.hbm_to_vmem [thread:$0]  %s236, 1536, %s238, %s226, 192, 192, 12
        $region36: #{tpu_custom_call.1} parent=31 // pred_fallthru
          _
      $region32: #{tpu_custom_call.1} parent=5 // pred_fallthru
        _
      %p244 = scmp.le.s32.totalorder 1, %s19
      %p245 = scmp.lt.s32.totalorder %s19, 3
      %p246 = pnand %p244, %p245
      %p247 = pneg %p246
      // Predicated region
      $region37: #{tpu_custom_call.1} parent=5 // pred_check
        _
      $region38: #{tpu_custom_call.1} parent=5 // pred_check_branch
        %249 = sbr.rel (%p246) target = $region40
      $region39: #{tpu_custom_call.1} parent=5 // pred_region
        %s250 = ssub.s32 %s19, 1
        %s251 = sand.u32 %s32, 1
        %s252 = scalar_lea.sflag [#allocation3], %s251
        %s253 = sand.u32 %s32, 1
        %s254 = smul.addr %s253, 96
        %s255 = scalar_lea.vmem [#allocation2], %s254
        // Predicated region
        $region41: #{tpu_custom_call.1} parent=39 // pred_check
          %p256 = pneg %p45
        $region42: #{tpu_custom_call.1} parent=39 // pred_check_branch
          %258 = sbr.rel (%p256) target = $region44
        $region43: #{tpu_custom_call.1} parent=39 // pred_region
          %259 = dma.done %s252, 1536
        $region44: #{tpu_custom_call.1} parent=39 // pred_fallthru
          _
        // Predicated region
        $region45: #{tpu_custom_call.1} parent=39 // pred_check
          %p260 = pneg %p66
        $region46: #{tpu_custom_call.1} parent=39 // pred_check_branch
          %262 = sbr.rel (%p260) target = $region48
        $region47: #{tpu_custom_call.1} parent=39 // pred_region
          %263 = dma.done [#allocation6], 36864
        $region48: #{tpu_custom_call.1} parent=39 // pred_fallthru
          _
        // Predicated region
        $region49: #{tpu_custom_call.1} parent=39 // pred_check
          %p264 = pneg %p87
        $region50: #{tpu_custom_call.1} parent=39 // pred_check_branch
          %266 = sbr.rel (%p264) target = $region52
        $region51: #{tpu_custom_call.1} parent=39 // pred_region
          %267 = dma.done [#allocation6], 192
        $region52: #{tpu_custom_call.1} parent=39 // pred_fallthru
          _
        // Predicated region
        $region53: #{tpu_custom_call.1} parent=39 // pred_check
          %p268 = pneg %p108
        $region54: #{tpu_custom_call.1} parent=39 // pred_check_branch
          %270 = sbr.rel (%p268) target = $region56
        $region55: #{tpu_custom_call.1} parent=39 // pred_region
          %271 = dma.done [#allocation9], 36864
        $region56: #{tpu_custom_call.1} parent=39 // pred_fallthru
          _
        // Predicated region
        $region57: #{tpu_custom_call.1} parent=39 // pred_check
          %p272 = pneg %p129
        $region58: #{tpu_custom_call.1} parent=39 // pred_check_branch
          %274 = sbr.rel (%p272) target = $region60
        $region59: #{tpu_custom_call.1} parent=39 // pred_region
          %275 = dma.done [#allocation9], 48
        $region60: #{tpu_custom_call.1} parent=39 // pred_fallthru
          _
        %s276 = sand.u32 %s32, 1
        %s277 = scalar_lea.sflag [#allocation3], %s276
        %s278 = sand.u32 %s32, 1
        %s279 = smul.addr %s278, 96
        %s280 = scalar_lea.vmem [#allocation2], %s279
        %p281 = pneg %p45
        %p282 = pneg %p42
        %p283 = pneg %p66
        %p284 = pneg %p63
        %p285 = pneg %p87
        %p286 = pneg %p84
        %p287 = pneg %p108
        %p288 = pneg %p105
        %p289 = pneg %p129
        %p290 = pneg %p126
        %p291 = pneg %p155
        %p292 = pneg %p152
        %s293 = sand.u32 %s142, 1
        %s294 = scalar_lea.sflag [#allocation4], %s293
        %s295 = sand.u32 %s142, 1
        %s296 = smul.addr %s295, 192
        %s297 = scalar_lea.vmem [#allocation11], %s296
        %s298 = smul.u32 8, %s24
        %s299 = smul.u32 8, %s24
        %v301 = vld [vmem:[%s255] sm:$0xff]
        %v302 = vld [vmem:[%s255 + $0x8] sm:$0xf]
        %v303 = vld [vmem:[%s255 + $0xc] sm:$0xff]
        %v304 = vld [vmem:[%s255 + $0x14] sm:$0xf]
        %v305 = vld [vmem:[%s255 + $0x18] sm:$0xff]
        %v306 = vld [vmem:[%s255 + $0x20] sm:$0xf]
        %v307 = vld [vmem:[%s255 + $0x24] sm:$0xff]
        %v308 = vld [vmem:[%s255 + $0x2c] sm:$0xf]
        %v309 = vld [vmem:[%s255 + $0x30] sm:$0xff]
        %v310 = vld [vmem:[%s255 + $0x38] sm:$0xf]
        %v311 = vld [vmem:[%s255 + $0x3c] sm:$0xff]
        %v312 = vld [vmem:[%s255 + $0x44] sm:$0xf]
        %v313 = vld [vmem:[%s255 + $0x48] sm:$0xff]
        %v314 = vld [vmem:[%s255 + $0x50] sm:$0xf]
        %v315 = vld [vmem:[%s255 + $0x54] sm:$0xff]
        %v316 = vld [vmem:[%s255 + $0x5c] sm:$0xf]
        %v317 = vld [vmem:[#allocation5] sm:$0xff]
        %v318 = vld [vmem:[#allocation5 + $0x8] sm:$0xff]
        %v319 = vld [vmem:[#allocation5 + $0x10] sm:$0xff]
        %v320 = vld [vmem:[#allocation5 + $0x18] sm:$0xff]
        %v321 = vld [vmem:[#allocation5 + $0x20] sm:$0xff]
        %v322 = vld [vmem:[#allocation5 + $0x28] sm:$0xff]
        %v323 = vld [vmem:[#allocation5 + $0x30] sm:$0xff]
        %v324 = vld [vmem:[#allocation5 + $0x38] sm:$0xff]
        %v325 = vld [vmem:[#allocation5 + $0x40] sm:$0xff]
        %v326 = vld [vmem:[#allocation5 + $0x48] sm:$0xff]
        %v327 = vld [vmem:[#allocation5 + $0x50] sm:$0xff]
        %v328 = vld [vmem:[#allocation5 + $0x58] sm:$0xff]
        %v329 = vld [vmem:[#allocation5 + $0x60] sm:$0xff]
        %v330 = vld [vmem:[#allocation5 + $0x68] sm:$0xff]
        %v331 = vld [vmem:[#allocation5 + $0x70] sm:$0xff]
        %v332 = vld [vmem:[#allocation5 + $0x78] sm:$0xff]
        %v333 = vld [vmem:[#allocation5 + $0x80] sm:$0xff]
        %v334 = vld [vmem:[#allocation5 + $0x88] sm:$0xff]
        %v335 = vld [vmem:[#allocation5 + $0x90] sm:$0xff]
        %v336 = vld [vmem:[#allocation5 + $0x98] sm:$0xff]
        %v337 = vld [vmem:[#allocation5 + $0xa0] sm:$0xff]
        %v338 = vld [vmem:[#allocation5 + $0xa8] sm:$0xff]
        %v339 = vld [vmem:[#allocation5 + $0xb0] sm:$0xff]
        %v340 = vld [vmem:[#allocation5 + $0xb8] sm:$0xff]
        %v341 = vld [vmem:[#allocation5 + $0xc0] sm:$0xff]
        %v342 = vld [vmem:[#allocation5 + $0xc8] sm:$0xff]
        %v343 = vld [vmem:[#allocation5 + $0xd0] sm:$0xff]
        %v344 = vld [vmem:[#allocation5 + $0xd8] sm:$0xff]
        %v345 = vld [vmem:[#allocation5 + $0xe0] sm:$0xff]
        %v346 = vld [vmem:[#allocation5 + $0xe8] sm:$0xff]
        %v347 = vld [vmem:[#allocation5 + $0xf0] sm:$0xff]
        %v348 = vld [vmem:[#allocation5 + $0xf8] sm:$0xff]
        %v349 = vld [vmem:[#allocation5 + $0x100] sm:$0xff]
        %v350 = vld [vmem:[#allocation5 + $0x108] sm:$0xff]
        %v351 = vld [vmem:[#allocation5 + $0x110] sm:$0xff]
        %v352 = vld [vmem:[#allocation5 + $0x118] sm:$0xff]
        %v353 = vld [vmem:[#allocation5 + $0x120] sm:$0xff]
        %v354 = vld [vmem:[#allocation5 + $0x128] sm:$0xff]
        %v355 = vld [vmem:[#allocation5 + $0x130] sm:$0xff]
        %v356 = vld [vmem:[#allocation5 + $0x138] sm:$0xff]
        %v357 = vld [vmem:[#allocation5 + $0x140] sm:$0xff]
        %v358 = vld [vmem:[#allocation5 + $0x148] sm:$0xff]
        %v359 = vld [vmem:[#allocation5 + $0x150] sm:$0xff]
        %v360 = vld [vmem:[#allocation5 + $0x158] sm:$0xff]
        %v361 = vld [vmem:[#allocation5 + $0x160] sm:$0xff]
        %v362 = vld [vmem:[#allocation5 + $0x168] sm:$0xff]
        %v363 = vld [vmem:[#allocation5 + $0x170] sm:$0xff]
        %v364 = vld [vmem:[#allocation5 + $0x178] sm:$0xff]
        %v365 = vld [vmem:[#allocation5 + $0x180] sm:$0xff]
        %v366 = vld [vmem:[#allocation5 + $0x188] sm:$0xff]
        %v367 = vld [vmem:[#allocation5 + $0x190] sm:$0xff]
        %v368 = vld [vmem:[#allocation5 + $0x198] sm:$0xff]
        %v369 = vld [vmem:[#allocation5 + $0x1a0] sm:$0xff]
        %v370 = vld [vmem:[#allocation5 + $0x1a8] sm:$0xff]
        %v371 = vld [vmem:[#allocation5 + $0x1b0] sm:$0xff]
        %v372 = vld [vmem:[#allocation5 + $0x1b8] sm:$0xff]
        %v373 = vld [vmem:[#allocation5 + $0x1c0] sm:$0xff]
        %v374 = vld [vmem:[#allocation5 + $0x1c8] sm:$0xff]
        %v375 = vld [vmem:[#allocation5 + $0x1d0] sm:$0xff]
        %v376 = vld [vmem:[#allocation5 + $0x1d8] sm:$0xff]
        %v377 = vld [vmem:[#allocation5 + $0x1e0] sm:$0xff]
        %v378 = vld [vmem:[#allocation5 + $0x1e8] sm:$0xff]
        %v379 = vld [vmem:[#allocation5 + $0x1f0] sm:$0xff]
        %v380 = vld [vmem:[#allocation5 + $0x1f8] sm:$0xff]
        %v381 = vld [vmem:[#allocation5 + $0x200] sm:$0xff]
        %v382 = vld [vmem:[#allocation5 + $0x208] sm:$0xff]
        %v383 = vld [vmem:[#allocation5 + $0x210] sm:$0xff]
        %v384 = vld [vmem:[#allocation5 + $0x218] sm:$0xff]
        %v385 = vld [vmem:[#allocation5 + $0x220] sm:$0xff]
        %v386 = vld [vmem:[#allocation5 + $0x228] sm:$0xff]
        %v387 = vld [vmem:[#allocation5 + $0x230] sm:$0xff]
        %v388 = vld [vmem:[#allocation5 + $0x238] sm:$0xff]
        %v389 = vld [vmem:[#allocation5 + $0x240] sm:$0xff]
        %v390 = vld [vmem:[#allocation5 + $0x248] sm:$0xff]
        %v391 = vld [vmem:[#allocation5 + $0x250] sm:$0xff]
        %v392 = vld [vmem:[#allocation5 + $0x258] sm:$0xff]
        %v393 = vld [vmem:[#allocation5 + $0x260] sm:$0xff]
        %v394 = vld [vmem:[#allocation5 + $0x268] sm:$0xff]
        %v395 = vld [vmem:[#allocation5 + $0x270] sm:$0xff]
        %v396 = vld [vmem:[#allocation5 + $0x278] sm:$0xff]
        %v397 = vld [vmem:[#allocation5 + $0x280] sm:$0xff]
        %v398 = vld [vmem:[#allocation5 + $0x288] sm:$0xff]
        %v399 = vld [vmem:[#allocation5 + $0x290] sm:$0xff]
        %v400 = vld [vmem:[#allocation5 + $0x298] sm:$0xff]
        %v401 = vld [vmem:[#allocation5 + $0x2a0] sm:$0xff]
        %v402 = vld [vmem:[#allocation5 + $0x2a8] sm:$0xff]
        %v403 = vld [vmem:[#allocation5 + $0x2b0] sm:$0xff]
        %v404 = vld [vmem:[#allocation5 + $0x2b8] sm:$0xff]
        %v405 = vld [vmem:[#allocation5 + $0x2c0] sm:$0xff]
        %v406 = vld [vmem:[#allocation5 + $0x2c8] sm:$0xff]
        %v407 = vld [vmem:[#allocation5 + $0x2d0] sm:$0xff]
        %v408 = vld [vmem:[#allocation5 + $0x2d8] sm:$0xff]
        %v409 = vld [vmem:[#allocation5 + $0x2e0] sm:$0xff]
        %v410 = vld [vmem:[#allocation5 + $0x2e8] sm:$0xff]
        %v411 = vld [vmem:[#allocation5 + $0x2f0] sm:$0xff]
        %v412 = vld [vmem:[#allocation5 + $0x2f8] sm:$0xff]
        %v413 = vld [vmem:[#allocation5 + $0x300] sm:$0xff]
        %v414 = vld [vmem:[#allocation5 + $0x308] sm:$0xff]
        %v415 = vld [vmem:[#allocation5 + $0x310] sm:$0xff]
        %v416 = vld [vmem:[#allocation5 + $0x318] sm:$0xff]
        %v417 = vld [vmem:[#allocation5 + $0x320] sm:$0xff]
        %v418 = vld [vmem:[#allocation5 + $0x328] sm:$0xff]
        %v419 = vld [vmem:[#allocation5 + $0x330] sm:$0xff]
        %v420 = vld [vmem:[#allocation5 + $0x338] sm:$0xff]
        %v421 = vld [vmem:[#allocation5 + $0x340] sm:$0xff]
        %v422 = vld [vmem:[#allocation5 + $0x348] sm:$0xff]
        %v423 = vld [vmem:[#allocation5 + $0x350] sm:$0xff]
        %v424 = vld [vmem:[#allocation5 + $0x358] sm:$0xff]
        %v425 = vld [vmem:[#allocation5 + $0x360] sm:$0xff]
        %v426 = vld [vmem:[#allocation5 + $0x368] sm:$0xff]
        %v427 = vld [vmem:[#allocation5 + $0x370] sm:$0xff]
        %v428 = vld [vmem:[#allocation5 + $0x378] sm:$0xff]
        %v429 = vld [vmem:[#allocation5 + $0x380] sm:$0xff]
        %v430 = vld [vmem:[#allocation5 + $0x388] sm:$0xff]
        %v431 = vld [vmem:[#allocation5 + $0x390] sm:$0xff]
        %v432 = vld [vmem:[#allocation5 + $0x398] sm:$0xff]
        %v433 = vld [vmem:[#allocation5 + $0x3a0] sm:$0xff]
        %v434 = vld [vmem:[#allocation5 + $0x3a8] sm:$0xff]
        %v435 = vld [vmem:[#allocation5 + $0x3b0] sm:$0xff]
        %v436 = vld [vmem:[#allocation5 + $0x3b8] sm:$0xff]
        %v437 = vld [vmem:[#allocation5 + $0x3c0] sm:$0xff]
        %v438 = vld [vmem:[#allocation5 + $0x3c8] sm:$0xff]
        %v439 = vld [vmem:[#allocation5 + $0x3d0] sm:$0xff]
        %v440 = vld [vmem:[#allocation5 + $0x3d8] sm:$0xff]
        %v441 = vld [vmem:[#allocation5 + $0x3e0] sm:$0xff]
        %v442 = vld [vmem:[#allocation5 + $0x3e8] sm:$0xff]
        %v443 = vld [vmem:[#allocation5 + $0x3f0] sm:$0xff]
        %v444 = vld [vmem:[#allocation5 + $0x3f8] sm:$0xff]
        %v445 = vld [vmem:[#allocation5 + $0x400] sm:$0xff]
        %v446 = vld [vmem:[#allocation5 + $0x408] sm:$0xff]
        %v447 = vld [vmem:[#allocation5 + $0x410] sm:$0xff]
        %v448 = vld [vmem:[#allocation5 + $0x418] sm:$0xff]
        %v449 = vld [vmem:[#allocation5 + $0x420] sm:$0xff]
        %v450 = vld [vmem:[#allocation5 + $0x428] sm:$0xff]
        %v451 = vld [vmem:[#allocation5 + $0x430] sm:$0xff]
        %v452 = vld [vmem:[#allocation5 + $0x438] sm:$0xff]
        %v453 = vld [vmem:[#allocation5 + $0x440] sm:$0xff]
        %v454 = vld [vmem:[#allocation5 + $0x448] sm:$0xff]
        %v455 = vld [vmem:[#allocation5 + $0x450] sm:$0xff]
        %v456 = vld [vmem:[#allocation5 + $0x458] sm:$0xff]
        %v457 = vld [vmem:[#allocation5 + $0x460] sm:$0xff]
        %v458 = vld [vmem:[#allocation5 + $0x468] sm:$0xff]
        %v459 = vld [vmem:[#allocation5 + $0x470] sm:$0xff]
        %v460 = vld [vmem:[#allocation5 + $0x478] sm:$0xff]
        %v461 = vld [vmem:[#allocation5 + $0x480] sm:$0xff]
        %v462 = vld [vmem:[#allocation5 + $0x488] sm:$0xff]
        %v463 = vld [vmem:[#allocation5 + $0x490] sm:$0xff]
        %v464 = vld [vmem:[#allocation5 + $0x498] sm:$0xff]
        %v465 = vld [vmem:[#allocation5 + $0x4a0] sm:$0xff]
        %v466 = vld [vmem:[#allocation5 + $0x4a8] sm:$0xff]
        %v467 = vld [vmem:[#allocation5 + $0x4b0] sm:$0xff]
        %v468 = vld [vmem:[#allocation5 + $0x4b8] sm:$0xff]
        %v469 = vld [vmem:[#allocation5 + $0x4c0] sm:$0xff]
        %v470 = vld [vmem:[#allocation5 + $0x4c8] sm:$0xff]
        %v471 = vld [vmem:[#allocation5 + $0x4d0] sm:$0xff]
        %v472 = vld [vmem:[#allocation5 + $0x4d8] sm:$0xff]
        %v473 = vld [vmem:[#allocation5 + $0x4e0] sm:$0xff]
        %v474 = vld [vmem:[#allocation5 + $0x4e8] sm:$0xff]
        %v475 = vld [vmem:[#allocation5 + $0x4f0] sm:$0xff]
        %v476 = vld [vmem:[#allocation5 + $0x4f8] sm:$0xff]
        %v477 = vld [vmem:[#allocation5 + $0x500] sm:$0xff]
        %v478 = vld [vmem:[#allocation5 + $0x508] sm:$0xff]
        %v479 = vld [vmem:[#allocation5 + $0x510] sm:$0xff]
        %v480 = vld [vmem:[#allocation5 + $0x518] sm:$0xff]
        %v481 = vld [vmem:[#allocation5 + $0x520] sm:$0xff]
        %v482 = vld [vmem:[#allocation5 + $0x528] sm:$0xff]
        %v483 = vld [vmem:[#allocation5 + $0x530] sm:$0xff]
        %v484 = vld [vmem:[#allocation5 + $0x538] sm:$0xff]
        %v485 = vld [vmem:[#allocation5 + $0x540] sm:$0xff]
        %v486 = vld [vmem:[#allocation5 + $0x548] sm:$0xff]
        %v487 = vld [vmem:[#allocation5 + $0x550] sm:$0xff]
        %v488 = vld [vmem:[#allocation5 + $0x558] sm:$0xff]
        %v489 = vld [vmem:[#allocation5 + $0x560] sm:$0xff]
        %v490 = vld [vmem:[#allocation5 + $0x568] sm:$0xff]
        %v491 = vld [vmem:[#allocation5 + $0x570] sm:$0xff]
        %v492 = vld [vmem:[#allocation5 + $0x578] sm:$0xff]
        %v493 = vld [vmem:[#allocation5 + $0x580] sm:$0xff]
        %v494 = vld [vmem:[#allocation5 + $0x588] sm:$0xff]
        %v495 = vld [vmem:[#allocation5 + $0x590] sm:$0xff]
        %v496 = vld [vmem:[#allocation5 + $0x598] sm:$0xff]
        %v497 = vld [vmem:[#allocation5 + $0x5a0] sm:$0xff]
        %v498 = vld [vmem:[#allocation5 + $0x5a8] sm:$0xff]
        %v499 = vld [vmem:[#allocation5 + $0x5b0] sm:$0xff]
        %v500 = vld [vmem:[#allocation5 + $0x5b8] sm:$0xff]
        %v501 = vld [vmem:[#allocation5 + $0x5c0] sm:$0xff]
        %v502 = vld [vmem:[#allocation5 + $0x5c8] sm:$0xff]
        %v503 = vld [vmem:[#allocation5 + $0x5d0] sm:$0xff]
        %v504 = vld [vmem:[#allocation5 + $0x5d8] sm:$0xff]
        %v505 = vld [vmem:[#allocation5 + $0x5e0] sm:$0xff]
        %v506 = vld [vmem:[#allocation5 + $0x5e8] sm:$0xff]
        %v507 = vld [vmem:[#allocation5 + $0x5f0] sm:$0xff]
        %v508 = vld [vmem:[#allocation5 + $0x5f8] sm:$0xff]
        %v509 = vld [vmem:[#allocation5 + $0x600] sm:$0xff]
        %v510 = vld [vmem:[#allocation5 + $0x608] sm:$0xff]
        %v511 = vld [vmem:[#allocation5 + $0x610] sm:$0xff]
        %v512 = vld [vmem:[#allocation5 + $0x618] sm:$0xff]
        %v513 = vld [vmem:[#allocation5 + $0x620] sm:$0xff]
        %v514 = vld [vmem:[#allocation5 + $0x628] sm:$0xff]
        %v515 = vld [vmem:[#allocation5 + $0x630] sm:$0xff]
        %v516 = vld [vmem:[#allocation5 + $0x638] sm:$0xff]
        %v517 = vld [vmem:[#allocation5 + $0x640] sm:$0xff]
        %v518 = vld [vmem:[#allocation5 + $0x648] sm:$0xff]
        %v519 = vld [vmem:[#allocation5 + $0x650] sm:$0xff]
        %v520 = vld [vmem:[#allocation5 + $0x658] sm:$0xff]
        %v521 = vld [vmem:[#allocation5 + $0x660] sm:$0xff]
        %v522 = vld [vmem:[#allocation5 + $0x668] sm:$0xff]
        %v523 = vld [vmem:[#allocation5 + $0x670] sm:$0xff]
        %v524 = vld [vmem:[#allocation5 + $0x678] sm:$0xff]
        %v525 = vld [vmem:[#allocation5 + $0x680] sm:$0xff]
        %v526 = vld [vmem:[#allocation5 + $0x688] sm:$0xff]
        %v527 = vld [vmem:[#allocation5 + $0x690] sm:$0xff]
        %v528 = vld [vmem:[#allocation5 + $0x698] sm:$0xff]
        %v529 = vld [vmem:[#allocation5 + $0x6a0] sm:$0xff]
        %v530 = vld [vmem:[#allocation5 + $0x6a8] sm:$0xff]
        %v531 = vld [vmem:[#allocation5 + $0x6b0] sm:$0xff]
        %v532 = vld [vmem:[#allocation5 + $0x6b8] sm:$0xff]
        %v533 = vld [vmem:[#allocation5 + $0x6c0] sm:$0xff]
        %v534 = vld [vmem:[#allocation5 + $0x6c8] sm:$0xff]
        %v535 = vld [vmem:[#allocation5 + $0x6d0] sm:$0xff]
        %v536 = vld [vmem:[#allocation5 + $0x6d8] sm:$0xff]
        %v537 = vld [vmem:[#allocation5 + $0x6e0] sm:$0xff]
        %v538 = vld [vmem:[#allocation5 + $0x6e8] sm:$0xff]
        %v539 = vld [vmem:[#allocation5 + $0x6f0] sm:$0xff]
        %v540 = vld [vmem:[#allocation5 + $0x6f8] sm:$0xff]
        %v541 = vld [vmem:[#allocation5 + $0x700] sm:$0xff]
        %v542 = vld [vmem:[#allocation5 + $0x708] sm:$0xff]
        %v543 = vld [vmem:[#allocation5 + $0x710] sm:$0xff]
        %v544 = vld [vmem:[#allocation5 + $0x718] sm:$0xff]
        %v545 = vld [vmem:[#allocation5 + $0x720] sm:$0xff]
        %v546 = vld [vmem:[#allocation5 + $0x728] sm:$0xff]
        %v547 = vld [vmem:[#allocation5 + $0x730] sm:$0xff]
        %v548 = vld [vmem:[#allocation5 + $0x738] sm:$0xff]
        %v549 = vld [vmem:[#allocation5 + $0x740] sm:$0xff]
        %v550 = vld [vmem:[#allocation5 + $0x748] sm:$0xff]
        %v551 = vld [vmem:[#allocation5 + $0x750] sm:$0xff]
        %v552 = vld [vmem:[#allocation5 + $0x758] sm:$0xff]
        %v553 = vld [vmem:[#allocation5 + $0x760] sm:$0xff]
        %v554 = vld [vmem:[#allocation5 + $0x768] sm:$0xff]
        %v555 = vld [vmem:[#allocation5 + $0x770] sm:$0xff]
        %v556 = vld [vmem:[#allocation5 + $0x778] sm:$0xff]
        %v557 = vld [vmem:[#allocation5 + $0x780] sm:$0xff]
        %v558 = vld [vmem:[#allocation5 + $0x788] sm:$0xff]
        %v559 = vld [vmem:[#allocation5 + $0x790] sm:$0xff]
        %v560 = vld [vmem:[#allocation5 + $0x798] sm:$0xff]
        %v561 = vld [vmem:[#allocation5 + $0x7a0] sm:$0xff]
        %v562 = vld [vmem:[#allocation5 + $0x7a8] sm:$0xff]
        %v563 = vld [vmem:[#allocation5 + $0x7b0] sm:$0xff]
        %v564 = vld [vmem:[#allocation5 + $0x7b8] sm:$0xff]
        %v565 = vld [vmem:[#allocation5 + $0x7c0] sm:$0xff]
        %v566 = vld [vmem:[#allocation5 + $0x7c8] sm:$0xff]
        %v567 = vld [vmem:[#allocation5 + $0x7d0] sm:$0xff]
        %v568 = vld [vmem:[#allocation5 + $0x7d8] sm:$0xff]
        %v569 = vld [vmem:[#allocation5 + $0x7e0] sm:$0xff]
        %v570 = vld [vmem:[#allocation5 + $0x7e8] sm:$0xff]
        %v571 = vld [vmem:[#allocation5 + $0x7f0] sm:$0xff]
        %v572 = vld [vmem:[#allocation5 + $0x7f8] sm:$0xff]
        %v573 = vld [vmem:[#allocation5 + $0x800] sm:$0xff]
        %v574 = vld [vmem:[#allocation5 + $0x808] sm:$0xff]
        %v575 = vld [vmem:[#allocation5 + $0x810] sm:$0xff]
        %v576 = vld [vmem:[#allocation5 + $0x818] sm:$0xff]
        %v577 = vld [vmem:[#allocation5 + $0x820] sm:$0xff]
        %v578 = vld [vmem:[#allocation5 + $0x828] sm:$0xff]
        %v579 = vld [vmem:[#allocation5 + $0x830] sm:$0xff]
        %v580 = vld [vmem:[#allocation5 + $0x838] sm:$0xff]
        %v581 = vld [vmem:[#allocation5 + $0x840] sm:$0xff]
        %v582 = vld [vmem:[#allocation5 + $0x848] sm:$0xff]
        %v583 = vld [vmem:[#allocation5 + $0x850] sm:$0xff]
        %v584 = vld [vmem:[#allocation5 + $0x858] sm:$0xff]
        %v585 = vld [vmem:[#allocation5 + $0x860] sm:$0xff]
        %v586 = vld [vmem:[#allocation5 + $0x868] sm:$0xff]
        %v587 = vld [vmem:[#allocation5 + $0x870] sm:$0xff]
        %v588 = vld [vmem:[#allocation5 + $0x878] sm:$0xff]
        %v589 = vld [vmem:[#allocation5 + $0x880] sm:$0xff]
        %v590 = vld [vmem:[#allocation5 + $0x888] sm:$0xff]
        %v591 = vld [vmem:[#allocation5 + $0x890] sm:$0xff]
        %v592 = vld [vmem:[#allocation5 + $0x898] sm:$0xff]
        %v593 = vld [vmem:[#allocation5 + $0x8a0] sm:$0xff]
        %v594 = vld [vmem:[#allocation5 + $0x8a8] sm:$0xff]
        %v595 = vld [vmem:[#allocation5 + $0x8b0] sm:$0xff]
        %v596 = vld [vmem:[#allocation5 + $0x8b8] sm:$0xff]
        %v597 = vld [vmem:[#allocation5 + $0x8c0] sm:$0xff]
        %v598 = vld [vmem:[#allocation5 + $0x8c8] sm:$0xff]
        %v599 = vld [vmem:[#allocation5 + $0x8d0] sm:$0xff]
        %v600 = vld [vmem:[#allocation5 + $0x8d8] sm:$0xff]
        %v601 = vld [vmem:[#allocation5 + $0x8e0] sm:$0xff]
        %v602 = vld [vmem:[#allocation5 + $0x8e8] sm:$0xff]
        %v603 = vld [vmem:[#allocation5 + $0x8f0] sm:$0xff]
        %v604 = vld [vmem:[#allocation5 + $0x8f8] sm:$0xff]
        %v605 = vld [vmem:[#allocation7] sm:$0xff]
        %v606 = vld [vmem:[#allocation7 + $0x8] sm:$0xf]
        %v609 = vlaneseq
        %v610 = vshrl.u32 %v609, 7
        %v611 = vsub.s32 0, %v610
        %v612 = vrot.slane %v605, %v611
        %v613 = vlaneseq
        %v614 = vshrl.u32 %v613, 7
        %v615 = vsub.s32 1, %v614
        %v616 = vrot.slane %v605, %v615
        %v617 = vlaneseq
        %v618 = vshrl.u32 %v617, 7
        %v619 = vsub.s32 2, %v618
        %v620 = vrot.slane %v605, %v619
        %v621 = vlaneseq
        %v622 = vshrl.u32 %v621, 7
        %v623 = vsub.s32 3, %v622
        %v624 = vrot.slane %v605, %v623
        %v625 = vlaneseq
        %v626 = vshrl.u32 %v625, 7
        %v627 = vsub.s32 4, %v626
        %v628 = vrot.slane %v605, %v627
        %v629 = vlaneseq
        %v630 = vshrl.u32 %v629, 7
        %v631 = vsub.s32 5, %v630
        %v632 = vrot.slane %v605, %v631
        %v633 = vlaneseq
        %v634 = vshrl.u32 %v633, 7
        %v635 = vsub.s32 6, %v634
        %v636 = vrot.slane %v605, %v635
        %v637 = vlaneseq
        %v638 = vshrl.u32 %v637, 7
        %v639 = vsub.s32 7, %v638
        %v640 = vrot.slane %v605, %v639
        %v641 = vlaneseq
        %v642 = vshrl.u32 %v641, 7
        %v643 = vsub.s32 0, %v642
        %v644 = vrot.slane %v606, %v643
        %v645 = vlaneseq
        %v646 = vshrl.u32 %v645, 7
        %v647 = vsub.s32 1, %v646
        %v648 = vrot.slane %v606, %v647
        %v649 = vlaneseq
        %v650 = vshrl.u32 %v649, 7
        %v651 = vsub.s32 2, %v650
        %v652 = vrot.slane %v606, %v651
        %v653 = vlaneseq
        %v654 = vshrl.u32 %v653, 7
        %v655 = vsub.s32 3, %v654
        %v656 = vrot.slane %v606, %v655
        %v685 = vunpack.c.l.b16 %v301
        %v686 = vunpack.c.h.b16 %v301
        %v687 = vunpack.c.l.b16 %v302
        %v688 = vunpack.c.l.b16 %v303
        %v689 = vunpack.c.h.b16 %v303
        %v690 = vunpack.c.l.b16 %v304
        %v691 = vunpack.c.l.b16 %v305
        %v692 = vunpack.c.h.b16 %v305
        %v693 = vunpack.c.l.b16 %v306
        %v694 = vunpack.c.l.b16 %v307
        %v695 = vunpack.c.h.b16 %v307
        %v696 = vunpack.c.l.b16 %v308
        %v697 = vunpack.c.l.b16 %v309
        %v698 = vunpack.c.h.b16 %v309
        %v699 = vunpack.c.l.b16 %v310
        %v700 = vunpack.c.l.b16 %v311
        %v701 = vunpack.c.h.b16 %v311
        %v702 = vunpack.c.l.b16 %v312
        %v703 = vunpack.c.l.b16 %v313
        %v704 = vunpack.c.h.b16 %v313
        %v705 = vunpack.c.l.b16 %v314
        %v706 = vunpack.c.l.b16 %v315
        %v707 = vunpack.c.h.b16 %v315
        %v708 = vunpack.c.l.b16 %v316
        %v709 = vpack.c.b16 %v688, %v685
        %v710 = vpack.c.b16 %v689, %v686
        %v711 = vpack.c.b16 %v690, %v687
        %v712 = vpack.c.b16 %v694, %v691
        %v713 = vpack.c.b16 %v695, %v692
        %v714 = vpack.c.b16 %v696, %v693
        %v715 = vpack.c.b16 %v700, %v697
        %v716 = vpack.c.b16 %v701, %v698
        %v717 = vpack.c.b16 %v702, %v699
        %v718 = vpack.c.b16 %v706, %v703
        %v719 = vpack.c.b16 %v707, %v704
        %v720 = vpack.c.b16 %v708, %v705
        %v1021 = vunpack.c.l.b16 %v317
        %v1022 = vunpack.c.h.b16 %v317
        %v1023 = vunpack.c.l.b16 %v318
        %v1024 = vunpack.c.h.b16 %v318
        %v1025 = vunpack.c.l.b16 %v319
        %v1026 = vunpack.c.h.b16 %v319
        %v1027 = vunpack.c.l.b16 %v320
        %v1028 = vunpack.c.h.b16 %v320
        %v1029 = vunpack.c.l.b16 %v321
        %v1030 = vunpack.c.h.b16 %v321
        %v1031 = vunpack.c.l.b16 %v322
        %v1032 = vunpack.c.h.b16 %v322
        %v1033 = vunpack.c.l.b16 %v323
        %v1034 = vunpack.c.h.b16 %v323
        %v1035 = vunpack.c.l.b16 %v324
        %v1036 = vunpack.c.h.b16 %v324
        %v1037 = vunpack.c.l.b16 %v325
        %v1038 = vunpack.c.h.b16 %v325
        %v1039 = vunpack.c.l.b16 %v326
        %v1040 = vunpack.c.h.b16 %v326
        %v1041 = vunpack.c.l.b16 %v327
        %v1042 = vunpack.c.h.b16 %v327
        %v1043 = vunpack.c.l.b16 %v328
        %v1044 = vunpack.c.h.b16 %v328
        %v1045 = vunpack.c.l.b16 %v329
        %v1046 = vunpack.c.h.b16 %v329
        %v1047 = vunpack.c.l.b16 %v330
        %v1048 = vunpack.c.h.b16 %v330
        %v1049 = vunpack.c.l.b16 %v331
        %v1050 = vunpack.c.h.b16 %v331
        %v1051 = vunpack.c.l.b16 %v332
        %v1052 = vunpack.c.h.b16 %v332
        %v1053 = vunpack.c.l.b16 %v333
        %v1054 = vunpack.c.h.b16 %v333
        %v1055 = vunpack.c.l.b16 %v334
        %v1056 = vunpack.c.h.b16 %v334
        %v1057 = vunpack.c.l.b16 %v335
        %v1058 = vunpack.c.h.b16 %v335
        %v1059 = vunpack.c.l.b16 %v336
        %v1060 = vunpack.c.h.b16 %v336
        %v1061 = vunpack.c.l.b16 %v337
        %v1062 = vunpack.c.h.b16 %v337
        %v1063 = vunpack.c.l.b16 %v338
        %v1064 = vunpack.c.h.b16 %v338
        %v1065 = vunpack.c.l.b16 %v339
        %v1066 = vunpack.c.h.b16 %v339
        %v1067 = vunpack.c.l.b16 %v340
        %v1068 = vunpack.c.h.b16 %v340
        %v1069 = vunpack.c.l.b16 %v341
        %v1070 = vunpack.c.h.b16 %v341
        %v1071 = vunpack.c.l.b16 %v342
        %v1072 = vunpack.c.h.b16 %v342
        %v1073 = vunpack.c.l.b16 %v343
        %v1074 = vunpack.c.h.b16 %v343
        %v1075 = vunpack.c.l.b16 %v344
        %v1076 = vunpack.c.h.b16 %v344
        %v1077 = vunpack.c.l.b16 %v345
        %v1078 = vunpack.c.h.b16 %v345
        %v1079 = vunpack.c.l.b16 %v346
        %v1080 = vunpack.c.h.b16 %v346
        %v1081 = vunpack.c.l.b16 %v347
        %v1082 = vunpack.c.h.b16 %v347
        %v1083 = vunpack.c.l.b16 %v348
        %v1084 = vunpack.c.h.b16 %v348
        %v1085 = vunpack.c.l.b16 %v349
        %v1086 = vunpack.c.h.b16 %v349
        %v1087 = vunpack.c.l.b16 %v350
        %v1088 = vunpack.c.h.b16 %v350
        %v1089 = vunpack.c.l.b16 %v351
        %v1090 = vunpack.c.h.b16 %v351
        %v1091 = vunpack.c.l.b16 %v352
        %v1092 = vunpack.c.h.b16 %v352
        %v1093 = vunpack.c.l.b16 %v353
        %v1094 = vunpack.c.h.b16 %v353
        %v1095 = vunpack.c.l.b16 %v354
        %v1096 = vunpack.c.h.b16 %v354
        %v1097 = vunpack.c.l.b16 %v355
        %v1098 = vunpack.c.h.b16 %v355
        %v1099 = vunpack.c.l.b16 %v356
        %v1100 = vunpack.c.h.b16 %v356
        %v1101 = vunpack.c.l.b16 %v357
        %v1102 = vunpack.c.h.b16 %v357
        %v1103 = vunpack.c.l.b16 %v358
        %v1104 = vunpack.c.h.b16 %v358
        %v1105 = vunpack.c.l.b16 %v359
        %v1106 = vunpack.c.h.b16 %v359
        %v1107 = vunpack.c.l.b16 %v360
        %v1108 = vunpack.c.h.b16 %v360
        %v1109 = vunpack.c.l.b16 %v361
        %v1110 = vunpack.c.h.b16 %v361
        %v1111 = vunpack.c.l.b16 %v362
        %v1112 = vunpack.c.h.b16 %v362
        %v1113 = vunpack.c.l.b16 %v363
        %v1114 = vunpack.c.h.b16 %v363
        %v1115 = vunpack.c.l.b16 %v364
        %v1116 = vunpack.c.h.b16 %v364
        %v1117 = vunpack.c.l.b16 %v365
        %v1118 = vunpack.c.h.b16 %v365
        %v1119 = vunpack.c.l.b16 %v366
        %v1120 = vunpack.c.h.b16 %v366
        %v1121 = vunpack.c.l.b16 %v367
        %v1122 = vunpack.c.h.b16 %v367
        %v1123 = vunpack.c.l.b16 %v368
        %v1124 = vunpack.c.h.b16 %v368
        %v1125 = vunpack.c.l.b16 %v369
        %v1126 = vunpack.c.h.b16 %v369
        %v1127 = vunpack.c.l.b16 %v370
        %v1128 = vunpack.c.h.b16 %v370
        %v1129 = vunpack.c.l.b16 %v371
        %v1130 = vunpack.c.h.b16 %v371
        %v1131 = vunpack.c.l.b16 %v372
        %v1132 = vunpack.c.h.b16 %v372
        %v1133 = vunpack.c.l.b16 %v373
        %v1134 = vunpack.c.h.b16 %v373
        %v1135 = vunpack.c.l.b16 %v374
        %v1136 = vunpack.c.h.b16 %v374
        %v1137 = vunpack.c.l.b16 %v375
        %v1138 = vunpack.c.h.b16 %v375
        %v1139 = vunpack.c.l.b16 %v376
        %v1140 = vunpack.c.h.b16 %v376
        %v1141 = vunpack.c.l.b16 %v377
        %v1142 = vunpack.c.h.b16 %v377
        %v1143 = vunpack.c.l.b16 %v378
        %v1144 = vunpack.c.h.b16 %v378
        %v1145 = vunpack.c.l.b16 %v379
        %v1146 = vunpack.c.h.b16 %v379
        %v1147 = vunpack.c.l.b16 %v380
        %v1148 = vunpack.c.h.b16 %v380
        %v1149 = vunpack.c.l.b16 %v381
        %v1150 = vunpack.c.h.b16 %v381
        %v1151 = vunpack.c.l.b16 %v382
        %v1152 = vunpack.c.h.b16 %v382
        %v1153 = vunpack.c.l.b16 %v383
        %v1154 = vunpack.c.h.b16 %v383
        %v1155 = vunpack.c.l.b16 %v384
        %v1156 = vunpack.c.h.b16 %v384
        %v1157 = vunpack.c.l.b16 %v385
        %v1158 = vunpack.c.h.b16 %v385
        %v1159 = vunpack.c.l.b16 %v386
        %v1160 = vunpack.c.h.b16 %v386
        %v1161 = vunpack.c.l.b16 %v387
        %v1162 = vunpack.c.h.b16 %v387
        %v1163 = vunpack.c.l.b16 %v388
        %v1164 = vunpack.c.h.b16 %v388
        %v1165 = vunpack.c.l.b16 %v389
        %v1166 = vunpack.c.h.b16 %v389
        %v1167 = vunpack.c.l.b16 %v390
        %v1168 = vunpack.c.h.b16 %v390
        %v1169 = vunpack.c.l.b16 %v391
        %v1170 = vunpack.c.h.b16 %v391
        %v1171 = vunpack.c.l.b16 %v392
        %v1172 = vunpack.c.h.b16 %v392
        %v1173 = vunpack.c.l.b16 %v393
        %v1174 = vunpack.c.h.b16 %v393
        %v1175 = vunpack.c.l.b16 %v394
        %v1176 = vunpack.c.h.b16 %v394
        %v1177 = vunpack.c.l.b16 %v395
        %v1178 = vunpack.c.h.b16 %v395
        %v1179 = vunpack.c.l.b16 %v396
        %v1180 = vunpack.c.h.b16 %v396
        %v1181 = vunpack.c.l.b16 %v397
        %v1182 = vunpack.c.h.b16 %v397
        %v1183 = vunpack.c.l.b16 %v398
        %v1184 = vunpack.c.h.b16 %v398
        %v1185 = vunpack.c.l.b16 %v399
        %v1186 = vunpack.c.h.b16 %v399
        %v1187 = vunpack.c.l.b16 %v400
        %v1188 = vunpack.c.h.b16 %v400
        %v1189 = vunpack.c.l.b16 %v401
        %v1190 = vunpack.c.h.b16 %v401
        %v1191 = vunpack.c.l.b16 %v402
        %v1192 = vunpack.c.h.b16 %v402
        %v1193 = vunpack.c.l.b16 %v403
        %v1194 = vunpack.c.h.b16 %v403
        %v1195 = vunpack.c.l.b16 %v404
        %v1196 = vunpack.c.h.b16 %v404
        %v1197 = vunpack.c.l.b16 %v405
        %v1198 = vunpack.c.h.b16 %v405
        %v1199 = vunpack.c.l.b16 %v406
        %v1200 = vunpack.c.h.b16 %v406
        %v1201 = vunpack.c.l.b16 %v407
        %v1202 = vunpack.c.h.b16 %v407
        %v1203 = vunpack.c.l.b16 %v408
        %v1204 = vunpack.c.h.b16 %v408
        %v1205 = vunpack.c.l.b16 %v409
        %v1206 = vunpack.c.h.b16 %v409
        %v1207 = vunpack.c.l.b16 %v410
        %v1208 = vunpack.c.h.b16 %v410
        %v1209 = vunpack.c.l.b16 %v411
        %v1210 = vunpack.c.h.b16 %v411
        %v1211 = vunpack.c.l.b16 %v412
        %v1212 = vunpack.c.h.b16 %v412
        %v1213 = vunpack.c.l.b16 %v413
        %v1214 = vunpack.c.h.b16 %v413
        %v1215 = vunpack.c.l.b16 %v414
        %v1216 = vunpack.c.h.b16 %v414
        %v1217 = vunpack.c.l.b16 %v415
        %v1218 = vunpack.c.h.b16 %v415
        %v1219 = vunpack.c.l.b16 %v416
        %v1220 = vunpack.c.h.b16 %v416
        %v1221 = vunpack.c.l.b16 %v417
        %v1222 = vunpack.c.h.b16 %v417
        %v1223 = vunpack.c.l.b16 %v418
        %v1224 = vunpack.c.h.b16 %v418
        %v1225 = vunpack.c.l.b16 %v419
        %v1226 = vunpack.c.h.b16 %v419
        %v1227 = vunpack.c.l.b16 %v420
        %v1228 = vunpack.c.h.b16 %v420
        %v1229 = vunpack.c.l.b16 %v421
        %v1230 = vunpack.c.h.b16 %v421
        %v1231 = vunpack.c.l.b16 %v422
        %v1232 = vunpack.c.h.b16 %v422
        %v1233 = vunpack.c.l.b16 %v423
        %v1234 = vunpack.c.h.b16 %v423
        %v1235 = vunpack.c.l.b16 %v424
        %v1236 = vunpack.c.h.b16 %v424
        %v1237 = vunpack.c.l.b16 %v425
        %v1238 = vunpack.c.h.b16 %v425
        %v1239 = vunpack.c.l.b16 %v426
        %v1240 = vunpack.c.h.b16 %v426
        %v1241 = vunpack.c.l.b16 %v427
        %v1242 = vunpack.c.h.b16 %v427
        %v1243 = vunpack.c.l.b16 %v428
        %v1244 = vunpack.c.h.b16 %v428
        %v1245 = vunpack.c.l.b16 %v429
        %v1246 = vunpack.c.h.b16 %v429
        %v1247 = vunpack.c.l.b16 %v430
        %v1248 = vunpack.c.h.b16 %v430
        %v1249 = vunpack.c.l.b16 %v431
        %v1250 = vunpack.c.h.b16 %v431
        %v1251 = vunpack.c.l.b16 %v432
        %v1252 = vunpack.c.h.b16 %v432
        %v1253 = vunpack.c.l.b16 %v433
        %v1254 = vunpack.c.h.b16 %v433
        %v1255 = vunpack.c.l.b16 %v434
        %v1256 = vunpack.c.h.b16 %v434
        %v1257 = vunpack.c.l.b16 %v435
        %v1258 = vunpack.c.h.b16 %v435
        %v1259 = vunpack.c.l.b16 %v436
        %v1260 = vunpack.c.h.b16 %v436
        %v1261 = vunpack.c.l.b16 %v437
        %v1262 = vunpack.c.h.b16 %v437
        %v1263 = vunpack.c.l.b16 %v438
        %v1264 = vunpack.c.h.b16 %v438
        %v1265 = vunpack.c.l.b16 %v439
        %v1266 = vunpack.c.h.b16 %v439
        %v1267 = vunpack.c.l.b16 %v440
        %v1268 = vunpack.c.h.b16 %v440
        %v1269 = vunpack.c.l.b16 %v441
        %v1270 = vunpack.c.h.b16 %v441
        %v1271 = vunpack.c.l.b16 %v442
        %v1272 = vunpack.c.h.b16 %v442
        %v1273 = vunpack.c.l.b16 %v443
        %v1274 = vunpack.c.h.b16 %v443
        %v1275 = vunpack.c.l.b16 %v444
        %v1276 = vunpack.c.h.b16 %v444
        %v1277 = vunpack.c.l.b16 %v445
        %v1278 = vunpack.c.h.b16 %v445
        %v1279 = vunpack.c.l.b16 %v446
        %v1280 = vunpack.c.h.b16 %v446
        %v1281 = vunpack.c.l.b16 %v447
        %v1282 = vunpack.c.h.b16 %v447
        %v1283 = vunpack.c.l.b16 %v448
        %v1284 = vunpack.c.h.b16 %v448
        %v1285 = vunpack.c.l.b16 %v449
        %v1286 = vunpack.c.h.b16 %v449
        %v1287 = vunpack.c.l.b16 %v450
        %v1288 = vunpack.c.h.b16 %v450
        %v1289 = vunpack.c.l.b16 %v451
        %v1290 = vunpack.c.h.b16 %v451
        %v1291 = vunpack.c.l.b16 %v452
        %v1292 = vunpack.c.h.b16 %v452
        %v1293 = vunpack.c.l.b16 %v453
        %v1294 = vunpack.c.h.b16 %v453
        %v1295 = vunpack.c.l.b16 %v454
        %v1296 = vunpack.c.h.b16 %v454
        %v1297 = vunpack.c.l.b16 %v455
        %v1298 = vunpack.c.h.b16 %v455
        %v1299 = vunpack.c.l.b16 %v456
        %v1300 = vunpack.c.h.b16 %v456
        %v1301 = vunpack.c.l.b16 %v457
        %v1302 = vunpack.c.h.b16 %v457
        %v1303 = vunpack.c.l.b16 %v458
        %v1304 = vunpack.c.h.b16 %v458
        %v1305 = vunpack.c.l.b16 %v459
        %v1306 = vunpack.c.h.b16 %v459
        %v1307 = vunpack.c.l.b16 %v460
        %v1308 = vunpack.c.h.b16 %v460
        %v1309 = vunpack.c.l.b16 %v461
        %v1310 = vunpack.c.h.b16 %v461
        %v1311 = vunpack.c.l.b16 %v462
        %v1312 = vunpack.c.h.b16 %v462
        %v1313 = vunpack.c.l.b16 %v463
        %v1314 = vunpack.c.h.b16 %v463
        %v1315 = vunpack.c.l.b16 %v464
        %v1316 = vunpack.c.h.b16 %v464
        %v1317 = vunpack.c.l.b16 %v465
        %v1318 = vunpack.c.h.b16 %v465
        %v1319 = vunpack.c.l.b16 %v466
        %v1320 = vunpack.c.h.b16 %v466
        %v1321 = vunpack.c.l.b16 %v467
        %v1322 = vunpack.c.h.b16 %v467
        %v1323 = vunpack.c.l.b16 %v468
        %v1324 = vunpack.c.h.b16 %v468
        %v1325 = vunpack.c.l.b16 %v469
        %v1326 = vunpack.c.h.b16 %v469
        %v1327 = vunpack.c.l.b16 %v470
        %v1328 = vunpack.c.h.b16 %v470
        %v1329 = vunpack.c.l.b16 %v471
        %v1330 = vunpack.c.h.b16 %v471
        %v1331 = vunpack.c.l.b16 %v472
        %v1332 = vunpack.c.h.b16 %v472
        %v1333 = vunpack.c.l.b16 %v473
        %v1334 = vunpack.c.h.b16 %v473
        %v1335 = vunpack.c.l.b16 %v474
        %v1336 = vunpack.c.h.b16 %v474
        %v1337 = vunpack.c.l.b16 %v475
        %v1338 = vunpack.c.h.b16 %v475
        %v1339 = vunpack.c.l.b16 %v476
        %v1340 = vunpack.c.h.b16 %v476
        %v1341 = vunpack.c.l.b16 %v477
        %v1342 = vunpack.c.h.b16 %v477
        %v1343 = vunpack.c.l.b16 %v478
        %v1344 = vunpack.c.h.b16 %v478
        %v1345 = vunpack.c.l.b16 %v479
        %v1346 = vunpack.c.h.b16 %v479
        %v1347 = vunpack.c.l.b16 %v480
        %v1348 = vunpack.c.h.b16 %v480
        %v1349 = vunpack.c.l.b16 %v481
        %v1350 = vunpack.c.h.b16 %v481
        %v1351 = vunpack.c.l.b16 %v482
        %v1352 = vunpack.c.h.b16 %v482
        %v1353 = vunpack.c.l.b16 %v483
        %v1354 = vunpack.c.h.b16 %v483
        %v1355 = vunpack.c.l.b16 %v484
        %v1356 = vunpack.c.h.b16 %v484
        %v1357 = vunpack.c.l.b16 %v485
        %v1358 = vunpack.c.h.b16 %v485
        %v1359 = vunpack.c.l.b16 %v486
        %v1360 = vunpack.c.h.b16 %v486
        %v1361 = vunpack.c.l.b16 %v487
        %v1362 = vunpack.c.h.b16 %v487
        %v1363 = vunpack.c.l.b16 %v488
        %v1364 = vunpack.c.h.b16 %v488
        %v1365 = vunpack.c.l.b16 %v489
        %v1366 = vunpack.c.h.b16 %v489
        %v1367 = vunpack.c.l.b16 %v490
        %v1368 = vunpack.c.h.b16 %v490
        %v1369 = vunpack.c.l.b16 %v491
        %v1370 = vunpack.c.h.b16 %v491
        %v1371 = vunpack.c.l.b16 %v492
        %v1372 = vunpack.c.h.b16 %v492
        %v1373 = vunpack.c.l.b16 %v493
        %v1374 = vunpack.c.h.b16 %v493
        %v1375 = vunpack.c.l.b16 %v494
        %v1376 = vunpack.c.h.b16 %v494
        %v1377 = vunpack.c.l.b16 %v495
        %v1378 = vunpack.c.h.b16 %v495
        %v1379 = vunpack.c.l.b16 %v496
        %v1380 = vunpack.c.h.b16 %v496
        %v1381 = vunpack.c.l.b16 %v497
        %v1382 = vunpack.c.h.b16 %v497
        %v1383 = vunpack.c.l.b16 %v498
        %v1384 = vunpack.c.h.b16 %v498
        %v1385 = vunpack.c.l.b16 %v499
        %v1386 = vunpack.c.h.b16 %v499
        %v1387 = vunpack.c.l.b16 %v500
        %v1388 = vunpack.c.h.b16 %v500
        %v1389 = vunpack.c.l.b16 %v501
        %v1390 = vunpack.c.h.b16 %v501
        %v1391 = vunpack.c.l.b16 %v502
        %v1392 = vunpack.c.h.b16 %v502
        %v1393 = vunpack.c.l.b16 %v503
        %v1394 = vunpack.c.h.b16 %v503
        %v1395 = vunpack.c.l.b16 %v504
        %v1396 = vunpack.c.h.b16 %v504
        %v1397 = vunpack.c.l.b16 %v505
        %v1398 = vunpack.c.h.b16 %v505
        %v1399 = vunpack.c.l.b16 %v506
        %v1400 = vunpack.c.h.b16 %v506
        %v1401 = vunpack.c.l.b16 %v507
        %v1402 = vunpack.c.h.b16 %v507
        %v1403 = vunpack.c.l.b16 %v508
        %v1404 = vunpack.c.h.b16 %v508
        %v1405 = vunpack.c.l.b16 %v509
        %v1406 = vunpack.c.h.b16 %v509
        %v1407 = vunpack.c.l.b16 %v510
        %v1408 = vunpack.c.h.b16 %v510
        %v1409 = vunpack.c.l.b16 %v511
        %v1410 = vunpack.c.h.b16 %v511
        %v1411 = vunpack.c.l.b16 %v512
        %v1412 = vunpack.c.h.b16 %v512
        %v1413 = vunpack.c.l.b16 %v513
        %v1414 = vunpack.c.h.b16 %v513
        %v1415 = vunpack.c.l.b16 %v514
        %v1416 = vunpack.c.h.b16 %v514
        %v1417 = vunpack.c.l.b16 %v515
        %v1418 = vunpack.c.h.b16 %v515
        %v1419 = vunpack.c.l.b16 %v516
        %v1420 = vunpack.c.h.b16 %v516
        %v1421 = vunpack.c.l.b16 %v517
        %v1422 = vunpack.c.h.b16 %v517
        %v1423 = vunpack.c.l.b16 %v518
        %v1424 = vunpack.c.h.b16 %v518
        %v1425 = vunpack.c.l.b16 %v519
        %v1426 = vunpack.c.h.b16 %v519
        %v1427 = vunpack.c.l.b16 %v520
        %v1428 = vunpack.c.h.b16 %v520
        %v1429 = vunpack.c.l.b16 %v521
        %v1430 = vunpack.c.h.b16 %v521
        %v1431 = vunpack.c.l.b16 %v522
        %v1432 = vunpack.c.h.b16 %v522
        %v1433 = vunpack.c.l.b16 %v523
        %v1434 = vunpack.c.h.b16 %v523
        %v1435 = vunpack.c.l.b16 %v524
        %v1436 = vunpack.c.h.b16 %v524
        %v1437 = vunpack.c.l.b16 %v525
        %v1438 = vunpack.c.h.b16 %v525
        %v1439 = vunpack.c.l.b16 %v526
        %v1440 = vunpack.c.h.b16 %v526
        %v1441 = vunpack.c.l.b16 %v527
        %v1442 = vunpack.c.h.b16 %v527
        %v1443 = vunpack.c.l.b16 %v528
        %v1444 = vunpack.c.h.b16 %v528
        %v1445 = vunpack.c.l.b16 %v529
        %v1446 = vunpack.c.h.b16 %v529
        %v1447 = vunpack.c.l.b16 %v530
        %v1448 = vunpack.c.h.b16 %v530
        %v1449 = vunpack.c.l.b16 %v531
        %v1450 = vunpack.c.h.b16 %v531
        %v1451 = vunpack.c.l.b16 %v532
        %v1452 = vunpack.c.h.b16 %v532
        %v1453 = vunpack.c.l.b16 %v533
        %v1454 = vunpack.c.h.b16 %v533
        %v1455 = vunpack.c.l.b16 %v534
        %v1456 = vunpack.c.h.b16 %v534
        %v1457 = vunpack.c.l.b16 %v535
        %v1458 = vunpack.c.h.b16 %v535
        %v1459 = vunpack.c.l.b16 %v536
        %v1460 = vunpack.c.h.b16 %v536
        %v1461 = vunpack.c.l.b16 %v537
        %v1462 = vunpack.c.h.b16 %v537
        %v1463 = vunpack.c.l.b16 %v538
        %v1464 = vunpack.c.h.b16 %v538
        %v1465 = vunpack.c.l.b16 %v539
        %v1466 = vunpack.c.h.b16 %v539
        %v1467 = vunpack.c.l.b16 %v540
        %v1468 = vunpack.c.h.b16 %v540
        %v1469 = vunpack.c.l.b16 %v541
        %v1470 = vunpack.c.h.b16 %v541
        %v1471 = vunpack.c.l.b16 %v542
        %v1472 = vunpack.c.h.b16 %v542
        %v1473 = vunpack.c.l.b16 %v543
        %v1474 = vunpack.c.h.b16 %v543
        %v1475 = vunpack.c.l.b16 %v544
        %v1476 = vunpack.c.h.b16 %v544
        %v1477 = vunpack.c.l.b16 %v545
        %v1478 = vunpack.c.h.b16 %v545
        %v1479 = vunpack.c.l.b16 %v546
        %v1480 = vunpack.c.h.b16 %v546
        %v1481 = vunpack.c.l.b16 %v547
        %v1482 = vunpack.c.h.b16 %v547
        %v1483 = vunpack.c.l.b16 %v548
        %v1484 = vunpack.c.h.b16 %v548
        %v1485 = vunpack.c.l.b16 %v549
        %v1486 = vunpack.c.h.b16 %v549
        %v1487 = vunpack.c.l.b16 %v550
        %v1488 = vunpack.c.h.b16 %v550
        %v1489 = vunpack.c.l.b16 %v551
        %v1490 = vunpack.c.h.b16 %v551
        %v1491 = vunpack.c.l.b16 %v552
        %v1492 = vunpack.c.h.b16 %v552
        %v1493 = vunpack.c.l.b16 %v553
        %v1494 = vunpack.c.h.b16 %v553
        %v1495 = vunpack.c.l.b16 %v554
        %v1496 = vunpack.c.h.b16 %v554
        %v1497 = vunpack.c.l.b16 %v555
        %v1498 = vunpack.c.h.b16 %v555
        %v1499 = vunpack.c.l.b16 %v556
        %v1500 = vunpack.c.h.b16 %v556
        %v1501 = vunpack.c.l.b16 %v557
        %v1502 = vunpack.c.h.b16 %v557
        %v1503 = vunpack.c.l.b16 %v558
        %v1504 = vunpack.c.h.b16 %v558
        %v1505 = vunpack.c.l.b16 %v559
        %v1506 = vunpack.c.h.b16 %v559
        %v1507 = vunpack.c.l.b16 %v560
        %v1508 = vunpack.c.h.b16 %v560
        %v1509 = vunpack.c.l.b16 %v561
        %v1510 = vunpack.c.h.b16 %v561
        %v1511 = vunpack.c.l.b16 %v562
        %v1512 = vunpack.c.h.b16 %v562
        %v1513 = vunpack.c.l.b16 %v563
        %v1514 = vunpack.c.h.b16 %v563
        %v1515 = vunpack.c.l.b16 %v564
        %v1516 = vunpack.c.h.b16 %v564
        %v1517 = vunpack.c.l.b16 %v565
        %v1518 = vunpack.c.h.b16 %v565
        %v1519 = vunpack.c.l.b16 %v566
        %v1520 = vunpack.c.h.b16 %v566
        %v1521 = vunpack.c.l.b16 %v567
        %v1522 = vunpack.c.h.b16 %v567
        %v1523 = vunpack.c.l.b16 %v568
        %v1524 = vunpack.c.h.b16 %v568
        %v1525 = vunpack.c.l.b16 %v569
        %v1526 = vunpack.c.h.b16 %v569
        %v1527 = vunpack.c.l.b16 %v570
        %v1528 = vunpack.c.h.b16 %v570
        %v1529 = vunpack.c.l.b16 %v571
        %v1530 = vunpack.c.h.b16 %v571
        %v1531 = vunpack.c.l.b16 %v572
        %v1532 = vunpack.c.h.b16 %v572
        %v1533 = vunpack.c.l.b16 %v573
        %v1534 = vunpack.c.h.b16 %v573
        %v1535 = vunpack.c.l.b16 %v574
        %v1536 = vunpack.c.h.b16 %v574
        %v1537 = vunpack.c.l.b16 %v575
        %v1538 = vunpack.c.h.b16 %v575
        %v1539 = vunpack.c.l.b16 %v576
        %v1540 = vunpack.c.h.b16 %v576
        %v1541 = vunpack.c.l.b16 %v577
        %v1542 = vunpack.c.h.b16 %v577
        %v1543 = vunpack.c.l.b16 %v578
        %v1544 = vunpack.c.h.b16 %v578
        %v1545 = vunpack.c.l.b16 %v579
        %v1546 = vunpack.c.h.b16 %v579
        %v1547 = vunpack.c.l.b16 %v580
        %v1548 = vunpack.c.h.b16 %v580
        %v1549 = vunpack.c.l.b16 %v581
        %v1550 = vunpack.c.h.b16 %v581
        %v1551 = vunpack.c.l.b16 %v582
        %v1552 = vunpack.c.h.b16 %v582
        %v1553 = vunpack.c.l.b16 %v583
        %v1554 = vunpack.c.h.b16 %v583
        %v1555 = vunpack.c.l.b16 %v584
        %v1556 = vunpack.c.h.b16 %v584
        %v1557 = vunpack.c.l.b16 %v585
        %v1558 = vunpack.c.h.b16 %v585
        %v1559 = vunpack.c.l.b16 %v586
        %v1560 = vunpack.c.h.b16 %v586
        %v1561 = vunpack.c.l.b16 %v587
        %v1562 = vunpack.c.h.b16 %v587
        %v1563 = vunpack.c.l.b16 %v588
        %v1564 = vunpack.c.h.b16 %v588
        %v1565 = vunpack.c.l.b16 %v589
        %v1566 = vunpack.c.h.b16 %v589
        %v1567 = vunpack.c.l.b16 %v590
        %v1568 = vunpack.c.h.b16 %v590
        %v1569 = vunpack.c.l.b16 %v591
        %v1570 = vunpack.c.h.b16 %v591
        %v1571 = vunpack.c.l.b16 %v592
        %v1572 = vunpack.c.h.b16 %v592
        %v1573 = vunpack.c.l.b16 %v593
        %v1574 = vunpack.c.h.b16 %v593
        %v1575 = vunpack.c.l.b16 %v594
        %v1576 = vunpack.c.h.b16 %v594
        %v1577 = vunpack.c.l.b16 %v595
        %v1578 = vunpack.c.h.b16 %v595
        %v1579 = vunpack.c.l.b16 %v596
        %v1580 = vunpack.c.h.b16 %v596
        %v1581 = vunpack.c.l.b16 %v597
        %v1582 = vunpack.c.h.b16 %v597
        %v1583 = vunpack.c.l.b16 %v598
        %v1584 = vunpack.c.h.b16 %v598
        %v1585 = vunpack.c.l.b16 %v599
        %v1586 = vunpack.c.h.b16 %v599
        %v1587 = vunpack.c.l.b16 %v600
        %v1588 = vunpack.c.h.b16 %v600
        %v1589 = vunpack.c.l.b16 %v601
        %v1590 = vunpack.c.h.b16 %v601
        %v1591 = vunpack.c.l.b16 %v602
        %v1592 = vunpack.c.h.b16 %v602
        %v1593 = vunpack.c.l.b16 %v603
        %v1594 = vunpack.c.h.b16 %v603
        %v1595 = vunpack.c.l.b16 %v604
        %v1596 = vunpack.c.h.b16 %v604
        %v1597 = vpack.c.b16 %v1033, %v1021
        %v1598 = vpack.c.b16 %v1034, %v1022
        %v1599 = vpack.c.b16 %v1035, %v1023
        %v1600 = vpack.c.b16 %v1036, %v1024
        %v1601 = vpack.c.b16 %v1037, %v1025
        %v1602 = vpack.c.b16 %v1038, %v1026
        %v1603 = vpack.c.b16 %v1039, %v1027
        %v1604 = vpack.c.b16 %v1040, %v1028
        %v1605 = vpack.c.b16 %v1041, %v1029
        %v1606 = vpack.c.b16 %v1042, %v1030
        %v1607 = vpack.c.b16 %v1043, %v1031
        %v1608 = vpack.c.b16 %v1044, %v1032
        %v1609 = vpack.c.b16 %v1057, %v1045
        %v1610 = vpack.c.b16 %v1058, %v1046
        %v1611 = vpack.c.b16 %v1059, %v1047
        %v1612 = vpack.c.b16 %v1060, %v1048
        %v1613 = vpack.c.b16 %v1061, %v1049
        %v1614 = vpack.c.b16 %v1062, %v1050
        %v1615 = vpack.c.b16 %v1063, %v1051
        %v1616 = vpack.c.b16 %v1064, %v1052
        %v1617 = vpack.c.b16 %v1065, %v1053
        %v1618 = vpack.c.b16 %v1066, %v1054
        %v1619 = vpack.c.b16 %v1067, %v1055
        %v1620 = vpack.c.b16 %v1068, %v1056
        %v1621 = vpack.c.b16 %v1081, %v1069
        %v1622 = vpack.c.b16 %v1082, %v1070
        %v1623 = vpack.c.b16 %v1083, %v1071
        %v1624 = vpack.c.b16 %v1084, %v1072
        %v1625 = vpack.c.b16 %v1085, %v1073
        %v1626 = vpack.c.b16 %v1086, %v1074
        %v1627 = vpack.c.b16 %v1087, %v1075
        %v1628 = vpack.c.b16 %v1088, %v1076
        %v1629 = vpack.c.b16 %v1089, %v1077
        %v1630 = vpack.c.b16 %v1090, %v1078
        %v1631 = vpack.c.b16 %v1091, %v1079
        %v1632 = vpack.c.b16 %v1092, %v1080
        %v1633 = vpack.c.b16 %v1105, %v1093
        %v1634 = vpack.c.b16 %v1106, %v1094
        %v1635 = vpack.c.b16 %v1107, %v1095
        %v1636 = vpack.c.b16 %v1108, %v1096
        %v1637 = vpack.c.b16 %v1109, %v1097
        %v1638 = vpack.c.b16 %v1110, %v1098
        %v1639 = vpack.c.b16 %v1111, %v1099
        %v1640 = vpack.c.b16 %v1112, %v1100
        %v1641 = vpack.c.b16 %v1113, %v1101
        %v1642 = vpack.c.b16 %v1114, %v1102
        %v1643 = vpack.c.b16 %v1115, %v1103
        %v1644 = vpack.c.b16 %v1116, %v1104
        %v1645 = vpack.c.b16 %v1129, %v1117
        %v1646 = vpack.c.b16 %v1130, %v1118
        %v1647 = vpack.c.b16 %v1131, %v1119
        %v1648 = vpack.c.b16 %v1132, %v1120
        %v1649 = vpack.c.b16 %v1133, %v1121
        %v1650 = vpack.c.b16 %v1134, %v1122
        %v1651 = vpack.c.b16 %v1135, %v1123
        %v1652 = vpack.c.b16 %v1136, %v1124
        %v1653 = vpack.c.b16 %v1137, %v1125
        %v1654 = vpack.c.b16 %v1138, %v1126
        %v1655 = vpack.c.b16 %v1139, %v1127
        %v1656 = vpack.c.b16 %v1140, %v1128
        %v1657 = vpack.c.b16 %v1153, %v1141
        %v1658 = vpack.c.b16 %v1154, %v1142
        %v1659 = vpack.c.b16 %v1155, %v1143
        %v1660 = vpack.c.b16 %v1156, %v1144
        %v1661 = vpack.c.b16 %v1157, %v1145
        %v1662 = vpack.c.b16 %v1158, %v1146
        %v1663 = vpack.c.b16 %v1159, %v1147
        %v1664 = vpack.c.b16 %v1160, %v1148
        %v1665 = vpack.c.b16 %v1161, %v1149
        %v1666 = vpack.c.b16 %v1162, %v1150
        %v1667 = vpack.c.b16 %v1163, %v1151
        %v1668 = vpack.c.b16 %v1164, %v1152
        %v1669 = vpack.c.b16 %v1177, %v1165
        %v1670 = vpack.c.b16 %v1178, %v1166
        %v1671 = vpack.c.b16 %v1179, %v1167
        %v1672 = vpack.c.b16 %v1180, %v1168
        %v1673 = vpack.c.b16 %v1181, %v1169
        %v1674 = vpack.c.b16 %v1182, %v1170
        %v1675 = vpack.c.b16 %v1183, %v1171
        %v1676 = vpack.c.b16 %v1184, %v1172
        %v1677 = vpack.c.b16 %v1185, %v1173
        %v1678 = vpack.c.b16 %v1186, %v1174
        %v1679 = vpack.c.b16 %v1187, %v1175
        %v1680 = vpack.c.b16 %v1188, %v1176
        %v1681 = vpack.c.b16 %v1201, %v1189
        %v1682 = vpack.c.b16 %v1202, %v1190
        %v1683 = vpack.c.b16 %v1203, %v1191
        %v1684 = vpack.c.b16 %v1204, %v1192
        %v1685 = vpack.c.b16 %v1205, %v1193
        %v1686 = vpack.c.b16 %v1206, %v1194
        %v1687 = vpack.c.b16 %v1207, %v1195
        %v1688 = vpack.c.b16 %v1208, %v1196
        %v1689 = vpack.c.b16 %v1209, %v1197
        %v1690 = vpack.c.b16 %v1210, %v1198
        %v1691 = vpack.c.b16 %v1211, %v1199
        %v1692 = vpack.c.b16 %v1212, %v1200
        %v1693 = vpack.c.b16 %v1225, %v1213
        %v1694 = vpack.c.b16 %v1226, %v1214
        %v1695 = vpack.c.b16 %v1227, %v1215
        %v1696 = vpack.c.b16 %v1228, %v1216
        %v1697 = vpack.c.b16 %v1229, %v1217
        %v1698 = vpack.c.b16 %v1230, %v1218
        %v1699 = vpack.c.b16 %v1231, %v1219
        %v1700 = vpack.c.b16 %v1232, %v1220
        %v1701 = vpack.c.b16 %v1233, %v1221
        %v1702 = vpack.c.b16 %v1234, %v1222
        %v1703 = vpack.c.b16 %v1235, %v1223
        %v1704 = vpack.c.b16 %v1236, %v1224
        %v1705 = vpack.c.b16 %v1249, %v1237
        %v1706 = vpack.c.b16 %v1250, %v1238
        %v1707 = vpack.c.b16 %v1251, %v1239
        %v1708 = vpack.c.b16 %v1252, %v1240
        %v1709 = vpack.c.b16 %v1253, %v1241
        %v1710 = vpack.c.b16 %v1254, %v1242
        %v1711 = vpack.c.b16 %v1255, %v1243
        %v1712 = vpack.c.b16 %v1256, %v1244
        %v1713 = vpack.c.b16 %v1257, %v1245
        %v1714 = vpack.c.b16 %v1258, %v1246
        %v1715 = vpack.c.b16 %v1259, %v1247
        %v1716 = vpack.c.b16 %v1260, %v1248
        %v1717 = vpack.c.b16 %v1273, %v1261
        %v1718 = vpack.c.b16 %v1274, %v1262
        %v1719 = vpack.c.b16 %v1275, %v1263
        %v1720 = vpack.c.b16 %v1276, %v1264
        %v1721 = vpack.c.b16 %v1277, %v1265
        %v1722 = vpack.c.b16 %v1278, %v1266
        %v1723 = vpack.c.b16 %v1279, %v1267
        %v1724 = vpack.c.b16 %v1280, %v1268
        %v1725 = vpack.c.b16 %v1281, %v1269
        %v1726 = vpack.c.b16 %v1282, %v1270
        %v1727 = vpack.c.b16 %v1283, %v1271
        %v1728 = vpack.c.b16 %v1284, %v1272
        %v1729 = vpack.c.b16 %v1297, %v1285
        %v1730 = vpack.c.b16 %v1298, %v1286
        %v1731 = vpack.c.b16 %v1299, %v1287
        %v1732 = vpack.c.b16 %v1300, %v1288
        %v1733 = vpack.c.b16 %v1301, %v1289
        %v1734 = vpack.c.b16 %v1302, %v1290
        %v1735 = vpack.c.b16 %v1303, %v1291
        %v1736 = vpack.c.b16 %v1304, %v1292
        %v1737 = vpack.c.b16 %v1305, %v1293
        %v1738 = vpack.c.b16 %v1306, %v1294
        %v1739 = vpack.c.b16 %v1307, %v1295
        %v1740 = vpack.c.b16 %v1308, %v1296
        %v1741 = vpack.c.b16 %v1321, %v1309
        %v1742 = vpack.c.b16 %v1322, %v1310
        %v1743 = vpack.c.b16 %v1323, %v1311
        %v1744 = vpack.c.b16 %v1324, %v1312
        %v1745 = vpack.c.b16 %v1325, %v1313
        %v1746 = vpack.c.b16 %v1326, %v1314
        %v1747 = vpack.c.b16 %v1327, %v1315
        %v1748 = vpack.c.b16 %v1328, %v1316
        %v1749 = vpack.c.b16 %v1329, %v1317
        %v1750 = vpack.c.b16 %v1330, %v1318
        %v1751 = vpack.c.b16 %v1331, %v1319
        %v1752 = vpack.c.b16 %v1332, %v1320
        %v1753 = vpack.c.b16 %v1345, %v1333
        %v1754 = vpack.c.b16 %v1346, %v1334
        %v1755 = vpack.c.b16 %v1347, %v1335
        %v1756 = vpack.c.b16 %v1348, %v1336
        %v1757 = vpack.c.b16 %v1349, %v1337
        %v1758 = vpack.c.b16 %v1350, %v1338
        %v1759 = vpack.c.b16 %v1351, %v1339
        %v1760 = vpack.c.b16 %v1352, %v1340
        %v1761 = vpack.c.b16 %v1353, %v1341
        %v1762 = vpack.c.b16 %v1354, %v1342
        %v1763 = vpack.c.b16 %v1355, %v1343
        %v1764 = vpack.c.b16 %v1356, %v1344
        %v1765 = vpack.c.b16 %v1369, %v1357
        %v1766 = vpack.c.b16 %v1370, %v1358
        %v1767 = vpack.c.b16 %v1371, %v1359
        %v1768 = vpack.c.b16 %v1372, %v1360
        %v1769 = vpack.c.b16 %v1373, %v1361
        %v1770 = vpack.c.b16 %v1374, %v1362
        %v1771 = vpack.c.b16 %v1375, %v1363
        %v1772 = vpack.c.b16 %v1376, %v1364
        %v1773 = vpack.c.b16 %v1377, %v1365
        %v1774 = vpack.c.b16 %v1378, %v1366
        %v1775 = vpack.c.b16 %v1379, %v1367
        %v1776 = vpack.c.b16 %v1380, %v1368
        %v1777 = vpack.c.b16 %v1393, %v1381
        %v1778 = vpack.c.b16 %v1394, %v1382
        %v1779 = vpack.c.b16 %v1395, %v1383
        %v1780 = vpack.c.b16 %v1396, %v1384
        %v1781 = vpack.c.b16 %v1397, %v1385
        %v1782 = vpack.c.b16 %v1398, %v1386
        %v1783 = vpack.c.b16 %v1399, %v1387
        %v1784 = vpack.c.b16 %v1400, %v1388
        %v1785 = vpack.c.b16 %v1401, %v1389
        %v1786 = vpack.c.b16 %v1402, %v1390
        %v1787 = vpack.c.b16 %v1403, %v1391
        %v1788 = vpack.c.b16 %v1404, %v1392
        %v1789 = vpack.c.b16 %v1417, %v1405
        %v1790 = vpack.c.b16 %v1418, %v1406
        %v1791 = vpack.c.b16 %v1419, %v1407
        %v1792 = vpack.c.b16 %v1420, %v1408
        %v1793 = vpack.c.b16 %v1421, %v1409
        %v1794 = vpack.c.b16 %v1422, %v1410
        %v1795 = vpack.c.b16 %v1423, %v1411
        %v1796 = vpack.c.b16 %v1424, %v1412
        %v1797 = vpack.c.b16 %v1425, %v1413
        %v1798 = vpack.c.b16 %v1426, %v1414
        %v1799 = vpack.c.b16 %v1427, %v1415
        %v1800 = vpack.c.b16 %v1428, %v1416
        %v1801 = vpack.c.b16 %v1441, %v1429
        %v1802 = vpack.c.b16 %v1442, %v1430
        %v1803 = vpack.c.b16 %v1443, %v1431
        %v1804 = vpack.c.b16 %v1444, %v1432
        %v1805 = vpack.c.b16 %v1445, %v1433
        %v1806 = vpack.c.b16 %v1446, %v1434
        %v1807 = vpack.c.b16 %v1447, %v1435
        %v1808 = vpack.c.b16 %v1448, %v1436
        %v1809 = vpack.c.b16 %v1449, %v1437
        %v1810 = vpack.c.b16 %v1450, %v1438
        %v1811 = vpack.c.b16 %v1451, %v1439
        %v1812 = vpack.c.b16 %v1452, %v1440
        %v1813 = vpack.c.b16 %v1465, %v1453
        %v1814 = vpack.c.b16 %v1466, %v1454
        %v1815 = vpack.c.b16 %v1467, %v1455
        %v1816 = vpack.c.b16 %v1468, %v1456
        %v1817 = vpack.c.b16 %v1469, %v1457
        %v1818 = vpack.c.b16 %v1470, %v1458
        %v1819 = vpack.c.b16 %v1471, %v1459
        %v1820 = vpack.c.b16 %v1472, %v1460
        %v1821 = vpack.c.b16 %v1473, %v1461
        %v1822 = vpack.c.b16 %v1474, %v1462
        %v1823 = vpack.c.b16 %v1475, %v1463
        %v1824 = vpack.c.b16 %v1476, %v1464
        %v1825 = vpack.c.b16 %v1489, %v1477
        %v1826 = vpack.c.b16 %v1490, %v1478
        %v1827 = vpack.c.b16 %v1491, %v1479
        %v1828 = vpack.c.b16 %v1492, %v1480
        %v1829 = vpack.c.b16 %v1493, %v1481
        %v1830 = vpack.c.b16 %v1494, %v1482
        %v1831 = vpack.c.b16 %v1495, %v1483
        %v1832 = vpack.c.b16 %v1496, %v1484
        %v1833 = vpack.c.b16 %v1497, %v1485
        %v1834 = vpack.c.b16 %v1498, %v1486
        %v1835 = vpack.c.b16 %v1499, %v1487
        %v1836 = vpack.c.b16 %v1500, %v1488
        %v1837 = vpack.c.b16 %v1513, %v1501
        %v1838 = vpack.c.b16 %v1514, %v1502
        %v1839 = vpack.c.b16 %v1515, %v1503
        %v1840 = vpack.c.b16 %v1516, %v1504
        %v1841 = vpack.c.b16 %v1517, %v1505
        %v1842 = vpack.c.b16 %v1518, %v1506
        %v1843 = vpack.c.b16 %v1519, %v1507
        %v1844 = vpack.c.b16 %v1520, %v1508
        %v1845 = vpack.c.b16 %v1521, %v1509
        %v1846 = vpack.c.b16 %v1522, %v1510
        %v1847 = vpack.c.b16 %v1523, %v1511
        %v1848 = vpack.c.b16 %v1524, %v1512
        %v1849 = vpack.c.b16 %v1537, %v1525
        %v1850 = vpack.c.b16 %v1538, %v1526
        %v1851 = vpack.c.b16 %v1539, %v1527
        %v1852 = vpack.c.b16 %v1540, %v1528
        %v1853 = vpack.c.b16 %v1541, %v1529
        %v1854 = vpack.c.b16 %v1542, %v1530
        %v1855 = vpack.c.b16 %v1543, %v1531
        %v1856 = vpack.c.b16 %v1544, %v1532
        %v1857 = vpack.c.b16 %v1545, %v1533
        %v1858 = vpack.c.b16 %v1546, %v1534
        %v1859 = vpack.c.b16 %v1547, %v1535
        %v1860 = vpack.c.b16 %v1548, %v1536
        %v1861 = vpack.c.b16 %v1561, %v1549
        %v1862 = vpack.c.b16 %v1562, %v1550
        %v1863 = vpack.c.b16 %v1563, %v1551
        %v1864 = vpack.c.b16 %v1564, %v1552
        %v1865 = vpack.c.b16 %v1565, %v1553
        %v1866 = vpack.c.b16 %v1566, %v1554
        %v1867 = vpack.c.b16 %v1567, %v1555
        %v1868 = vpack.c.b16 %v1568, %v1556
        %v1869 = vpack.c.b16 %v1569, %v1557
        %v1870 = vpack.c.b16 %v1570, %v1558
        %v1871 = vpack.c.b16 %v1571, %v1559
        %v1872 = vpack.c.b16 %v1572, %v1560
        %v1873 = vpack.c.b16 %v1585, %v1573
        %v1874 = vpack.c.b16 %v1586, %v1574
        %v1875 = vpack.c.b16 %v1587, %v1575
        %v1876 = vpack.c.b16 %v1588, %v1576
        %v1877 = vpack.c.b16 %v1589, %v1577
        %v1878 = vpack.c.b16 %v1590, %v1578
        %v1879 = vpack.c.b16 %v1591, %v1579
        %v1880 = vpack.c.b16 %v1592, %v1580
        %v1881 = vpack.c.b16 %v1593, %v1581
        %v1882 = vpack.c.b16 %v1594, %v1582
        %v1883 = vpack.c.b16 %v1595, %v1583
        %v1884 = vpack.c.b16 %v1596, %v1584
        %2173 = vmatprep.subr.bf16.mxu0 %v1598
        %2174 = vmatpush1.bf16.msra.mxu0 %v1597
        %2175 = vmatprep.subr.bf16.mxu0 %v1610
        %2176 = vmatpush1.bf16.msra.mxu0 %v1609
        %2177 = vmatprep.subr.bf16.mxu0 %v1622
        %2178 = vmatpush1.bf16.msra.mxu0 %v1621
        %2179 = vmatprep.subr.bf16.mxu0 %v1634
        %2180 = vmatpush1.bf16.msra.mxu0 %v1633
        %2181 = vmatprep.subr.bf16.mxu0 %v1646
        %2182 = vmatpush1.bf16.msra.mxu0 %v1645
        %2183 = vmatprep.subr.bf16.mxu0 %v1658
        %2184 = vmatpush1.bf16.msra.mxu0 %v1657
        %2185 = vmatprep.subr.bf16.mxu0 %v1670
        %2186 = vmatpush1.bf16.msra.mxu0 %v1669
        %2187 = vmatprep.subr.bf16.mxu0 %v1682
        %2188 = vmatpush1.bf16.msra.mxu0 %v1681
        %2189 = vmatprep.subr.bf16.mxu0 %v1694
        %2190 = vmatpush1.bf16.msra.mxu0 %v1693
        %2191 = vmatprep.subr.bf16.mxu0 %v1706
        %2192 = vmatpush1.bf16.msra.mxu0 %v1705
        %2193 = vmatprep.subr.bf16.mxu0 %v1718
        %2194 = vmatpush1.bf16.msra.mxu0 %v1717
        %2195 = vmatprep.subr.bf16.mxu0 %v1730
        %2196 = vmatpush1.bf16.msra.mxu0 %v1729
        %2197 = vmatprep.subr.bf16.mxu0 %v1742
        %2198 = vmatpush1.bf16.msra.mxu0 %v1741
        %2199 = vmatprep.subr.bf16.mxu0 %v1754
        %2200 = vmatpush1.bf16.msra.mxu0 %v1753
        %2201 = vmatprep.subr.bf16.mxu0 %v1766
        %2202 = vmatpush1.bf16.msra.mxu0 %v1765
        %2203 = vmatprep.subr.bf16.mxu0 %v1778
        %2204 = vmatpush1.bf16.msra.mxu0 %v1777
        %2205 = vmatprep.mubr.bf16.mxu0 %v710
        %2206 = vmatmul.mubr.bf16.gmra.mrb[0].mxu0 %v709
        %v2207 = vpop.f32.mrb[0].mxu0
        %v2208 = vadd.f32 %v612, %v2207
        %v2209 = vpop.f32.mrb[0].mxu0
        %v2210 = vadd.f32 %v616, %v2209
        %v2211 = vpop.f32.mrb[0].mxu0
        %v2212 = vadd.f32 %v612, %v2211
        %v2213 = vpop.f32.mrb[0].mxu0
        %v2214 = vadd.f32 %v616, %v2213
        %2215 = vmatprep.mubr.bf16.mxu0 %v713
        %2216 = vmatmul.mubr.bf16.gmra.mrb[0].mxu0 %v712
        %v2217 = vpop.f32.mrb[0].mxu0
        %v2218 = vadd.f32 %v612, %v2217
        %v2219 = vpop.f32.mrb[0].mxu0
        %v2220 = vadd.f32 %v616, %v2219
        %v2221 = vpop.f32.mrb[0].mxu0
        %v2222 = vadd.f32 %v612, %v2221
        %v2223 = vpop.f32.mrb[0].mxu0
        %v2224 = vadd.f32 %v616, %v2223
        %2225 = vmatprep.mubr.bf16.mxu0 %v716
        %2226 = vmatmul.mubr.bf16.gmra.mrb[0].mxu0 %v715
        %v2227 = vpop.f32.mrb[0].mxu0
        %v2228 = vadd.f32 %v612, %v2227
        %v2229 = vpop.f32.mrb[0].mxu0
        %v2230 = vadd.f32 %v616, %v2229
        %v2231 = vpop.f32.mrb[0].mxu0
        %v2232 = vadd.f32 %v612, %v2231
        %v2233 = vpop.f32.mrb[0].mxu0
        %v2234 = vadd.f32 %v616, %v2233
        %2235 = vmatprep.mubr.bf16.mxu0 %v719
        %2236 = vmatmul.mubr.bf16.gmra.mrb[0].mxu0 %v718
        %v2237 = vpop.f32.mrb[0].mxu0
        %v2238 = vadd.f32 %v612, %v2237
        %v2239 = vpop.f32.mrb[0].mxu0
        %v2240 = vadd.f32 %v616, %v2239
        %v2241 = vpop.f32.mrb[0].mxu0
        %v2242 = vadd.f32 %v612, %v2241
        %v2243 = vpop.f32.mrb[0].mxu0
        %v2244 = vadd.f32 %v616, %v2243
        %2245 = vdwg.mxu0
        %2246 = vmatprep.subr.bf16.mxu0 %v1790
        %2247 = vmatpush1.bf16.msra.mxu0 %v1789
        %2248 = vmatprep.subr.bf16.mxu0 %v1802
        %2249 = vmatpush1.bf16.msra.mxu0 %v1801
        %2250 = vmatprep.subr.bf16.mxu0 %v1814
        %2251 = vmatpush1.bf16.msra.mxu0 %v1813
        %2252 = vmatprep.subr.bf16.mxu0 %v1826
        %2253 = vmatpush1.bf16.msra.mxu0 %v1825
        %2254 = vmatprep.subr.bf16.mxu0 %v1838
        %2255 = vmatpush1.bf16.msra.mxu0 %v1837
        %2256 = vmatprep.subr.bf16.mxu0 %v1850
        %2257 = vmatpush1.bf16.msra.mxu0 %v1849
        %2258 = vmatprep.subr.bf16.mxu0 %v1862
        %2259 = vmatpush1.bf16.msra.mxu0 %v1861
        %2260 = vmatprep.subr.bf16.mxu0 %v1874
        %2261 = vmatpush1.bf16.msra.mxu0 %v1873
        %2262 = vmatprep.subr.bf16.mxu0 0
        %2263 = vmatpush1.bf16.msra.mxu0 0
        %2264 = vmatprep.subr.bf16.mxu0 0
        %2265 = vmatpush1.bf16.msra.mxu0 0
        %2266 = vmatprep.subr.bf16.mxu0 0
        %2267 = vmatpush1.bf16.msra.mxu0 0
        %2268 = vmatprep.subr.bf16.mxu0 0
        %2269 = vmatpush1.bf16.msra.mxu0 0
        %2270 = vmatprep.subr.bf16.mxu0 0
        %2271 = vmatpush1.bf16.msra.mxu0 0
        %2272 = vmatprep.subr.bf16.mxu0 0
        %2273 = vmatpush1.bf16.msra.mxu0 0
        %2274 = vmatprep.subr.bf16.mxu0 0
        %2275 = vmatpush1.bf16.msra.mxu0 0
        %2276 = vmatprep.subr.bf16.mxu0 0
        %2277 = vmatpush1.bf16.msra.mxu0 0
        %2278 = vmatprep.mubr.bf16.mxu0 0
        %2279 = vmatmul.mubr.bf16.gmra.mrb[0].mxu0 %v711
        %v2280 = vpop.f32.mrb[0].mxu0
        %v2281 = vadd.f32 %v2208, %v2280
        %v2282 = vpop.f32.mrb[0].mxu0
        %v2283 = vadd.f32 %v2210, %v2282
        %v2284 = vpop.f32.mrb[0].mxu0
        %v2285 = vadd.f32 %v2212, %v2284
        %v2286 = vpop.f32.mrb[0].mxu0
        %v2287 = vadd.f32 %v2214, %v2286
        %2288 = vmatprep.mubr.bf16.mxu0 0
        %2289 = vmatmul.mubr.bf16.gmra.mrb[0].mxu0 %v714
        %v2290 = vpop.f32.mrb[0].mxu0
        %v2291 = vadd.f32 %v2218, %v2290
        %v2292 = vpop.f32.mrb[0].mxu0
        %v2293 = vadd.f32 %v2220, %v2292
        %v2294 = vpop.f32.mrb[0].mxu0
        %v2295 = vadd.f32 %v2222, %v2294
        %v2296 = vpop.f32.mrb[0].mxu0
        %v2297 = vadd.f32 %v2224, %v2296
        %2298 = vmatprep.mubr.bf16.mxu0 0
        %2299 = vmatmul.mubr.bf16.gmra.mrb[0].mxu0 %v717
        %v2300 = vpop.f32.mrb[0].mxu0
        %v2301 = vadd.f32 %v2228, %v2300
        %v2302 = vpop.f32.mrb[0].mxu0
        %v2303 = vadd.f32 %v2230, %v2302
        %v2304 = vpop.f32.mrb[0].mxu0
        %v2305 = vadd.f32 %v2232, %v2304
        %v2306 = vpop.f32.mrb[0].mxu0
        %v2307 = vadd.f32 %v2234, %v2306
        %2308 = vmatprep.mubr.bf16.mxu0 0
        %2309 = vmatmul.mubr.bf16.gmra.mrb[0].mxu0 %v720
        %v2310 = vpop.f32.mrb[0].mxu0
        %v2311 = vadd.f32 %v2238, %v2310
        %v2312 = vpop.f32.mrb[0].mxu0
        %v2313 = vadd.f32 %v2240, %v2312
        %v2314 = vpop.f32.mrb[0].mxu0
        %v2315 = vadd.f32 %v2242, %v2314
        %v2316 = vpop.f32.mrb[0].mxu0
        %v2317 = vadd.f32 %v2244, %v2316
        %2318 = vdwg.mxu0
        %2319 = vmatprep.subr.bf16.mxu0 %v1600
        %2320 = vmatpush1.bf16.msra.mxu0 %v1599
        %2321 = vmatprep.subr.bf16.mxu0 %v1612
        %2322 = vmatpush1.bf16.msra.mxu0 %v1611
        %2323 = vmatprep.subr.bf16.mxu0 %v1624
        %2324 = vmatpush1.bf16.msra.mxu0 %v1623
        %2325 = vmatprep.subr.bf16.mxu0 %v1636
        %2326 = vmatpush1.bf16.msra.mxu0 %v1635
        %2327 = vmatprep.subr.bf16.mxu0 %v1648
        %2328 = vmatpush1.bf16.msra.mxu0 %v1647
        %2329 = vmatprep.subr.bf16.mxu0 %v1660
        %2330 = vmatpush1.bf16.msra.mxu0 %v1659
        %2331 = vmatprep.subr.bf16.mxu0 %v1672
        %2332 = vmatpush1.bf16.msra.mxu0 %v1671
        %2333 = vmatprep.subr.bf16.mxu0 %v1684
        %2334 = vmatpush1.bf16.msra.mxu0 %v1683
        %2335 = vmatprep.subr.bf16.mxu0 %v1696
        %2336 = vmatpush1.bf16.msra.mxu0 %v1695
        %2337 = vmatprep.subr.bf16.mxu0 %v1708
        %2338 = vmatpush1.bf16.msra.mxu0 %v1707
        %2339 = vmatprep.subr.bf16.mxu0 %v1720
        %2340 = vmatpush1.bf16.msra.mxu0 %v1719
        %2341 = vmatprep.subr.bf16.mxu0 %v1732
        %2342 = vmatpush1.bf16.msra.mxu0 %v1731
        %2343 = vmatprep.subr.bf16.mxu0 %v1744
        %2344 = vmatpush1.bf16.msra.mxu0 %v1743
        %2345 = vmatprep.subr.bf16.mxu0 %v1756
        %2346 = vmatpush1.bf16.msra.mxu0 %v1755
        %2347 = vmatprep.subr.bf16.mxu0 %v1768
        %2348 = vmatpush1.bf16.msra.mxu0 %v1767
        %2349 = vmatprep.subr.bf16.mxu0 %v1780
        %2350 = vmatpush1.bf16.msra.mxu0 %v1779
        %2351 = vmatprep.mubr.bf16.mxu0 %v710
        %2352 = vmatmul.mubr.bf16.gmra.mrb[0].mxu0 %v709
        %v2353 = vpop.f32.mrb[0].mxu0
        %v2354 = vadd.f32 %v620, %v2353
        %v2355 = vpop.f32.mrb[0].mxu0
        %v2356 = vadd.f32 %v624, %v2355
        %v2357 = vpop.f32.mrb[0].mxu0
        %v2358 = vadd.f32 %v620, %v2357
        %v2359 = vpop.f32.mrb[0].mxu0
        %v2360 = vadd.f32 %v624, %v2359
        %2361 = vmatprep.mubr.bf16.mxu0 %v713
        %2362 = vmatmul.mubr.bf16.gmra.mrb[0].mxu0 %v712
        %v2363 = vpop.f32.mrb[0].mxu0
        %v2364 = vadd.f32 %v620, %v2363
        %v2365 = vpop.f32.mrb[0].mxu0
        %v2366 = vadd.f32 %v624, %v2365
        %v2367 = vpop.f32.mrb[0].mxu0
        %v2368 = vadd.f32 %v620, %v2367
        %v2369 = vpop.f32.mrb[0].mxu0
        %v2370 = vadd.f32 %v624, %v2369
        %2371 = vmatprep.mubr.bf16.mxu0 %v716
        %2372 = vmatmul.mubr.bf16.gmra.mrb[0].mxu0 %v715
        %v2373 = vpop.f32.mrb[0].mxu0
        %v2374 = vadd.f32 %v620, %v2373
        %v2375 = vpop.f32.mrb[0].mxu0
        %v2376 = vadd.f32 %v624, %v2375
        %v2377 = vpop.f32.mrb[0].mxu0
        %v2378 = vadd.f32 %v620, %v2377
        %v2379 = vpop.f32.mrb[0].mxu0
        %v2380 = vadd.f32 %v624, %v2379
        %2381 = vmatprep.mubr.bf16.mxu0 %v719
        %2382 = vmatmul.mubr.bf16.gmra.mrb[0].mxu0 %v718
        %v2383 = vpop.f32.mrb[0].mxu0
        %v2384 = vadd.f32 %v620, %v2383
        %v2385 = vpop.f32.mrb[0].mxu0
        %v2386 = vadd.f32 %v624, %v2385
        %v2387 = vpop.f32.mrb[0].mxu0
        %v2388 = vadd.f32 %v620, %v2387
        %v2389 = vpop.f32.mrb[0].mxu0
        %v2390 = vadd.f32 %v624, %v2389
        %2391 = vdwg.mxu0
        %2392 = vmatprep.subr.bf16.mxu0 %v1792
        %2393 = vmatpush1.bf16.msra.mxu0 %v1791
        %2394 = vmatprep.subr.bf16.mxu0 %v1804
        %2395 = vmatpush1.bf16.msra.mxu0 %v1803
        %2396 = vmatprep.subr.bf16.mxu0 %v1816
        %2397 = vmatpush1.bf16.msra.mxu0 %v1815
        %2398 = vmatprep.subr.bf16.mxu0 %v1828
        %2399 = vmatpush1.bf16.msra.mxu0 %v1827
        %2400 = vmatprep.subr.bf16.mxu0 %v1840
        %2401 = vmatpush1.bf16.msra.mxu0 %v1839
        %2402 = vmatprep.subr.bf16.mxu0 %v1852
        %2403 = vmatpush1.bf16.msra.mxu0 %v1851
        %2404 = vmatprep.subr.bf16.mxu0 %v1864
        %2405 = vmatpush1.bf16.msra.mxu0 %v1863
        %2406 = vmatprep.subr.bf16.mxu0 %v1876
        %2407 = vmatpush1.bf16.msra.mxu0 %v1875
        %2408 = vmatprep.subr.bf16.mxu0 0
        %2409 = vmatpush1.bf16.msra.mxu0 0
        %2410 = vmatprep.subr.bf16.mxu0 0
        %2411 = vmatpush1.bf16.msra.mxu0 0
        %2412 = vmatprep.subr.bf16.mxu0 0
        %2413 = vmatpush1.bf16.msra.mxu0 0
        %2414 = vmatprep.subr.bf16.mxu0 0
        %2415 = vmatpush1.bf16.msra.mxu0 0
        %2416 = vmatprep.subr.bf16.mxu0 0
        %2417 = vmatpush1.bf16.msra.mxu0 0
        %2418 = vmatprep.subr.bf16.mxu0 0
        %2419 = vmatpush1.bf16.msra.mxu0 0
        %2420 = vmatprep.subr.bf16.mxu0 0
        %2421 = vmatpush1.bf16.msra.mxu0 0
        %2422 = vmatprep.subr.bf16.mxu0 0
        %2423 = vmatpush1.bf16.msra.mxu0 0
        %2424 = vmatprep.mubr.bf16.mxu0 0
        %2425 = vmatmul.mubr.bf16.gmra.mrb[0].mxu0 %v711
        %v2426 = vpop.f32.mrb[0].mxu0
        %v2427 = vadd.f32 %v2354, %v2426
        %v2428 = vpop.f32.mrb[0].mxu0
        %v2429 = vadd.f32 %v2356, %v2428
        %v2430 = vpop.f32.mrb[0].mxu0
        %v2431 = vadd.f32 %v2358, %v2430
        %v2432 = vpop.f32.mrb[0].mxu0
        %v2433 = vadd.f32 %v2360, %v2432
        %2434 = vmatprep.mubr.bf16.mxu0 0
        %2435 = vmatmul.mubr.bf16.gmra.mrb[0].mxu0 %v714
        %v2436 = vpop.f32.mrb[0].mxu0
        %v2437 = vadd.f32 %v2364, %v2436
        %v2438 = vpop.f32.mrb[0].mxu0
        %v2439 = vadd.f32 %v2366, %v2438
        %v2440 = vpop.f32.mrb[0].mxu0
        %v2441 = vadd.f32 %v2368, %v2440
        %v2442 = vpop.f32.mrb[0].mxu0
        %v2443 = vadd.f32 %v2370, %v2442
        %2444 = vmatprep.mubr.bf16.mxu0 0
        %2445 = vmatmul.mubr.bf16.gmra.mrb[0].mxu0 %v717
        %v2446 = vpop.f32.mrb[0].mxu0
        %v2447 = vadd.f32 %v2374, %v2446
        %v2448 = vpop.f32.mrb[0].mxu0
        %v2449 = vadd.f32 %v2376, %v2448
        %v2450 = vpop.f32.mrb[0].mxu0
        %v2451 = vadd.f32 %v2378, %v2450
        %v2452 = vpop.f32.mrb[0].mxu0
        %v2453 = vadd.f32 %v2380, %v2452
        %2454 = vmatprep.mubr.bf16.mxu0 0
        %2455 = vmatmul.mubr.bf16.gmra.mrb[0].mxu0 %v720
        %v2456 = vpop.f32.mrb[0].mxu0
        %v2457 = vadd.f32 %v2384, %v2456
        %v2458 = vpop.f32.mrb[0].mxu0
        %v2459 = vadd.f32 %v2386, %v2458
        %v2460 = vpop.f32.mrb[0].mxu0
        %v2461 = vadd.f32 %v2388, %v2460
        %v2462 = vpop.f32.mrb[0].mxu0
        %v2463 = vadd.f32 %v2390, %v2462
        %2464 = vdwg.mxu0
        %2465 = vmatprep.subr.bf16.mxu0 %v1602
        %2466 = vmatpush1.bf16.msra.mxu0 %v1601
        %2467 = vmatprep.subr.bf16.mxu0 %v1614
        %2468 = vmatpush1.bf16.msra.mxu0 %v1613
        %2469 = vmatprep.subr.bf16.mxu0 %v1626
        %2470 = vmatpush1.bf16.msra.mxu0 %v1625
        %2471 = vmatprep.subr.bf16.mxu0 %v1638
        %2472 = vmatpush1.bf16.msra.mxu0 %v1637
        %2473 = vmatprep.subr.bf16.mxu0 %v1650
        %2474 = vmatpush1.bf16.msra.mxu0 %v1649
        %2475 = vmatprep.subr.bf16.mxu0 %v1662
        %2476 = vmatpush1.bf16.msra.mxu0 %v1661
        %2477 = vmatprep.subr.bf16.mxu0 %v1674
        %2478 = vmatpush1.bf16.msra.mxu0 %v1673
        %2479 = vmatprep.subr.bf16.mxu0 %v1686
        %2480 = vmatpush1.bf16.msra.mxu0 %v1685
        %2481 = vmatprep.subr.bf16.mxu0 %v1698
        %2482 = vmatpush1.bf16.msra.mxu0 %v1697
        %2483 = vmatprep.subr.bf16.mxu0 %v1710
        %2484 = vmatpush1.bf16.msra.mxu0 %v1709
        %2485 = vmatprep.subr.bf16.mxu0 %v1722
        %2486 = vmatpush1.bf16.msra.mxu0 %v1721
        %2487 = vmatprep.subr.bf16.mxu0 %v1734
        %2488 = vmatpush1.bf16.msra.mxu0 %v1733
        %2489 = vmatprep.subr.bf16.mxu0 %v1746
        %2490 = vmatpush1.bf16.msra.mxu0 %v1745
        %2491 = vmatprep.subr.bf16.mxu0 %v1758
        %2492 = vmatpush1.bf16.msra.mxu0 %v1757
        %2493 = vmatprep.subr.bf16.mxu0 %v1770
        %2494 = vmatpush1.bf16.msra.mxu0 %v1769
        %2495 = vmatprep.subr.bf16.mxu0 %v1782
        %2496 = vmatpush1.bf16.msra.mxu0 %v1781
        %2497 = vmatprep.mubr.bf16.mxu0 %v710
        %2498 = vmatmul.mubr.bf16.gmra.mrb[0].mxu0 %v709
        %v2499 = vpop.f32.mrb[0].mxu0
        %v2500 = vadd.f32 %v628, %v2499
        %v2501 = vpop.f32.mrb[0].mxu0
        %v2502 = vadd.f32 %v632, %v2501
        %v2503 = vpop.f32.mrb[0].mxu0
        %v2504 = vadd.f32 %v628, %v2503
        %v2505 = vpop.f32.mrb[0].mxu0
        %v2506 = vadd.f32 %v632, %v2505
        %2507 = vmatprep.mubr.bf16.mxu0 %v713
        %2508 = vmatmul.mubr.bf16.gmra.mrb[0].mxu0 %v712
        %v2509 = vpop.f32.mrb[0].mxu0
        %v2510 = vadd.f32 %v628, %v2509
        %v2511 = vpop.f32.mrb[0].mxu0
        %v2512 = vadd.f32 %v632, %v2511
        %v2513 = vpop.f32.mrb[0].mxu0
        %v2514 = vadd.f32 %v628, %v2513
        %v2515 = vpop.f32.mrb[0].mxu0
        %v2516 = vadd.f32 %v632, %v2515
        %2517 = vmatprep.mubr.bf16.mxu0 %v716
        %2518 = vmatmul.mubr.bf16.gmra.mrb[0].mxu0 %v715
        %v2519 = vpop.f32.mrb[0].mxu0
        %v2520 = vadd.f32 %v628, %v2519
        %v2521 = vpop.f32.mrb[0].mxu0
        %v2522 = vadd.f32 %v632, %v2521
        %v2523 = vpop.f32.mrb[0].mxu0
        %v2524 = vadd.f32 %v628, %v2523
        %v2525 = vpop.f32.mrb[0].mxu0
        %v2526 = vadd.f32 %v632, %v2525
        %2527 = vmatprep.mubr.bf16.mxu0 %v719
        %2528 = vmatmul.mubr.bf16.gmra.mrb[0].mxu0 %v718
        %v2529 = vpop.f32.mrb[0].mxu0
        %v2530 = vadd.f32 %v628, %v2529
        %v2531 = vpop.f32.mrb[0].mxu0
        %v2532 = vadd.f32 %v632, %v2531
        %v2533 = vpop.f32.mrb[0].mxu0
        %v2534 = vadd.f32 %v628, %v2533
        %v2535 = vpop.f32.mrb[0].mxu0
        %v2536 = vadd.f32 %v632, %v2535
        %2537 = vdwg.mxu0
        %2538 = vmatprep.subr.bf16.mxu0 %v1794
        %2539 = vmatpush1.bf16.msra.mxu0 %v1793
        %2540 = vmatprep.subr.bf16.mxu0 %v1806
        %2541 = vmatpush1.bf16.msra.mxu0 %v1805
        %2542 = vmatprep.subr.bf16.mxu0 %v1818
        %2543 = vmatpush1.bf16.msra.mxu0 %v1817
        %2544 = vmatprep.subr.bf16.mxu0 %v1830
        %2545 = vmatpush1.bf16.msra.mxu0 %v1829
        %2546 = vmatprep.subr.bf16.mxu0 %v1842
        %2547 = vmatpush1.bf16.msra.mxu0 %v1841
        %2548 = vmatprep.subr.bf16.mxu0 %v1854
        %2549 = vmatpush1.bf16.msra.mxu0 %v1853
        %2550 = vmatprep.subr.bf16.mxu0 %v1866
        %2551 = vmatpush1.bf16.msra.mxu0 %v1865
        %2552 = vmatprep.subr.bf16.mxu0 %v1878
        %2553 = vmatpush1.bf16.msra.mxu0 %v1877
        %2554 = vmatprep.subr.bf16.mxu0 0
        %2555 = vmatpush1.bf16.msra.mxu0 0
        %2556 = vmatprep.subr.bf16.mxu0 0
        %2557 = vmatpush1.bf16.msra.mxu0 0
        %2558 = vmatprep.subr.bf16.mxu0 0
        %2559 = vmatpush1.bf16.msra.mxu0 0
        %2560 = vmatprep.subr.bf16.mxu0 0
        %2561 = vmatpush1.bf16.msra.mxu0 0
        %2562 = vmatprep.subr.bf16.mxu0 0
        %2563 = vmatpush1.bf16.msra.mxu0 0
        %2564 = vmatprep.subr.bf16.mxu0 0
        %2565 = vmatpush1.bf16.msra.mxu0 0
        %2566 = vmatprep.subr.bf16.mxu0 0
        %2567 = vmatpush1.bf16.msra.mxu0 0
        %2568 = vmatprep.subr.bf16.mxu0 0
        %2569 = vmatpush1.bf16.msra.mxu0 0
        %2570 = vmatprep.mubr.bf16.mxu0 0
        %2571 = vmatmul.mubr.bf16.gmra.mrb[0].mxu0 %v711
        %v2572 = vpop.f32.mrb[0].mxu0
        %v2573 = vadd.f32 %v2500, %v2572
        %v2574 = vpop.f32.mrb[0].mxu0
        %v2575 = vadd.f32 %v2502, %v2574
        %v2576 = vpop.f32.mrb[0].mxu0
        %v2577 = vadd.f32 %v2504, %v2576
        %v2578 = vpop.f32.mrb[0].mxu0
        %v2579 = vadd.f32 %v2506, %v2578
        %2580 = vmatprep.mubr.bf16.mxu0 0
        %2581 = vmatmul.mubr.bf16.gmra.mrb[0].mxu0 %v714
        %v2582 = vpop.f32.mrb[0].mxu0
        %v2583 = vadd.f32 %v2510, %v2582
        %v2584 = vpop.f32.mrb[0].mxu0
        %v2585 = vadd.f32 %v2512, %v2584
        %v2586 = vpop.f32.mrb[0].mxu0
        %v2587 = vadd.f32 %v2514, %v2586
        %v2588 = vpop.f32.mrb[0].mxu0
        %v2589 = vadd.f32 %v2516, %v2588
        %2590 = vmatprep.mubr.bf16.mxu0 0
        %2591 = vmatmul.mubr.bf16.gmra.mrb[0].mxu0 %v717
        %v2592 = vpop.f32.mrb[0].mxu0
        %v2593 = vadd.f32 %v2520, %v2592
        %v2594 = vpop.f32.mrb[0].mxu0
        %v2595 = vadd.f32 %v2522, %v2594
        %v2596 = vpop.f32.mrb[0].mxu0
        %v2597 = vadd.f32 %v2524, %v2596
        %v2598 = vpop.f32.mrb[0].mxu0
        %v2599 = vadd.f32 %v2526, %v2598
        %2600 = vmatprep.mubr.bf16.mxu0 0
        %2601 = vmatmul.mubr.bf16.gmra.mrb[0].mxu0 %v720
        %v2602 = vpop.f32.mrb[0].mxu0
        %v2603 = vadd.f32 %v2530, %v2602
        %v2604 = vpop.f32.mrb[0].mxu0
        %v2605 = vadd.f32 %v2532, %v2604
        %v2606 = vpop.f32.mrb[0].mxu0
        %v2607 = vadd.f32 %v2534, %v2606
        %v2608 = vpop.f32.mrb[0].mxu0
        %v2609 = vadd.f32 %v2536, %v2608
        %2610 = vdwg.mxu0
        %2611 = vmatprep.subr.bf16.mxu0 %v1604
        %2612 = vmatpush1.bf16.msra.mxu0 %v1603
        %2613 = vmatprep.subr.bf16.mxu0 %v1616
        %2614 = vmatpush1.bf16.msra.mxu0 %v1615
        %2615 = vmatprep.subr.bf16.mxu0 %v1628
        %2616 = vmatpush1.bf16.msra.mxu0 %v1627
        %2617 = vmatprep.subr.bf16.mxu0 %v1640
        %2618 = vmatpush1.bf16.msra.mxu0 %v1639
        %2619 = vmatprep.subr.bf16.mxu0 %v1652
        %2620 = vmatpush1.bf16.msra.mxu0 %v1651
        %2621 = vmatprep.subr.bf16.mxu0 %v1664
        %2622 = vmatpush1.bf16.msra.mxu0 %v1663
        %2623 = vmatprep.subr.bf16.mxu0 %v1676
        %2624 = vmatpush1.bf16.msra.mxu0 %v1675
        %2625 = vmatprep.subr.bf16.mxu0 %v1688
        %2626 = vmatpush1.bf16.msra.mxu0 %v1687
        %2627 = vmatprep.subr.bf16.mxu0 %v1700
        %2628 = vmatpush1.bf16.msra.mxu0 %v1699
        %2629 = vmatprep.subr.bf16.mxu0 %v1712
        %2630 = vmatpush1.bf16.msra.mxu0 %v1711
        %2631 = vmatprep.subr.bf16.mxu0 %v1724
        %2632 = vmatpush1.bf16.msra.mxu0 %v1723
        %2633 = vmatprep.subr.bf16.mxu0 %v1736
        %2634 = vmatpush1.bf16.msra.mxu0 %v1735
        %2635 = vmatprep.subr.bf16.mxu0 %v1748
        %2636 = vmatpush1.bf16.msra.mxu0 %v1747
        %2637 = vmatprep.subr.bf16.mxu0 %v1760
        %2638 = vmatpush1.bf16.msra.mxu0 %v1759
        %2639 = vmatprep.subr.bf16.mxu0 %v1772
        %2640 = vmatpush1.bf16.msra.mxu0 %v1771
        %2641 = vmatprep.subr.bf16.mxu0 %v1784
        %2642 = vmatpush1.bf16.msra.mxu0 %v1783
        %2643 = vmatprep.mubr.bf16.mxu0 %v710
        %2644 = vmatmul.mubr.bf16.gmra.mrb[0].mxu0 %v709
        %v2645 = vpop.f32.mrb[0].mxu0
        %v2646 = vadd.f32 %v636, %v2645
        %v2647 = vpop.f32.mrb[0].mxu0
        %v2648 = vadd.f32 %v640, %v2647
        %v2649 = vpop.f32.mrb[0].mxu0
        %v2650 = vadd.f32 %v636, %v2649
        %v2651 = vpop.f32.mrb[0].mxu0
        %v2652 = vadd.f32 %v640, %v2651
        %2653 = vmatprep.mubr.bf16.mxu0 %v713
        %2654 = vmatmul.mubr.bf16.gmra.mrb[0].mxu0 %v712
        %v2655 = vpop.f32.mrb[0].mxu0
        %v2656 = vadd.f32 %v636, %v2655
        %v2657 = vpop.f32.mrb[0].mxu0
        %v2658 = vadd.f32 %v640, %v2657
        %v2659 = vpop.f32.mrb[0].mxu0
        %v2660 = vadd.f32 %v636, %v2659
        %v2661 = vpop.f32.mrb[0].mxu0
        %v2662 = vadd.f32 %v640, %v2661
        %2663 = vmatprep.mubr.bf16.mxu0 %v716
        %2664 = vmatmul.mubr.bf16.gmra.mrb[0].mxu0 %v715
        %v2665 = vpop.f32.mrb[0].mxu0
        %v2666 = vadd.f32 %v636, %v2665
        %v2667 = vpop.f32.mrb[0].mxu0
        %v2668 = vadd.f32 %v640, %v2667
        %v2669 = vpop.f32.mrb[0].mxu0
        %v2670 = vadd.f32 %v636, %v2669
        %v2671 = vpop.f32.mrb[0].mxu0
        %v2672 = vadd.f32 %v640, %v2671
        %2673 = vmatprep.mubr.bf16.mxu0 %v719
        %2674 = vmatmul.mubr.bf16.gmra.mrb[0].mxu0 %v718
        %v2675 = vpop.f32.mrb[0].mxu0
        %v2676 = vadd.f32 %v636, %v2675
        %v2677 = vpop.f32.mrb[0].mxu0
        %v2678 = vadd.f32 %v640, %v2677
        %v2679 = vpop.f32.mrb[0].mxu0
        %v2680 = vadd.f32 %v636, %v2679
        %v2681 = vpop.f32.mrb[0].mxu0
        %v2682 = vadd.f32 %v640, %v2681
        %2683 = vdwg.mxu0
        %2684 = vmatprep.subr.bf16.mxu0 %v1796
        %2685 = vmatpush1.bf16.msra.mxu0 %v1795
        %2686 = vmatprep.subr.bf16.mxu0 %v1808
        %2687 = vmatpush1.bf16.msra.mxu0 %v1807
        %2688 = vmatprep.subr.bf16.mxu0 %v1820
        %2689 = vmatpush1.bf16.msra.mxu0 %v1819
        %2690 = vmatprep.subr.bf16.mxu0 %v1832
        %2691 = vmatpush1.bf16.msra.mxu0 %v1831
        %2692 = vmatprep.subr.bf16.mxu0 %v1844
        %2693 = vmatpush1.bf16.msra.mxu0 %v1843
        %2694 = vmatprep.subr.bf16.mxu0 %v1856
        %2695 = vmatpush1.bf16.msra.mxu0 %v1855
        %2696 = vmatprep.subr.bf16.mxu0 %v1868
        %2697 = vmatpush1.bf16.msra.mxu0 %v1867
        %2698 = vmatprep.subr.bf16.mxu0 %v1880
        %2699 = vmatpush1.bf16.msra.mxu0 %v1879
        %2700 = vmatprep.subr.bf16.mxu0 0
        %2701 = vmatpush1.bf16.msra.mxu0 0
        %2702 = vmatprep.subr.bf16.mxu0 0
        %2703 = vmatpush1.bf16.msra.mxu0 0
        %2704 = vmatprep.subr.bf16.mxu0 0
        %2705 = vmatpush1.bf16.msra.mxu0 0
        %2706 = vmatprep.subr.bf16.mxu0 0
        %2707 = vmatpush1.bf16.msra.mxu0 0
        %2708 = vmatprep.subr.bf16.mxu0 0
        %2709 = vmatpush1.bf16.msra.mxu0 0
        %2710 = vmatprep.subr.bf16.mxu0 0
        %2711 = vmatpush1.bf16.msra.mxu0 0
        %2712 = vmatprep.subr.bf16.mxu0 0
        %2713 = vmatpush1.bf16.msra.mxu0 0
        %2714 = vmatprep.subr.bf16.mxu0 0
        %2715 = vmatpush1.bf16.msra.mxu0 0
        %2716 = vmatprep.mubr.bf16.mxu0 0
        %2717 = vmatmul.mubr.bf16.gmra.mrb[0].mxu0 %v711
        %v2718 = vpop.f32.mrb[0].mxu0
        %v2719 = vadd.f32 %v2646, %v2718
        %v2720 = vpop.f32.mrb[0].mxu0
        %v2721 = vadd.f32 %v2648, %v2720
        %v2722 = vpop.f32.mrb[0].mxu0
        %v2723 = vadd.f32 %v2650, %v2722
        %v2724 = vpop.f32.mrb[0].mxu0
        %v2725 = vadd.f32 %v2652, %v2724
        %2726 = vmatprep.mubr.bf16.mxu0 0
        %2727 = vmatmul.mubr.bf16.gmra.mrb[0].mxu0 %v714
        %v2728 = vpop.f32.mrb[0].mxu0
        %v2729 = vadd.f32 %v2656, %v2728
        %v2730 = vpop.f32.mrb[0].mxu0
        %v2731 = vadd.f32 %v2658, %v2730
        %v2732 = vpop.f32.mrb[0].mxu0
        %v2733 = vadd.f32 %v2660, %v2732
        %v2734 = vpop.f32.mrb[0].mxu0
        %v2735 = vadd.f32 %v2662, %v2734
        %2736 = vmatprep.mubr.bf16.mxu0 0
        %2737 = vmatmul.mubr.bf16.gmra.mrb[0].mxu0 %v717
        %v2738 = vpop.f32.mrb[0].mxu0
        %v2739 = vadd.f32 %v2666, %v2738
        %v2740 = vpop.f32.mrb[0].mxu0
        %v2741 = vadd.f32 %v2668, %v2740
        %v2742 = vpop.f32.mrb[0].mxu0
        %v2743 = vadd.f32 %v2670, %v2742
        %v2744 = vpop.f32.mrb[0].mxu0
        %v2745 = vadd.f32 %v2672, %v2744
        %2746 = vmatprep.mubr.bf16.mxu0 0
        %2747 = vmatmul.mubr.bf16.gmra.mrb[0].mxu0 %v720
        %v2748 = vpop.f32.mrb[0].mxu0
        %v2749 = vadd.f32 %v2676, %v2748
        %v2750 = vpop.f32.mrb[0].mxu0
        %v2751 = vadd.f32 %v2678, %v2750
        %v2752 = vpop.f32.mrb[0].mxu0
        %v2753 = vadd.f32 %v2680, %v2752
        %v2754 = vpop.f32.mrb[0].mxu0
        %v2755 = vadd.f32 %v2682, %v2754
        %2756 = vdwg.mxu0
        %2757 = vmatprep.subr.bf16.mxu0 %v1606
        %2758 = vmatpush1.bf16.msra.mxu0 %v1605
        %2759 = vmatprep.subr.bf16.mxu0 %v1618
        %2760 = vmatpush1.bf16.msra.mxu0 %v1617
        %2761 = vmatprep.subr.bf16.mxu0 %v1630
        %2762 = vmatpush1.bf16.msra.mxu0 %v1629
        %2763 = vmatprep.subr.bf16.mxu0 %v1642
        %2764 = vmatpush1.bf16.msra.mxu0 %v1641
        %2765 = vmatprep.subr.bf16.mxu0 %v1654
        %2766 = vmatpush1.bf16.msra.mxu0 %v1653
        %2767 = vmatprep.subr.bf16.mxu0 %v1666
        %2768 = vmatpush1.bf16.msra.mxu0 %v1665
        %2769 = vmatprep.subr.bf16.mxu0 %v1678
        %2770 = vmatpush1.bf16.msra.mxu0 %v1677
        %2771 = vmatprep.subr.bf16.mxu0 %v1690
        %2772 = vmatpush1.bf16.msra.mxu0 %v1689
        %2773 = vmatprep.subr.bf16.mxu0 %v1702
        %2774 = vmatpush1.bf16.msra.mxu0 %v1701
        %2775 = vmatprep.subr.bf16.mxu0 %v1714
        %2776 = vmatpush1.bf16.msra.mxu0 %v1713
        %2777 = vmatprep.subr.bf16.mxu0 %v1726
        %2778 = vmatpush1.bf16.msra.mxu0 %v1725
        %2779 = vmatprep.subr.bf16.mxu0 %v1738
        %2780 = vmatpush1.bf16.msra.mxu0 %v1737
        %2781 = vmatprep.subr.bf16.mxu0 %v1750
        %2782 = vmatpush1.bf16.msra.mxu0 %v1749
        %2783 = vmatprep.subr.bf16.mxu0 %v1762
        %2784 = vmatpush1.bf16.msra.mxu0 %v1761
        %2785 = vmatprep.subr.bf16.mxu0 %v1774
        %2786 = vmatpush1.bf16.msra.mxu0 %v1773
        %2787 = vmatprep.subr.bf16.mxu0 %v1786
        %2788 = vmatpush1.bf16.msra.mxu0 %v1785
        %2789 = vmatprep.mubr.bf16.mxu0 %v710
        %2790 = vmatmul.mubr.bf16.gmra.mrb[0].mxu0 %v709
        %v2791 = vpop.f32.mrb[0].mxu0
        %v2792 = vadd.f32 %v644, %v2791
        %v2793 = vpop.f32.mrb[0].mxu0
        %v2794 = vadd.f32 %v648, %v2793
        %v2795 = vpop.f32.mrb[0].mxu0
        %v2796 = vadd.f32 %v644, %v2795
        %v2797 = vpop.f32.mrb[0].mxu0
        %v2798 = vadd.f32 %v648, %v2797
        %2799 = vmatprep.mubr.bf16.mxu0 %v713
        %2800 = vmatmul.mubr.bf16.gmra.mrb[0].mxu0 %v712
        %v2801 = vpop.f32.mrb[0].mxu0
        %v2802 = vadd.f32 %v644, %v2801
        %v2803 = vpop.f32.mrb[0].mxu0
        %v2804 = vadd.f32 %v648, %v2803
        %v2805 = vpop.f32.mrb[0].mxu0
        %v2806 = vadd.f32 %v644, %v2805
        %v2807 = vpop.f32.mrb[0].mxu0
        %v2808 = vadd.f32 %v648, %v2807
        %2809 = vmatprep.mubr.bf16.mxu0 %v716
        %2810 = vmatmul.mubr.bf16.gmra.mrb[0].mxu0 %v715
        %v2811 = vpop.f32.mrb[0].mxu0
        %v2812 = vadd.f32 %v644, %v2811
        %v2813 = vpop.f32.mrb[0].mxu0
        %v2814 = vadd.f32 %v648, %v2813
        %v2815 = vpop.f32.mrb[0].mxu0
        %v2816 = vadd.f32 %v644, %v2815
        %v2817 = vpop.f32.mrb[0].mxu0
        %v2818 = vadd.f32 %v648, %v2817
        %2819 = vmatprep.mubr.bf16.mxu0 %v719
        %2820 = vmatmul.mubr.bf16.gmra.mrb[0].mxu0 %v718
        %v2821 = vpop.f32.mrb[0].mxu0
        %v2822 = vadd.f32 %v644, %v2821
        %v2823 = vpop.f32.mrb[0].mxu0
        %v2824 = vadd.f32 %v648, %v2823
        %v2825 = vpop.f32.mrb[0].mxu0
        %v2826 = vadd.f32 %v644, %v2825
        %v2827 = vpop.f32.mrb[0].mxu0
        %v2828 = vadd.f32 %v648, %v2827
        %2829 = vdwg.mxu0
        %2830 = vmatprep.subr.bf16.mxu0 %v1798
        %2831 = vmatpush1.bf16.msra.mxu0 %v1797
        %2832 = vmatprep.subr.bf16.mxu0 %v1810
        %2833 = vmatpush1.bf16.msra.mxu0 %v1809
        %2834 = vmatprep.subr.bf16.mxu0 %v1822
        %2835 = vmatpush1.bf16.msra.mxu0 %v1821
        %2836 = vmatprep.subr.bf16.mxu0 %v1834
        %2837 = vmatpush1.bf16.msra.mxu0 %v1833
        %2838 = vmatprep.subr.bf16.mxu0 %v1846
        %2839 = vmatpush1.bf16.msra.mxu0 %v1845
        %2840 = vmatprep.subr.bf16.mxu0 %v1858
        %2841 = vmatpush1.bf16.msra.mxu0 %v1857
        %2842 = vmatprep.subr.bf16.mxu0 %v1870
        %2843 = vmatpush1.bf16.msra.mxu0 %v1869
        %2844 = vmatprep.subr.bf16.mxu0 %v1882
        %2845 = vmatpush1.bf16.msra.mxu0 %v1881
        %2846 = vmatprep.subr.bf16.mxu0 0
        %2847 = vmatpush1.bf16.msra.mxu0 0
        %2848 = vmatprep.subr.bf16.mxu0 0
        %2849 = vmatpush1.bf16.msra.mxu0 0
        %2850 = vmatprep.subr.bf16.mxu0 0
        %2851 = vmatpush1.bf16.msra.mxu0 0
        %2852 = vmatprep.subr.bf16.mxu0 0
        %2853 = vmatpush1.bf16.msra.mxu0 0
        %2854 = vmatprep.subr.bf16.mxu0 0
        %2855 = vmatpush1.bf16.msra.mxu0 0
        %2856 = vmatprep.subr.bf16.mxu0 0
        %2857 = vmatpush1.bf16.msra.mxu0 0
        %2858 = vmatprep.subr.bf16.mxu0 0
        %2859 = vmatpush1.bf16.msra.mxu0 0
        %2860 = vmatprep.subr.bf16.mxu0 0
        %2861 = vmatpush1.bf16.msra.mxu0 0
        %2862 = vmatprep.mubr.bf16.mxu0 0
        %2863 = vmatmul.mubr.bf16.gmra.mrb[0].mxu0 %v711
        %v2864 = vpop.f32.mrb[0].mxu0
        %v2865 = vadd.f32 %v2792, %v2864
        %v2866 = vpop.f32.mrb[0].mxu0
        %v2867 = vadd.f32 %v2794, %v2866
        %v2868 = vpop.f32.mrb[0].mxu0
        %v2869 = vadd.f32 %v2796, %v2868
        %v2870 = vpop.f32.mrb[0].mxu0
        %v2871 = vadd.f32 %v2798, %v2870
        %2872 = vmatprep.mubr.bf16.mxu0 0
        %2873 = vmatmul.mubr.bf16.gmra.mrb[0].mxu0 %v714
        %v2874 = vpop.f32.mrb[0].mxu0
        %v2875 = vadd.f32 %v2802, %v2874
        %v2876 = vpop.f32.mrb[0].mxu0
        %v2877 = vadd.f32 %v2804, %v2876
        %v2878 = vpop.f32.mrb[0].mxu0
        %v2879 = vadd.f32 %v2806, %v2878
        %v2880 = vpop.f32.mrb[0].mxu0
        %v2881 = vadd.f32 %v2808, %v2880
        %2882 = vmatprep.mubr.bf16.mxu0 0
        %2883 = vmatmul.mubr.bf16.gmra.mrb[0].mxu0 %v717
        %v2884 = vpop.f32.mrb[0].mxu0
        %v2885 = vadd.f32 %v2812, %v2884
        %v2886 = vpop.f32.mrb[0].mxu0
        %v2887 = vadd.f32 %v2814, %v2886
        %v2888 = vpop.f32.mrb[0].mxu0
        %v2889 = vadd.f32 %v2816, %v2888
        %v2890 = vpop.f32.mrb[0].mxu0
        %v2891 = vadd.f32 %v2818, %v2890
        %2892 = vmatprep.mubr.bf16.mxu0 0
        %2893 = vmatmul.mubr.bf16.gmra.mrb[0].mxu0 %v720
        %v2894 = vpop.f32.mrb[0].mxu0
        %v2895 = vadd.f32 %v2822, %v2894
        %v2896 = vpop.f32.mrb[0].mxu0
        %v2897 = vadd.f32 %v2824, %v2896
        %v2898 = vpop.f32.mrb[0].mxu0
        %v2899 = vadd.f32 %v2826, %v2898
        %v2900 = vpop.f32.mrb[0].mxu0
        %v2901 = vadd.f32 %v2828, %v2900
        %2902 = vdwg.mxu0
        %2903 = vmatprep.subr.bf16.mxu0 %v1608
        %2904 = vmatpush1.bf16.msra.mxu0 %v1607
        %2905 = vmatprep.subr.bf16.mxu0 %v1620
        %2906 = vmatpush1.bf16.msra.mxu0 %v1619
        %2907 = vmatprep.subr.bf16.mxu0 %v1632
        %2908 = vmatpush1.bf16.msra.mxu0 %v1631
        %2909 = vmatprep.subr.bf16.mxu0 %v1644
        %2910 = vmatpush1.bf16.msra.mxu0 %v1643
        %2911 = vmatprep.subr.bf16.mxu0 %v1656
        %2912 = vmatpush1.bf16.msra.mxu0 %v1655
        %2913 = vmatprep.subr.bf16.mxu0 %v1668
        %2914 = vmatpush1.bf16.msra.mxu0 %v1667
        %2915 = vmatprep.subr.bf16.mxu0 %v1680
        %2916 = vmatpush1.bf16.msra.mxu0 %v1679
        %2917 = vmatprep.subr.bf16.mxu0 %v1692
        %2918 = vmatpush1.bf16.msra.mxu0 %v1691
        %2919 = vmatprep.subr.bf16.mxu0 %v1704
        %2920 = vmatpush1.bf16.msra.mxu0 %v1703
        %2921 = vmatprep.subr.bf16.mxu0 %v1716
        %2922 = vmatpush1.bf16.msra.mxu0 %v1715
        %2923 = vmatprep.subr.bf16.mxu0 %v1728
        %2924 = vmatpush1.bf16.msra.mxu0 %v1727
        %2925 = vmatprep.subr.bf16.mxu0 %v1740
        %2926 = vmatpush1.bf16.msra.mxu0 %v1739
        %2927 = vmatprep.subr.bf16.mxu0 %v1752
        %2928 = vmatpush1.bf16.msra.mxu0 %v1751
        %2929 = vmatprep.subr.bf16.mxu0 %v1764
        %2930 = vmatpush1.bf16.msra.mxu0 %v1763
        %2931 = vmatprep.subr.bf16.mxu0 %v1776
        %2932 = vmatpush1.bf16.msra.mxu0 %v1775
        %2933 = vmatprep.subr.bf16.mxu0 %v1788
        %2934 = vmatpush1.bf16.msra.mxu0 %v1787
        %2935 = vmatprep.mubr.bf16.mxu0 %v710
        %2936 = vmatmul.mubr.bf16.gmra.mrb[0].mxu0 %v709
        %v2937 = vpop.f32.mrb[0].mxu0
        %v2938 = vadd.f32 %v652, %v2937
        %v2939 = vpop.f32.mrb[0].mxu0
        %v2940 = vadd.f32 %v656, %v2939
        %v2941 = vpop.f32.mrb[0].mxu0
        %v2942 = vadd.f32 %v652, %v2941
        %v2943 = vpop.f32.mrb[0].mxu0
        %v2944 = vadd.f32 %v656, %v2943
        %2945 = vmatprep.mubr.bf16.mxu0 %v713
        %2946 = vmatmul.mubr.bf16.gmra.mrb[0].mxu0 %v712
        %v2947 = vpop.f32.mrb[0].mxu0
        %v2948 = vadd.f32 %v652, %v2947
        %v2949 = vpop.f32.mrb[0].mxu0
        %v2950 = vadd.f32 %v656, %v2949
        %v2951 = vpop.f32.mrb[0].mxu0
        %v2952 = vadd.f32 %v652, %v2951
        %v2953 = vpop.f32.mrb[0].mxu0
        %v2954 = vadd.f32 %v656, %v2953
        %2955 = vmatprep.mubr.bf16.mxu0 %v716
        %2956 = vmatmul.mubr.bf16.gmra.mrb[0].mxu0 %v715
        %v2957 = vpop.f32.mrb[0].mxu0
        %v2958 = vadd.f32 %v652, %v2957
        %v2959 = vpop.f32.mrb[0].mxu0
        %v2960 = vadd.f32 %v656, %v2959
        %v2961 = vpop.f32.mrb[0].mxu0
        %v2962 = vadd.f32 %v652, %v2961
        %v2963 = vpop.f32.mrb[0].mxu0
        %v2964 = vadd.f32 %v656, %v2963
        %2965 = vmatprep.mubr.bf16.mxu0 %v719
        %2966 = vmatmul.mubr.bf16.gmra.mrb[0].mxu0 %v718
        %v2967 = vpop.f32.mrb[0].mxu0
        %v2968 = vadd.f32 %v652, %v2967
        %v2969 = vpop.f32.mrb[0].mxu0
        %v2970 = vadd.f32 %v656, %v2969
        %v2971 = vpop.f32.mrb[0].mxu0
        %v2972 = vadd.f32 %v652, %v2971
        %v2973 = vpop.f32.mrb[0].mxu0
        %v2974 = vadd.f32 %v656, %v2973
        %2975 = vdwg.mxu0
        %2976 = vmatprep.subr.bf16.mxu0 %v1800
        %2977 = vmatpush1.bf16.msra.mxu0 %v1799
        %2978 = vmatprep.subr.bf16.mxu0 %v1812
        %2979 = vmatpush1.bf16.msra.mxu0 %v1811
        %2980 = vmatprep.subr.bf16.mxu0 %v1824
        %2981 = vmatpush1.bf16.msra.mxu0 %v1823
        %2982 = vmatprep.subr.bf16.mxu0 %v1836
        %2983 = vmatpush1.bf16.msra.mxu0 %v1835
        %2984 = vmatprep.subr.bf16.mxu0 %v1848
        %2985 = vmatpush1.bf16.msra.mxu0 %v1847
        %2986 = vmatprep.subr.bf16.mxu0 %v1860
        %2987 = vmatpush1.bf16.msra.mxu0 %v1859
        %2988 = vmatprep.subr.bf16.mxu0 %v1872
        %2989 = vmatpush1.bf16.msra.mxu0 %v1871
        %2990 = vmatprep.subr.bf16.mxu0 %v1884
        %2991 = vmatpush1.bf16.msra.mxu0 %v1883
        %2992 = vmatprep.subr.bf16.mxu0 0
        %2993 = vmatpush1.bf16.msra.mxu0 0
        %2994 = vmatprep.subr.bf16.mxu0 0
        %2995 = vmatpush1.bf16.msra.mxu0 0
        %2996 = vmatprep.subr.bf16.mxu0 0
        %2997 = vmatpush1.bf16.msra.mxu0 0
        %2998 = vmatprep.subr.bf16.mxu0 0
        %2999 = vmatpush1.bf16.msra.mxu0 0
        %3000 = vmatprep.subr.bf16.mxu0 0
        %3001 = vmatpush1.bf16.msra.mxu0 0
        %3002 = vmatprep.subr.bf16.mxu0 0
        %3003 = vmatpush1.bf16.msra.mxu0 0
        %3004 = vmatprep.subr.bf16.mxu0 0
        %3005 = vmatpush1.bf16.msra.mxu0 0
        %3006 = vmatprep.subr.bf16.mxu0 0
        %3007 = vmatpush1.bf16.msra.mxu0 0
        %3008 = vmatprep.mubr.bf16.mxu0 0
        %3009 = vmatmul.mubr.bf16.gmra.mrb[0].mxu0 %v711
        %v3010 = vpop.f32.mrb[0].mxu0
        %v3011 = vadd.f32 %v2938, %v3010
        %v3012 = vpop.f32.mrb[0].mxu0
        %v3013 = vadd.f32 %v2940, %v3012
        %v3014 = vpop.f32.mrb[0].mxu0
        %v3015 = vadd.f32 %v2942, %v3014
        %v3016 = vpop.f32.mrb[0].mxu0
        %v3017 = vadd.f32 %v2944, %v3016
        %3018 = vmatprep.mubr.bf16.mxu0 0
        %3019 = vmatmul.mubr.bf16.gmra.mrb[0].mxu0 %v714
        %v3020 = vpop.f32.mrb[0].mxu0
        %v3021 = vadd.f32 %v2948, %v3020
        %v3022 = vpop.f32.mrb[0].mxu0
        %v3023 = vadd.f32 %v2950, %v3022
        %v3024 = vpop.f32.mrb[0].mxu0
        %v3025 = vadd.f32 %v2952, %v3024
        %v3026 = vpop.f32.mrb[0].mxu0
        %v3027 = vadd.f32 %v2954, %v3026
        %3028 = vmatprep.mubr.bf16.mxu0 0
        %3029 = vmatmul.mubr.bf16.gmra.mrb[0].mxu0 %v717
        %v3030 = vpop.f32.mrb[0].mxu0
        %v3031 = vadd.f32 %v2958, %v3030
        %v3032 = vpop.f32.mrb[0].mxu0
        %v3033 = vadd.f32 %v2960, %v3032
        %v3034 = vpop.f32.mrb[0].mxu0
        %v3035 = vadd.f32 %v2962, %v3034
        %v3036 = vpop.f32.mrb[0].mxu0
        %v3037 = vadd.f32 %v2964, %v3036
        %3038 = vmatprep.mubr.bf16.mxu0 0
        %3039 = vmatmul.mubr.bf16.gmra.mrb[0].mxu0 %v720
        %v3040 = vpop.f32.mrb[0].mxu0
        %v3041 = vadd.f32 %v2968, %v3040
        %v3042 = vpop.f32.mrb[0].mxu0
        %v3043 = vadd.f32 %v2970, %v3042
        %v3044 = vpop.f32.mrb[0].mxu0
        %v3045 = vadd.f32 %v2972, %v3044
        %v3046 = vpop.f32.mrb[0].mxu0
        %v3047 = vadd.f32 %v2974, %v3046
        %3048 = vdwg.mxu0
        %v3049 = vmul.f32 %v2281, 0.5
        %v3050 = vmul.f32 %v2283, 0.5
        %v3051 = vmul.f32 %v2427, 0.5
        %v3052 = vmul.f32 %v2429, 0.5
        %v3053 = vmul.f32 %v2573, 0.5
        %v3054 = vmul.f32 %v2575, 0.5
        %v3055 = vmul.f32 %v2719, 0.5
        %v3056 = vmul.f32 %v2721, 0.5
        %v3057 = vmul.f32 %v2865, 0.5
        %v3058 = vmul.f32 %v2867, 0.5
        %v3059 = vmul.f32 %v3011, 0.5
        %v3060 = vmul.f32 %v3013, 0.5
        %v3061 = vmul.f32 %v2285, 0.5
        %v3062 = vmul.f32 %v2287, 0.5
        %v3063 = vmul.f32 %v2431, 0.5
        %v3064 = vmul.f32 %v2433, 0.5
        %v3065 = vmul.f32 %v2577, 0.5
        %v3066 = vmul.f32 %v2579, 0.5
        %v3067 = vmul.f32 %v2723, 0.5
        %v3068 = vmul.f32 %v2725, 0.5
        %v3069 = vmul.f32 %v2869, 0.5
        %v3070 = vmul.f32 %v2871, 0.5
        %v3071 = vmul.f32 %v3015, 0.5
        %v3072 = vmul.f32 %v3017, 0.5
        %v3073 = vmul.f32 %v2291, 0.5
        %v3074 = vmul.f32 %v2293, 0.5
        %v3075 = vmul.f32 %v2437, 0.5
        %v3076 = vmul.f32 %v2439, 0.5
        %v3077 = vmul.f32 %v2583, 0.5
        %v3078 = vmul.f32 %v2585, 0.5
        %v3079 = vmul.f32 %v2729, 0.5
        %v3080 = vmul.f32 %v2731, 0.5
        %v3081 = vmul.f32 %v2875, 0.5
        %v3082 = vmul.f32 %v2877, 0.5
        %v3083 = vmul.f32 %v3021, 0.5
        %v3084 = vmul.f32 %v3023, 0.5
        %v3085 = vmul.f32 %v2295, 0.5
        %v3086 = vmul.f32 %v2297, 0.5
        %v3087 = vmul.f32 %v2441, 0.5
        %v3088 = vmul.f32 %v2443, 0.5
        %v3089 = vmul.f32 %v2587, 0.5
        %v3090 = vmul.f32 %v2589, 0.5
        %v3091 = vmul.f32 %v2733, 0.5
        %v3092 = vmul.f32 %v2735, 0.5
        %v3093 = vmul.f32 %v2879, 0.5
        %v3094 = vmul.f32 %v2881, 0.5
        %v3095 = vmul.f32 %v3025, 0.5
        %v3096 = vmul.f32 %v3027, 0.5
        %v3097 = vmul.f32 %v2301, 0.5
        %v3098 = vmul.f32 %v2303, 0.5
        %v3099 = vmul.f32 %v2447, 0.5
        %v3100 = vmul.f32 %v2449, 0.5
        %v3101 = vmul.f32 %v2593, 0.5
        %v3102 = vmul.f32 %v2595, 0.5
        %v3103 = vmul.f32 %v2739, 0.5
        %v3104 = vmul.f32 %v2741, 0.5
        %v3105 = vmul.f32 %v2885, 0.5
        %v3106 = vmul.f32 %v2887, 0.5
        %v3107 = vmul.f32 %v3031, 0.5
        %v3108 = vmul.f32 %v3033, 0.5
        %v3109 = vmul.f32 %v2305, 0.5
        %v3110 = vmul.f32 %v2307, 0.5
        %v3111 = vmul.f32 %v2451, 0.5
        %v3112 = vmul.f32 %v2453, 0.5
        %v3113 = vmul.f32 %v2597, 0.5
        %v3114 = vmul.f32 %v2599, 0.5
        %v3115 = vmul.f32 %v2743, 0.5
        %v3116 = vmul.f32 %v2745, 0.5
        %v3117 = vmul.f32 %v2889, 0.5
        %v3118 = vmul.f32 %v2891, 0.5
        %v3119 = vmul.f32 %v3035, 0.5
        %v3120 = vmul.f32 %v3037, 0.5
        %v3121 = vmul.f32 %v2311, 0.5
        %v3122 = vmul.f32 %v2313, 0.5
        %v3123 = vmul.f32 %v2457, 0.5
        %v3124 = vmul.f32 %v2459, 0.5
        %v3125 = vmul.f32 %v2603, 0.5
        %v3126 = vmul.f32 %v2605, 0.5
        %v3127 = vmul.f32 %v2749, 0.5
        %v3128 = vmul.f32 %v2751, 0.5
        %v3129 = vmul.f32 %v2895, 0.5
        %v3130 = vmul.f32 %v2897, 0.5
        %v3131 = vmul.f32 %v3041, 0.5
        %v3132 = vmul.f32 %v3043, 0.5
        %v3133 = vmul.f32 %v2315, 0.5
        %v3134 = vmul.f32 %v2317, 0.5
        %v3135 = vmul.f32 %v2461, 0.5
        %v3136 = vmul.f32 %v2463, 0.5
        %v3137 = vmul.f32 %v2607, 0.5
        %v3138 = vmul.f32 %v2609, 0.5
        %v3139 = vmul.f32 %v2753, 0.5
        %v3140 = vmul.f32 %v2755, 0.5
        %v3141 = vmul.f32 %v2899, 0.5
        %v3142 = vmul.f32 %v2901, 0.5
        %v3143 = vmul.f32 %v3045, 0.5
        %v3144 = vmul.f32 %v3047, 0.5
        %v3145 = vmul.f32 %v2281, 0.70710677
        %v3146 = vmul.f32 %v2283, 0.70710677
        %v3147 = vmul.f32 %v2427, 0.70710677
        %v3148 = vmul.f32 %v2429, 0.70710677
        %v3149 = vmul.f32 %v2573, 0.70710677
        %v3150 = vmul.f32 %v2575, 0.70710677
        %v3151 = vmul.f32 %v2719, 0.70710677
        %v3152 = vmul.f32 %v2721, 0.70710677
        %v3153 = vmul.f32 %v2865, 0.70710677
        %v3154 = vmul.f32 %v2867, 0.70710677
        %v3155 = vmul.f32 %v3011, 0.70710677
        %v3156 = vmul.f32 %v3013, 0.70710677
        %v3157 = vmul.f32 %v2285, 0.70710677
        %v3158 = vmul.f32 %v2287, 0.70710677
        %v3159 = vmul.f32 %v2431, 0.70710677
        %v3160 = vmul.f32 %v2433, 0.70710677
        %v3161 = vmul.f32 %v2577, 0.70710677
        %v3162 = vmul.f32 %v2579, 0.70710677
        %v3163 = vmul.f32 %v2723, 0.70710677
        %v3164 = vmul.f32 %v2725, 0.70710677
        %v3165 = vmul.f32 %v2869, 0.70710677
        %v3166 = vmul.f32 %v2871, 0.70710677
        %v3167 = vmul.f32 %v3015, 0.70710677
        %v3168 = vmul.f32 %v3017, 0.70710677
        %v3169 = vmul.f32 %v2291, 0.70710677
        %v3170 = vmul.f32 %v2293, 0.70710677
        %v3171 = vmul.f32 %v2437, 0.70710677
        %v3172 = vmul.f32 %v2439, 0.70710677
        %v3173 = vmul.f32 %v2583, 0.70710677
        %v3174 = vmul.f32 %v2585, 0.70710677
        %v3175 = vmul.f32 %v2729, 0.70710677
        %v3176 = vmul.f32 %v2731, 0.70710677
        %v3177 = vmul.f32 %v2875, 0.70710677
        %v3178 = vmul.f32 %v2877, 0.70710677
        %v3179 = vmul.f32 %v3021, 0.70710677
        %v3180 = vmul.f32 %v3023, 0.70710677
        %v3181 = vmul.f32 %v2295, 0.70710677
        %v3182 = vmul.f32 %v2297, 0.70710677
        %v3183 = vmul.f32 %v2441, 0.70710677
        %v3184 = vmul.f32 %v2443, 0.70710677
        %v3185 = vmul.f32 %v2587, 0.70710677
        %v3186 = vmul.f32 %v2589, 0.70710677
        %v3187 = vmul.f32 %v2733, 0.70710677
        %v3188 = vmul.f32 %v2735, 0.70710677
        %v3189 = vmul.f32 %v2879, 0.70710677
        %v3190 = vmul.f32 %v2881, 0.70710677
        %v3191 = vmul.f32 %v3025, 0.70710677
        %v3192 = vmul.f32 %v3027, 0.70710677
        %v3193 = vmul.f32 %v2301, 0.70710677
        %v3194 = vmul.f32 %v2303, 0.70710677
        %v3195 = vmul.f32 %v2447, 0.70710677
        %v3196 = vmul.f32 %v2449, 0.70710677
        %v3197 = vmul.f32 %v2593, 0.70710677
        %v3198 = vmul.f32 %v2595, 0.70710677
        %v3199 = vmul.f32 %v2739, 0.70710677
        %v3200 = vmul.f32 %v2741, 0.70710677
        %v3201 = vmul.f32 %v2885, 0.70710677
        %v3202 = vmul.f32 %v2887, 0.70710677
        %v3203 = vmul.f32 %v3031, 0.70710677
        %v3204 = vmul.f32 %v3033, 0.70710677
        %v3205 = vmul.f32 %v2305, 0.70710677
        %v3206 = vmul.f32 %v2307, 0.70710677
        %v3207 = vmul.f32 %v2451, 0.70710677
        %v3208 = vmul.f32 %v2453, 0.70710677
        %v3209 = vmul.f32 %v2597, 0.70710677
        %v3210 = vmul.f32 %v2599, 0.70710677
        %v3211 = vmul.f32 %v2743, 0.70710677
        %v3212 = vmul.f32 %v2745, 0.70710677
        %v3213 = vmul.f32 %v2889, 0.70710677
        %v3214 = vmul.f32 %v2891, 0.70710677
        %v3215 = vmul.f32 %v3035, 0.70710677
        %v3216 = vmul.f32 %v3037, 0.70710677
        %v3217 = vmul.f32 %v2311, 0.70710677
        %v3218 = vmul.f32 %v2313, 0.70710677
        %v3219 = vmul.f32 %v2457, 0.70710677
        %v3220 = vmul.f32 %v2459, 0.70710677
        %v3221 = vmul.f32 %v2603, 0.70710677
        %v3222 = vmul.f32 %v2605, 0.70710677
        %v3223 = vmul.f32 %v2749, 0.70710677
        %v3224 = vmul.f32 %v2751, 0.70710677
        %v3225 = vmul.f32 %v2895, 0.70710677
        %v3226 = vmul.f32 %v2897, 0.70710677
        %v3227 = vmul.f32 %v3041, 0.70710677
        %v3228 = vmul.f32 %v3043, 0.70710677
        %v3229 = vmul.f32 %v2315, 0.70710677
        %v3230 = vmul.f32 %v2317, 0.70710677
        %v3231 = vmul.f32 %v2461, 0.70710677
        %v3232 = vmul.f32 %v2463, 0.70710677
        %v3233 = vmul.f32 %v2607, 0.70710677
        %v3234 = vmul.f32 %v2609, 0.70710677
        %v3235 = vmul.f32 %v2753, 0.70710677
        %v3236 = vmul.f32 %v2755, 0.70710677
        %v3237 = vmul.f32 %v2899, 0.70710677
        %v3238 = vmul.f32 %v2901, 0.70710677
        %v3239 = vmul.f32 %v3045, 0.70710677
        %v3240 = vmul.f32 %v3047, 0.70710677
        %v3241 = verf.f32.pop %v3145
        %v3242 = verf.f32.pop %v3146
        %v3243 = verf.f32.pop %v3147
        %v3244 = verf.f32.pop %v3148
        %v3245 = verf.f32.pop %v3149
        %v3246 = verf.f32.pop %v3150
        %v3247 = verf.f32.pop %v3151
        %v3248 = verf.f32.pop %v3152
        %v3249 = verf.f32.pop %v3153
        %v3250 = verf.f32.pop %v3154
        %v3251 = verf.f32.pop %v3155
        %v3252 = verf.f32.pop %v3156
        %v3253 = verf.f32.pop %v3157
        %v3254 = verf.f32.pop %v3158
        %v3255 = verf.f32.pop %v3159
        %v3256 = verf.f32.pop %v3160
        %v3257 = verf.f32.pop %v3161
        %v3258 = verf.f32.pop %v3162
        %v3259 = verf.f32.pop %v3163
        %v3260 = verf.f32.pop %v3164
        %v3261 = verf.f32.pop %v3165
        %v3262 = verf.f32.pop %v3166
        %v3263 = verf.f32.pop %v3167
        %v3264 = verf.f32.pop %v3168
        %v3265 = verf.f32.pop %v3169
        %v3266 = verf.f32.pop %v3170
        %v3267 = verf.f32.pop %v3171
        %v3268 = verf.f32.pop %v3172
        %v3269 = verf.f32.pop %v3173
        %v3270 = verf.f32.pop %v3174
        %v3271 = verf.f32.pop %v3175
        %v3272 = verf.f32.pop %v3176
        %v3273 = verf.f32.pop %v3177
        %v3274 = verf.f32.pop %v3178
        %v3275 = verf.f32.pop %v3179
        %v3276 = verf.f32.pop %v3180
        %v3277 = verf.f32.pop %v3181
        %v3278 = verf.f32.pop %v3182
        %v3279 = verf.f32.pop %v3183
        %v3280 = verf.f32.pop %v3184
        %v3281 = verf.f32.pop %v3185
        %v3282 = verf.f32.pop %v3186
        %v3283 = verf.f32.pop %v3187
        %v3284 = verf.f32.pop %v3188
        %v3285 = verf.f32.pop %v3189
        %v3286 = verf.f32.pop %v3190
        %v3287 = verf.f32.pop %v3191
        %v3288 = verf.f32.pop %v3192
        %v3289 = verf.f32.pop %v3193
        %v3290 = verf.f32.pop %v3194
        %v3291 = verf.f32.pop %v3195
        %v3292 = verf.f32.pop %v3196
        %v3293 = verf.f32.pop %v3197
        %v3294 = verf.f32.pop %v3198
        %v3295 = verf.f32.pop %v3199
        %v3296 = verf.f32.pop %v3200
        %v3297 = verf.f32.pop %v3201
        %v3298 = verf.f32.pop %v3202
        %v3299 = verf.f32.pop %v3203
        %v3300 = verf.f32.pop %v3204
        %v3301 = verf.f32.pop %v3205
        %v3302 = verf.f32.pop %v3206
        %v3303 = verf.f32.pop %v3207
        %v3304 = verf.f32.pop %v3208
        %v3305 = verf.f32.pop %v3209
        %v3306 = verf.f32.pop %v3210
        %v3307 = verf.f32.pop %v3211
        %v3308 = verf.f32.pop %v3212
        %v3309 = verf.f32.pop %v3213
        %v3310 = verf.f32.pop %v3214
        %v3311 = verf.f32.pop %v3215
        %v3312 = verf.f32.pop %v3216
        %v3313 = verf.f32.pop %v3217
        %v3314 = verf.f32.pop %v3218
        %v3315 = verf.f32.pop %v3219
        %v3316 = verf.f32.pop %v3220
        %v3317 = verf.f32.pop %v3221
        %v3318 = verf.f32.pop %v3222
        %v3319 = verf.f32.pop %v3223
        %v3320 = verf.f32.pop %v3224
        %v3321 = verf.f32.pop %v3225
        %v3322 = verf.f32.pop %v3226
        %v3323 = verf.f32.pop %v3227
        %v3324 = verf.f32.pop %v3228
        %v3325 = verf.f32.pop %v3229
        %v3326 = verf.f32.pop %v3230
        %v3327 = verf.f32.pop %v3231
        %v3328 = verf.f32.pop %v3232
        %v3329 = verf.f32.pop %v3233
        %v3330 = verf.f32.pop %v3234
        %v3331 = verf.f32.pop %v3235
        %v3332 = verf.f32.pop %v3236
        %v3333 = verf.f32.pop %v3237
        %v3334 = verf.f32.pop %v3238
        %v3335 = verf.f32.pop %v3239
        %v3336 = verf.f32.pop %v3240
        %v3337 = vadd.f32 %v3241, 1.0
        %v3338 = vadd.f32 %v3242, 1.0
        %v3339 = vadd.f32 %v3243, 1.0
        %v3340 = vadd.f32 %v3244, 1.0
        %v3341 = vadd.f32 %v3245, 1.0
        %v3342 = vadd.f32 %v3246, 1.0
        %v3343 = vadd.f32 %v3247, 1.0
        %v3344 = vadd.f32 %v3248, 1.0
        %v3345 = vadd.f32 %v3249, 1.0
        %v3346 = vadd.f32 %v3250, 1.0
        %v3347 = vadd.f32 %v3251, 1.0
        %v3348 = vadd.f32 %v3252, 1.0
        %v3349 = vadd.f32 %v3253, 1.0
        %v3350 = vadd.f32 %v3254, 1.0
        %v3351 = vadd.f32 %v3255, 1.0
        %v3352 = vadd.f32 %v3256, 1.0
        %v3353 = vadd.f32 %v3257, 1.0
        %v3354 = vadd.f32 %v3258, 1.0
        %v3355 = vadd.f32 %v3259, 1.0
        %v3356 = vadd.f32 %v3260, 1.0
        %v3357 = vadd.f32 %v3261, 1.0
        %v3358 = vadd.f32 %v3262, 1.0
        %v3359 = vadd.f32 %v3263, 1.0
        %v3360 = vadd.f32 %v3264, 1.0
        %v3361 = vadd.f32 %v3265, 1.0
        %v3362 = vadd.f32 %v3266, 1.0
        %v3363 = vadd.f32 %v3267, 1.0
        %v3364 = vadd.f32 %v3268, 1.0
        %v3365 = vadd.f32 %v3269, 1.0
        %v3366 = vadd.f32 %v3270, 1.0
        %v3367 = vadd.f32 %v3271, 1.0
        %v3368 = vadd.f32 %v3272, 1.0
        %v3369 = vadd.f32 %v3273, 1.0
        %v3370 = vadd.f32 %v3274, 1.0
        %v3371 = vadd.f32 %v3275, 1.0
        %v3372 = vadd.f32 %v3276, 1.0
        %v3373 = vadd.f32 %v3277, 1.0
        %v3374 = vadd.f32 %v3278, 1.0
        %v3375 = vadd.f32 %v3279, 1.0
        %v3376 = vadd.f32 %v3280, 1.0
        %v3377 = vadd.f32 %v3281, 1.0
        %v3378 = vadd.f32 %v3282, 1.0
        %v3379 = vadd.f32 %v3283, 1.0
        %v3380 = vadd.f32 %v3284, 1.0
        %v3381 = vadd.f32 %v3285, 1.0
        %v3382 = vadd.f32 %v3286, 1.0
        %v3383 = vadd.f32 %v3287, 1.0
        %v3384 = vadd.f32 %v3288, 1.0
        %v3385 = vadd.f32 %v3289, 1.0
        %v3386 = vadd.f32 %v3290, 1.0
        %v3387 = vadd.f32 %v3291, 1.0
        %v3388 = vadd.f32 %v3292, 1.0
        %v3389 = vadd.f32 %v3293, 1.0
        %v3390 = vadd.f32 %v3294, 1.0
        %v3391 = vadd.f32 %v3295, 1.0
        %v3392 = vadd.f32 %v3296, 1.0
        %v3393 = vadd.f32 %v3297, 1.0
        %v3394 = vadd.f32 %v3298, 1.0
        %v3395 = vadd.f32 %v3299, 1.0
        %v3396 = vadd.f32 %v3300, 1.0
        %v3397 = vadd.f32 %v3301, 1.0
        %v3398 = vadd.f32 %v3302, 1.0
        %v3399 = vadd.f32 %v3303, 1.0
        %v3400 = vadd.f32 %v3304, 1.0
        %v3401 = vadd.f32 %v3305, 1.0
        %v3402 = vadd.f32 %v3306, 1.0
        %v3403 = vadd.f32 %v3307, 1.0
        %v3404 = vadd.f32 %v3308, 1.0
        %v3405 = vadd.f32 %v3309, 1.0
        %v3406 = vadd.f32 %v3310, 1.0
        %v3407 = vadd.f32 %v3311, 1.0
        %v3408 = vadd.f32 %v3312, 1.0
        %v3409 = vadd.f32 %v3313, 1.0
        %v3410 = vadd.f32 %v3314, 1.0
        %v3411 = vadd.f32 %v3315, 1.0
        %v3412 = vadd.f32 %v3316, 1.0
        %v3413 = vadd.f32 %v3317, 1.0
        %v3414 = vadd.f32 %v3318, 1.0
        %v3415 = vadd.f32 %v3319, 1.0
        %v3416 = vadd.f32 %v3320, 1.0
        %v3417 = vadd.f32 %v3321, 1.0
        %v3418 = vadd.f32 %v3322, 1.0
        %v3419 = vadd.f32 %v3323, 1.0
        %v3420 = vadd.f32 %v3324, 1.0
        %v3421 = vadd.f32 %v3325, 1.0
        %v3422 = vadd.f32 %v3326, 1.0
        %v3423 = vadd.f32 %v3327, 1.0
        %v3424 = vadd.f32 %v3328, 1.0
        %v3425 = vadd.f32 %v3329, 1.0
        %v3426 = vadd.f32 %v3330, 1.0
        %v3427 = vadd.f32 %v3331, 1.0
        %v3428 = vadd.f32 %v3332, 1.0
        %v3429 = vadd.f32 %v3333, 1.0
        %v3430 = vadd.f32 %v3334, 1.0
        %v3431 = vadd.f32 %v3335, 1.0
        %v3432 = vadd.f32 %v3336, 1.0
        %v3433 = vmul.f32 %v3049, %v3337
        %v3434 = vmul.f32 %v3050, %v3338
        %v3435 = vmul.f32 %v3051, %v3339
        %v3436 = vmul.f32 %v3052, %v3340
        %v3437 = vmul.f32 %v3053, %v3341
        %v3438 = vmul.f32 %v3054, %v3342
        %v3439 = vmul.f32 %v3055, %v3343
        %v3440 = vmul.f32 %v3056, %v3344
        %v3441 = vmul.f32 %v3057, %v3345
        %v3442 = vmul.f32 %v3058, %v3346
        %v3443 = vmul.f32 %v3059, %v3347
        %v3444 = vmul.f32 %v3060, %v3348
        %v3445 = vmul.f32 %v3061, %v3349
        %v3446 = vmul.f32 %v3062, %v3350
        %v3447 = vmul.f32 %v3063, %v3351
        %v3448 = vmul.f32 %v3064, %v3352
        %v3449 = vmul.f32 %v3065, %v3353
        %v3450 = vmul.f32 %v3066, %v3354
        %v3451 = vmul.f32 %v3067, %v3355
        %v3452 = vmul.f32 %v3068, %v3356
        %v3453 = vmul.f32 %v3069, %v3357
        %v3454 = vmul.f32 %v3070, %v3358
        %v3455 = vmul.f32 %v3071, %v3359
        %v3456 = vmul.f32 %v3072, %v3360
        %v3457 = vmul.f32 %v3073, %v3361
        %v3458 = vmul.f32 %v3074, %v3362
        %v3459 = vmul.f32 %v3075, %v3363
        %v3460 = vmul.f32 %v3076, %v3364
        %v3461 = vmul.f32 %v3077, %v3365
        %v3462 = vmul.f32 %v3078, %v3366
        %v3463 = vmul.f32 %v3079, %v3367
        %v3464 = vmul.f32 %v3080, %v3368
        %v3465 = vmul.f32 %v3081, %v3369
        %v3466 = vmul.f32 %v3082, %v3370
        %v3467 = vmul.f32 %v3083, %v3371
        %v3468 = vmul.f32 %v3084, %v3372
        %v3469 = vmul.f32 %v3085, %v3373
        %v3470 = vmul.f32 %v3086, %v3374
        %v3471 = vmul.f32 %v3087, %v3375
        %v3472 = vmul.f32 %v3088, %v3376
        %v3473 = vmul.f32 %v3089, %v3377
        %v3474 = vmul.f32 %v3090, %v3378
        %v3475 = vmul.f32 %v3091, %v3379
        %v3476 = vmul.f32 %v3092, %v3380
        %v3477 = vmul.f32 %v3093, %v3381
        %v3478 = vmul.f32 %v3094, %v3382
        %v3479 = vmul.f32 %v3095, %v3383
        %v3480 = vmul.f32 %v3096, %v3384
        %v3481 = vmul.f32 %v3097, %v3385
        %v3482 = vmul.f32 %v3098, %v3386
        %v3483 = vmul.f32 %v3099, %v3387
        %v3484 = vmul.f32 %v3100, %v3388
        %v3485 = vmul.f32 %v3101, %v3389
        %v3486 = vmul.f32 %v3102, %v3390
        %v3487 = vmul.f32 %v3103, %v3391
        %v3488 = vmul.f32 %v3104, %v3392
        %v3489 = vmul.f32 %v3105, %v3393
        %v3490 = vmul.f32 %v3106, %v3394
        %v3491 = vmul.f32 %v3107, %v3395
        %v3492 = vmul.f32 %v3108, %v3396
        %v3493 = vmul.f32 %v3109, %v3397
        %v3494 = vmul.f32 %v3110, %v3398
        %v3495 = vmul.f32 %v3111, %v3399
        %v3496 = vmul.f32 %v3112, %v3400
        %v3497 = vmul.f32 %v3113, %v3401
        %v3498 = vmul.f32 %v3114, %v3402
        %v3499 = vmul.f32 %v3115, %v3403
        %v3500 = vmul.f32 %v3116, %v3404
        %v3501 = vmul.f32 %v3117, %v3405
        %v3502 = vmul.f32 %v3118, %v3406
        %v3503 = vmul.f32 %v3119, %v3407
        %v3504 = vmul.f32 %v3120, %v3408
        %v3505 = vmul.f32 %v3121, %v3409
        %v3506 = vmul.f32 %v3122, %v3410
        %v3507 = vmul.f32 %v3123, %v3411
        %v3508 = vmul.f32 %v3124, %v3412
        %v3509 = vmul.f32 %v3125, %v3413
        %v3510 = vmul.f32 %v3126, %v3414
        %v3511 = vmul.f32 %v3127, %v3415
        %v3512 = vmul.f32 %v3128, %v3416
        %v3513 = vmul.f32 %v3129, %v3417
        %v3514 = vmul.f32 %v3130, %v3418
        %v3515 = vmul.f32 %v3131, %v3419
        %v3516 = vmul.f32 %v3132, %v3420
        %v3517 = vmul.f32 %v3133, %v3421
        %v3518 = vmul.f32 %v3134, %v3422
        %v3519 = vmul.f32 %v3135, %v3423
        %v3520 = vmul.f32 %v3136, %v3424
        %v3521 = vmul.f32 %v3137, %v3425
        %v3522 = vmul.f32 %v3138, %v3426
        %v3523 = vmul.f32 %v3139, %v3427
        %v3524 = vmul.f32 %v3140, %v3428
        %v3525 = vmul.f32 %v3141, %v3429
        %v3526 = vmul.f32 %v3142, %v3430
        %v3527 = vmul.f32 %v3143, %v3431
        %v3528 = vmul.f32 %v3144, %v3432
        %v3529 = vpack.c.bf16 %v3445, %v3433
        %v3530 = vpack.c.bf16 %v3446, %v3434
        %v3531 = vpack.c.bf16 %v3447, %v3435
        %v3532 = vpack.c.bf16 %v3448, %v3436
        %v3533 = vpack.c.bf16 %v3449, %v3437
        %v3534 = vpack.c.bf16 %v3450, %v3438
        %v3535 = vpack.c.bf16 %v3451, %v3439
        %v3536 = vpack.c.bf16 %v3452, %v3440
        %v3537 = vpack.c.bf16 %v3453, %v3441
        %v3538 = vpack.c.bf16 %v3454, %v3442
        %v3539 = vpack.c.bf16 %v3455, %v3443
        %v3540 = vpack.c.bf16 %v3456, %v3444
        %v3541 = vpack.c.bf16 %v3469, %v3457
        %v3542 = vpack.c.bf16 %v3470, %v3458
        %v3543 = vpack.c.bf16 %v3471, %v3459
        %v3544 = vpack.c.bf16 %v3472, %v3460
        %v3545 = vpack.c.bf16 %v3473, %v3461
        %v3546 = vpack.c.bf16 %v3474, %v3462
        %v3547 = vpack.c.bf16 %v3475, %v3463
        %v3548 = vpack.c.bf16 %v3476, %v3464
        %v3549 = vpack.c.bf16 %v3477, %v3465
        %v3550 = vpack.c.bf16 %v3478, %v3466
        %v3551 = vpack.c.bf16 %v3479, %v3467
        %v3552 = vpack.c.bf16 %v3480, %v3468
        %v3553 = vpack.c.bf16 %v3493, %v3481
        %v3554 = vpack.c.bf16 %v3494, %v3482
        %v3555 = vpack.c.bf16 %v3495, %v3483
        %v3556 = vpack.c.bf16 %v3496, %v3484
        %v3557 = vpack.c.bf16 %v3497, %v3485
        %v3558 = vpack.c.bf16 %v3498, %v3486
        %v3559 = vpack.c.bf16 %v3499, %v3487
        %v3560 = vpack.c.bf16 %v3500, %v3488
        %v3561 = vpack.c.bf16 %v3501, %v3489
        %v3562 = vpack.c.bf16 %v3502, %v3490
        %v3563 = vpack.c.bf16 %v3503, %v3491
        %v3564 = vpack.c.bf16 %v3504, %v3492
        %v3565 = vpack.c.bf16 %v3517, %v3505
        %v3566 = vpack.c.bf16 %v3518, %v3506
        %v3567 = vpack.c.bf16 %v3519, %v3507
        %v3568 = vpack.c.bf16 %v3520, %v3508
        %v3569 = vpack.c.bf16 %v3521, %v3509
        %v3570 = vpack.c.bf16 %v3522, %v3510
        %v3571 = vpack.c.bf16 %v3523, %v3511
        %v3572 = vpack.c.bf16 %v3524, %v3512
        %v3573 = vpack.c.bf16 %v3525, %v3513
        %v3574 = vpack.c.bf16 %v3526, %v3514
        %v3575 = vpack.c.bf16 %v3527, %v3515
        %v3576 = vpack.c.bf16 %v3528, %v3516
        %v3577 = vld [vmem:[#allocation8] sm:$0xff]
        %v3578 = vld [vmem:[#allocation8 + $0x8] sm:$0xf]
        %v3579 = vld [vmem:[#allocation8 + $0xc] sm:$0xff]
        %v3580 = vld [vmem:[#allocation8 + $0x14] sm:$0xf]
        %v3581 = vld [vmem:[#allocation8 + $0x18] sm:$0xff]
        %v3582 = vld [vmem:[#allocation8 + $0x20] sm:$0xf]
        %v3583 = vld [vmem:[#allocation8 + $0x24] sm:$0xff]
        %v3584 = vld [vmem:[#allocation8 + $0x2c] sm:$0xf]
        %v3585 = vld [vmem:[#allocation8 + $0x30] sm:$0xff]
        %v3586 = vld [vmem:[#allocation8 + $0x38] sm:$0xf]
        %v3587 = vld [vmem:[#allocation8 + $0x3c] sm:$0xff]
        %v3588 = vld [vmem:[#allocation8 + $0x44] sm:$0xf]
        %v3589 = vld [vmem:[#allocation8 + $0x48] sm:$0xff]
        %v3590 = vld [vmem:[#allocation8 + $0x50] sm:$0xf]
        %v3591 = vld [vmem:[#allocation8 + $0x54] sm:$0xff]
        %v3592 = vld [vmem:[#allocation8 + $0x5c] sm:$0xf]
        %v3593 = vld [vmem:[#allocation8 + $0x60] sm:$0xff]
        %v3594 = vld [vmem:[#allocation8 + $0x68] sm:$0xf]
        %v3595 = vld [vmem:[#allocation8 + $0x6c] sm:$0xff]
        %v3596 = vld [vmem:[#allocation8 + $0x74] sm:$0xf]
        %v3597 = vld [vmem:[#allocation8 + $0x78] sm:$0xff]
        %v3598 = vld [vmem:[#allocation8 + $0x80] sm:$0xf]
        %v3599 = vld [vmem:[#allocation8 + $0x84] sm:$0xff]
        %v3600 = vld [vmem:[#allocation8 + $0x8c] sm:$0xf]
        %v3601 = vld [vmem:[#allocation8 + $0x90] sm:$0xff]
        %v3602 = vld [vmem:[#allocation8 + $0x98] sm:$0xf]
        %v3603 = vld [vmem:[#allocation8 + $0x9c] sm:$0xff]
        %v3604 = vld [vmem:[#allocation8 + $0xa4] sm:$0xf]
        %v3605 = vld [vmem:[#allocation8 + $0xa8] sm:$0xff]
        %v3606 = vld [vmem:[#allocation8 + $0xb0] sm:$0xf]
        %v3607 = vld [vmem:[#allocation8 + $0xb4] sm:$0xff]
        %v3608 = vld [vmem:[#allocation8 + $0xbc] sm:$0xf]
        %v3609 = vld [vmem:[#allocation8 + $0xc0] sm:$0xff]
        %v3610 = vld [vmem:[#allocation8 + $0xc8] sm:$0xf]
        %v3611 = vld [vmem:[#allocation8 + $0xcc] sm:$0xff]
        %v3612 = vld [vmem:[#allocation8 + $0xd4] sm:$0xf]
        %v3613 = vld [vmem:[#allocation8 + $0xd8] sm:$0xff]
        %v3614 = vld [vmem:[#allocation8 + $0xe0] sm:$0xf]
        %v3615 = vld [vmem:[#allocation8 + $0xe4] sm:$0xff]
        %v3616 = vld [vmem:[#allocation8 + $0xec] sm:$0xf]
        %v3617 = vld [vmem:[#allocation8 + $0xf0] sm:$0xff]
        %v3618 = vld [vmem:[#allocation8 + $0xf8] sm:$0xf]
        %v3619 = vld [vmem:[#allocation8 + $0xfc] sm:$0xff]
        %v3620 = vld [vmem:[#allocation8 + $0x104] sm:$0xf]
        %v3621 = vld [vmem:[#allocation8 + $0x108] sm:$0xff]
        %v3622 = vld [vmem:[#allocation8 + $0x110] sm:$0xf]
        %v3623 = vld [vmem:[#allocation8 + $0x114] sm:$0xff]
        %v3624 = vld [vmem:[#allocation8 + $0x11c] sm:$0xf]
        %v3625 = vld [vmem:[#allocation8 + $0x120] sm:$0xff]
        %v3626 = vld [vmem:[#allocation8 + $0x128] sm:$0xf]
        %v3627 = vld [vmem:[#allocation8 + $0x12c] sm:$0xff]
        %v3628 = vld [vmem:[#allocation8 + $0x134] sm:$0xf]
        %v3629 = vld [vmem:[#allocation8 + $0x138] sm:$0xff]
        %v3630 = vld [vmem:[#allocation8 + $0x140] sm:$0xf]
        %v3631 = vld [vmem:[#allocation8 + $0x144] sm:$0xff]
        %v3632 = vld [vmem:[#allocation8 + $0x14c] sm:$0xf]
        %v3633 = vld [vmem:[#allocation8 + $0x150] sm:$0xff]
        %v3634 = vld [vmem:[#allocation8 + $0x158] sm:$0xf]
        %v3635 = vld [vmem:[#allocation8 + $0x15c] sm:$0xff]
        %v3636 = vld [vmem:[#allocation8 + $0x164] sm:$0xf]
        %v3637 = vld [vmem:[#allocation8 + $0x168] sm:$0xff]
        %v3638 = vld [vmem:[#allocation8 + $0x170] sm:$0xf]
        %v3639 = vld [vmem:[#allocation8 + $0x174] sm:$0xff]
        %v3640 = vld [vmem:[#allocation8 + $0x17c] sm:$0xf]
        %v3641 = vld [vmem:[#allocation8 + $0x180] sm:$0xff]
        %v3642 = vld [vmem:[#allocation8 + $0x188] sm:$0xf]
        %v3643 = vld [vmem:[#allocation8 + $0x18c] sm:$0xff]
        %v3644 = vld [vmem:[#allocation8 + $0x194] sm:$0xf]
        %v3645 = vld [vmem:[#allocation8 + $0x198] sm:$0xff]
        %v3646 = vld [vmem:[#allocation8 + $0x1a0] sm:$0xf]
        %v3647 = vld [vmem:[#allocation8 + $0x1a4] sm:$0xff]
        %v3648 = vld [vmem:[#allocation8 + $0x1ac] sm:$0xf]
        %v3649 = vld [vmem:[#allocation8 + $0x1b0] sm:$0xff]
        %v3650 = vld [vmem:[#allocation8 + $0x1b8] sm:$0xf]
        %v3651 = vld [vmem:[#allocation8 + $0x1bc] sm:$0xff]
        %v3652 = vld [vmem:[#allocation8 + $0x1c4] sm:$0xf]
        %v3653 = vld [vmem:[#allocation8 + $0x1c8] sm:$0xff]
        %v3654 = vld [vmem:[#allocation8 + $0x1d0] sm:$0xf]
        %v3655 = vld [vmem:[#allocation8 + $0x1d4] sm:$0xff]
        %v3656 = vld [vmem:[#allocation8 + $0x1dc] sm:$0xf]
        %v3657 = vld [vmem:[#allocation8 + $0x1e0] sm:$0xff]
        %v3658 = vld [vmem:[#allocation8 + $0x1e8] sm:$0xf]
        %v3659 = vld [vmem:[#allocation8 + $0x1ec] sm:$0xff]
        %v3660 = vld [vmem:[#allocation8 + $0x1f4] sm:$0xf]
        %v3661 = vld [vmem:[#allocation8 + $0x1f8] sm:$0xff]
        %v3662 = vld [vmem:[#allocation8 + $0x200] sm:$0xf]
        %v3663 = vld [vmem:[#allocation8 + $0x204] sm:$0xff]
        %v3664 = vld [vmem:[#allocation8 + $0x20c] sm:$0xf]
        %v3665 = vld [vmem:[#allocation8 + $0x210] sm:$0xff]
        %v3666 = vld [vmem:[#allocation8 + $0x218] sm:$0xf]
        %v3667 = vld [vmem:[#allocation8 + $0x21c] sm:$0xff]
        %v3668 = vld [vmem:[#allocation8 + $0x224] sm:$0xf]
        %v3669 = vld [vmem:[#allocation8 + $0x228] sm:$0xff]
        %v3670 = vld [vmem:[#allocation8 + $0x230] sm:$0xf]
        %v3671 = vld [vmem:[#allocation8 + $0x234] sm:$0xff]
        %v3672 = vld [vmem:[#allocation8 + $0x23c] sm:$0xf]
        %v3673 = vld [vmem:[#allocation8 + $0x240] sm:$0xff]
        %v3674 = vld [vmem:[#allocation8 + $0x248] sm:$0xf]
        %v3675 = vld [vmem:[#allocation8 + $0x24c] sm:$0xff]
        %v3676 = vld [vmem:[#allocation8 + $0x254] sm:$0xf]
        %v3677 = vld [vmem:[#allocation8 + $0x258] sm:$0xff]
        %v3678 = vld [vmem:[#allocation8 + $0x260] sm:$0xf]
        %v3679 = vld [vmem:[#allocation8 + $0x264] sm:$0xff]
        %v3680 = vld [vmem:[#allocation8 + $0x26c] sm:$0xf]
        %v3681 = vld [vmem:[#allocation8 + $0x270] sm:$0xff]
        %v3682 = vld [vmem:[#allocation8 + $0x278] sm:$0xf]
        %v3683 = vld [vmem:[#allocation8 + $0x27c] sm:$0xff]
        %v3684 = vld [vmem:[#allocation8 + $0x284] sm:$0xf]
        %v3685 = vld [vmem:[#allocation8 + $0x288] sm:$0xff]
        %v3686 = vld [vmem:[#allocation8 + $0x290] sm:$0xf]
        %v3687 = vld [vmem:[#allocation8 + $0x294] sm:$0xff]
        %v3688 = vld [vmem:[#allocation8 + $0x29c] sm:$0xf]
        %v3689 = vld [vmem:[#allocation8 + $0x2a0] sm:$0xff]
        %v3690 = vld [vmem:[#allocation8 + $0x2a8] sm:$0xf]
        %v3691 = vld [vmem:[#allocation8 + $0x2ac] sm:$0xff]
        %v3692 = vld [vmem:[#allocation8 + $0x2b4] sm:$0xf]
        %v3693 = vld [vmem:[#allocation8 + $0x2b8] sm:$0xff]
        %v3694 = vld [vmem:[#allocation8 + $0x2c0] sm:$0xf]
        %v3695 = vld [vmem:[#allocation8 + $0x2c4] sm:$0xff]
        %v3696 = vld [vmem:[#allocation8 + $0x2cc] sm:$0xf]
        %v3697 = vld [vmem:[#allocation8 + $0x2d0] sm:$0xff]
        %v3698 = vld [vmem:[#allocation8 + $0x2d8] sm:$0xf]
        %v3699 = vld [vmem:[#allocation8 + $0x2dc] sm:$0xff]
        %v3700 = vld [vmem:[#allocation8 + $0x2e4] sm:$0xf]
        %v3701 = vld [vmem:[#allocation8 + $0x2e8] sm:$0xff]
        %v3702 = vld [vmem:[#allocation8 + $0x2f0] sm:$0xf]
        %v3703 = vld [vmem:[#allocation8 + $0x2f4] sm:$0xff]
        %v3704 = vld [vmem:[#allocation8 + $0x2fc] sm:$0xf]
        %v3705 = vld [vmem:[#allocation8 + $0x300] sm:$0xff]
        %v3706 = vld [vmem:[#allocation8 + $0x308] sm:$0xf]
        %v3707 = vld [vmem:[#allocation8 + $0x30c] sm:$0xff]
        %v3708 = vld [vmem:[#allocation8 + $0x314] sm:$0xf]
        %v3709 = vld [vmem:[#allocation8 + $0x318] sm:$0xff]
        %v3710 = vld [vmem:[#allocation8 + $0x320] sm:$0xf]
        %v3711 = vld [vmem:[#allocation8 + $0x324] sm:$0xff]
        %v3712 = vld [vmem:[#allocation8 + $0x32c] sm:$0xf]
        %v3713 = vld [vmem:[#allocation8 + $0x330] sm:$0xff]
        %v3714 = vld [vmem:[#allocation8 + $0x338] sm:$0xf]
        %v3715 = vld [vmem:[#allocation8 + $0x33c] sm:$0xff]
        %v3716 = vld [vmem:[#allocation8 + $0x344] sm:$0xf]
        %v3717 = vld [vmem:[#allocation8 + $0x348] sm:$0xff]
        %v3718 = vld [vmem:[#allocation8 + $0x350] sm:$0xf]
        %v3719 = vld [vmem:[#allocation8 + $0x354] sm:$0xff]
        %v3720 = vld [vmem:[#allocation8 + $0x35c] sm:$0xf]
        %v3721 = vld [vmem:[#allocation8 + $0x360] sm:$0xff]
        %v3722 = vld [vmem:[#allocation8 + $0x368] sm:$0xf]
        %v3723 = vld [vmem:[#allocation8 + $0x36c] sm:$0xff]
        %v3724 = vld [vmem:[#allocation8 + $0x374] sm:$0xf]
        %v3725 = vld [vmem:[#allocation8 + $0x378] sm:$0xff]
        %v3726 = vld [vmem:[#allocation8 + $0x380] sm:$0xf]
        %v3727 = vld [vmem:[#allocation8 + $0x384] sm:$0xff]
        %v3728 = vld [vmem:[#allocation8 + $0x38c] sm:$0xf]
        %v3729 = vld [vmem:[#allocation8 + $0x390] sm:$0xff]
        %v3730 = vld [vmem:[#allocation8 + $0x398] sm:$0xf]
        %v3731 = vld [vmem:[#allocation8 + $0x39c] sm:$0xff]
        %v3732 = vld [vmem:[#allocation8 + $0x3a4] sm:$0xf]
        %v3733 = vld [vmem:[#allocation8 + $0x3a8] sm:$0xff]
        %v3734 = vld [vmem:[#allocation8 + $0x3b0] sm:$0xf]
        %v3735 = vld [vmem:[#allocation8 + $0x3b4] sm:$0xff]
        %v3736 = vld [vmem:[#allocation8 + $0x3bc] sm:$0xf]
        %v3737 = vld [vmem:[#allocation8 + $0x3c0] sm:$0xff]
        %v3738 = vld [vmem:[#allocation8 + $0x3c8] sm:$0xf]
        %v3739 = vld [vmem:[#allocation8 + $0x3cc] sm:$0xff]
        %v3740 = vld [vmem:[#allocation8 + $0x3d4] sm:$0xf]
        %v3741 = vld [vmem:[#allocation8 + $0x3d8] sm:$0xff]
        %v3742 = vld [vmem:[#allocation8 + $0x3e0] sm:$0xf]
        %v3743 = vld [vmem:[#allocation8 + $0x3e4] sm:$0xff]
        %v3744 = vld [vmem:[#allocation8 + $0x3ec] sm:$0xf]
        %v3745 = vld [vmem:[#allocation8 + $0x3f0] sm:$0xff]
        %v3746 = vld [vmem:[#allocation8 + $0x3f8] sm:$0xf]
        %v3747 = vld [vmem:[#allocation8 + $0x3fc] sm:$0xff]
        %v3748 = vld [vmem:[#allocation8 + $0x404] sm:$0xf]
        %v3749 = vld [vmem:[#allocation8 + $0x408] sm:$0xff]
        %v3750 = vld [vmem:[#allocation8 + $0x410] sm:$0xf]
        %v3751 = vld [vmem:[#allocation8 + $0x414] sm:$0xff]
        %v3752 = vld [vmem:[#allocation8 + $0x41c] sm:$0xf]
        %v3753 = vld [vmem:[#allocation8 + $0x420] sm:$0xff]
        %v3754 = vld [vmem:[#allocation8 + $0x428] sm:$0xf]
        %v3755 = vld [vmem:[#allocation8 + $0x42c] sm:$0xff]
        %v3756 = vld [vmem:[#allocation8 + $0x434] sm:$0xf]
        %v3757 = vld [vmem:[#allocation8 + $0x438] sm:$0xff]
        %v3758 = vld [vmem:[#allocation8 + $0x440] sm:$0xf]
        %v3759 = vld [vmem:[#allocation8 + $0x444] sm:$0xff]
        %v3760 = vld [vmem:[#allocation8 + $0x44c] sm:$0xf]
        %v3761 = vld [vmem:[#allocation8 + $0x450] sm:$0xff]
        %v3762 = vld [vmem:[#allocation8 + $0x458] sm:$0xf]
        %v3763 = vld [vmem:[#allocation8 + $0x45c] sm:$0xff]
        %v3764 = vld [vmem:[#allocation8 + $0x464] sm:$0xf]
        %v3765 = vld [vmem:[#allocation8 + $0x468] sm:$0xff]
        %v3766 = vld [vmem:[#allocation8 + $0x470] sm:$0xf]
        %v3767 = vld [vmem:[#allocation8 + $0x474] sm:$0xff]
        %v3768 = vld [vmem:[#allocation8 + $0x47c] sm:$0xf]
        %v3769 = vld [vmem:[#allocation8 + $0x480] sm:$0xff]
        %v3770 = vld [vmem:[#allocation8 + $0x488] sm:$0xf]
        %v3771 = vld [vmem:[#allocation8 + $0x48c] sm:$0xff]
        %v3772 = vld [vmem:[#allocation8 + $0x494] sm:$0xf]
        %v3773 = vld [vmem:[#allocation8 + $0x498] sm:$0xff]
        %v3774 = vld [vmem:[#allocation8 + $0x4a0] sm:$0xf]
        %v3775 = vld [vmem:[#allocation8 + $0x4a4] sm:$0xff]
        %v3776 = vld [vmem:[#allocation8 + $0x4ac] sm:$0xf]
        %v3777 = vld [vmem:[#allocation8 + $0x4b0] sm:$0xff]
        %v3778 = vld [vmem:[#allocation8 + $0x4b8] sm:$0xf]
        %v3779 = vld [vmem:[#allocation8 + $0x4bc] sm:$0xff]
        %v3780 = vld [vmem:[#allocation8 + $0x4c4] sm:$0xf]
        %v3781 = vld [vmem:[#allocation8 + $0x4c8] sm:$0xff]
        %v3782 = vld [vmem:[#allocation8 + $0x4d0] sm:$0xf]
        %v3783 = vld [vmem:[#allocation8 + $0x4d4] sm:$0xff]
        %v3784 = vld [vmem:[#allocation8 + $0x4dc] sm:$0xf]
        %v3785 = vld [vmem:[#allocation8 + $0x4e0] sm:$0xff]
        %v3786 = vld [vmem:[#allocation8 + $0x4e8] sm:$0xf]
        %v3787 = vld [vmem:[#allocation8 + $0x4ec] sm:$0xff]
        %v3788 = vld [vmem:[#allocation8 + $0x4f4] sm:$0xf]
        %v3789 = vld [vmem:[#allocation8 + $0x4f8] sm:$0xff]
        %v3790 = vld [vmem:[#allocation8 + $0x500] sm:$0xf]
        %v3791 = vld [vmem:[#allocation8 + $0x504] sm:$0xff]
        %v3792 = vld [vmem:[#allocation8 + $0x50c] sm:$0xf]
        %v3793 = vld [vmem:[#allocation8 + $0x510] sm:$0xff]
        %v3794 = vld [vmem:[#allocation8 + $0x518] sm:$0xf]
        %v3795 = vld [vmem:[#allocation8 + $0x51c] sm:$0xff]
        %v3796 = vld [vmem:[#allocation8 + $0x524] sm:$0xf]
        %v3797 = vld [vmem:[#allocation8 + $0x528] sm:$0xff]
        %v3798 = vld [vmem:[#allocation8 + $0x530] sm:$0xf]
        %v3799 = vld [vmem:[#allocation8 + $0x534] sm:$0xff]
        %v3800 = vld [vmem:[#allocation8 + $0x53c] sm:$0xf]
        %v3801 = vld [vmem:[#allocation8 + $0x540] sm:$0xff]
        %v3802 = vld [vmem:[#allocation8 + $0x548] sm:$0xf]
        %v3803 = vld [vmem:[#allocation8 + $0x54c] sm:$0xff]
        %v3804 = vld [vmem:[#allocation8 + $0x554] sm:$0xf]
        %v3805 = vld [vmem:[#allocation8 + $0x558] sm:$0xff]
        %v3806 = vld [vmem:[#allocation8 + $0x560] sm:$0xf]
        %v3807 = vld [vmem:[#allocation8 + $0x564] sm:$0xff]
        %v3808 = vld [vmem:[#allocation8 + $0x56c] sm:$0xf]
        %v3809 = vld [vmem:[#allocation8 + $0x570] sm:$0xff]
        %v3810 = vld [vmem:[#allocation8 + $0x578] sm:$0xf]
        %v3811 = vld [vmem:[#allocation8 + $0x57c] sm:$0xff]
        %v3812 = vld [vmem:[#allocation8 + $0x584] sm:$0xf]
        %v3813 = vld [vmem:[#allocation8 + $0x588] sm:$0xff]
        %v3814 = vld [vmem:[#allocation8 + $0x590] sm:$0xf]
        %v3815 = vld [vmem:[#allocation8 + $0x594] sm:$0xff]
        %v3816 = vld [vmem:[#allocation8 + $0x59c] sm:$0xf]
        %v3817 = vld [vmem:[#allocation8 + $0x5a0] sm:$0xff]
        %v3818 = vld [vmem:[#allocation8 + $0x5a8] sm:$0xf]
        %v3819 = vld [vmem:[#allocation8 + $0x5ac] sm:$0xff]
        %v3820 = vld [vmem:[#allocation8 + $0x5b4] sm:$0xf]
        %v3821 = vld [vmem:[#allocation8 + $0x5b8] sm:$0xff]
        %v3822 = vld [vmem:[#allocation8 + $0x5c0] sm:$0xf]
        %v3823 = vld [vmem:[#allocation8 + $0x5c4] sm:$0xff]
        %v3824 = vld [vmem:[#allocation8 + $0x5cc] sm:$0xf]
        %v3825 = vld [vmem:[#allocation8 + $0x5d0] sm:$0xff]
        %v3826 = vld [vmem:[#allocation8 + $0x5d8] sm:$0xf]
        %v3827 = vld [vmem:[#allocation8 + $0x5dc] sm:$0xff]
        %v3828 = vld [vmem:[#allocation8 + $0x5e4] sm:$0xf]
        %v3829 = vld [vmem:[#allocation8 + $0x5e8] sm:$0xff]
        %v3830 = vld [vmem:[#allocation8 + $0x5f0] sm:$0xf]
        %v3831 = vld [vmem:[#allocation8 + $0x5f4] sm:$0xff]
        %v3832 = vld [vmem:[#allocation8 + $0x5fc] sm:$0xf]
        %v3833 = vld [vmem:[#allocation8 + $0x600] sm:$0xff]
        %v3834 = vld [vmem:[#allocation8 + $0x608] sm:$0xf]
        %v3835 = vld [vmem:[#allocation8 + $0x60c] sm:$0xff]
        %v3836 = vld [vmem:[#allocation8 + $0x614] sm:$0xf]
        %v3837 = vld [vmem:[#allocation8 + $0x618] sm:$0xff]
        %v3838 = vld [vmem:[#allocation8 + $0x620] sm:$0xf]
        %v3839 = vld [vmem:[#allocation8 + $0x624] sm:$0xff]
        %v3840 = vld [vmem:[#allocation8 + $0x62c] sm:$0xf]
        %v3841 = vld [vmem:[#allocation8 + $0x630] sm:$0xff]
        %v3842 = vld [vmem:[#allocation8 + $0x638] sm:$0xf]
        %v3843 = vld [vmem:[#allocation8 + $0x63c] sm:$0xff]
        %v3844 = vld [vmem:[#allocation8 + $0x644] sm:$0xf]
        %v3845 = vld [vmem:[#allocation8 + $0x648] sm:$0xff]
        %v3846 = vld [vmem:[#allocation8 + $0x650] sm:$0xf]
        %v3847 = vld [vmem:[#allocation8 + $0x654] sm:$0xff]
        %v3848 = vld [vmem:[#allocation8 + $0x65c] sm:$0xf]
        %v3849 = vld [vmem:[#allocation8 + $0x660] sm:$0xff]
        %v3850 = vld [vmem:[#allocation8 + $0x668] sm:$0xf]
        %v3851 = vld [vmem:[#allocation8 + $0x66c] sm:$0xff]
        %v3852 = vld [vmem:[#allocation8 + $0x674] sm:$0xf]
        %v3853 = vld [vmem:[#allocation8 + $0x678] sm:$0xff]
        %v3854 = vld [vmem:[#allocation8 + $0x680] sm:$0xf]
        %v3855 = vld [vmem:[#allocation8 + $0x684] sm:$0xff]
        %v3856 = vld [vmem:[#allocation8 + $0x68c] sm:$0xf]
        %v3857 = vld [vmem:[#allocation8 + $0x690] sm:$0xff]
        %v3858 = vld [vmem:[#allocation8 + $0x698] sm:$0xf]
        %v3859 = vld [vmem:[#allocation8 + $0x69c] sm:$0xff]
        %v3860 = vld [vmem:[#allocation8 + $0x6a4] sm:$0xf]
        %v3861 = vld [vmem:[#allocation8 + $0x6a8] sm:$0xff]
        %v3862 = vld [vmem:[#allocation8 + $0x6b0] sm:$0xf]
        %v3863 = vld [vmem:[#allocation8 + $0x6b4] sm:$0xff]
        %v3864 = vld [vmem:[#allocation8 + $0x6bc] sm:$0xf]
        %v3865 = vld [vmem:[#allocation8 + $0x6c0] sm:$0xff]
        %v3866 = vld [vmem:[#allocation8 + $0x6c8] sm:$0xf]
        %v3867 = vld [vmem:[#allocation8 + $0x6cc] sm:$0xff]
        %v3868 = vld [vmem:[#allocation8 + $0x6d4] sm:$0xf]
        %v3869 = vld [vmem:[#allocation8 + $0x6d8] sm:$0xff]
        %v3870 = vld [vmem:[#allocation8 + $0x6e0] sm:$0xf]
        %v3871 = vld [vmem:[#allocation8 + $0x6e4] sm:$0xff]
        %v3872 = vld [vmem:[#allocation8 + $0x6ec] sm:$0xf]
        %v3873 = vld [vmem:[#allocation8 + $0x6f0] sm:$0xff]
        %v3874 = vld [vmem:[#allocation8 + $0x6f8] sm:$0xf]
        %v3875 = vld [vmem:[#allocation8 + $0x6fc] sm:$0xff]
        %v3876 = vld [vmem:[#allocation8 + $0x704] sm:$0xf]
        %v3877 = vld [vmem:[#allocation8 + $0x708] sm:$0xff]
        %v3878 = vld [vmem:[#allocation8 + $0x710] sm:$0xf]
        %v3879 = vld [vmem:[#allocation8 + $0x714] sm:$0xff]
        %v3880 = vld [vmem:[#allocation8 + $0x71c] sm:$0xf]
        %v3881 = vld [vmem:[#allocation8 + $0x720] sm:$0xff]
        %v3882 = vld [vmem:[#allocation8 + $0x728] sm:$0xf]
        %v3883 = vld [vmem:[#allocation8 + $0x72c] sm:$0xff]
        %v3884 = vld [vmem:[#allocation8 + $0x734] sm:$0xf]
        %v3885 = vld [vmem:[#allocation8 + $0x738] sm:$0xff]
        %v3886 = vld [vmem:[#allocation8 + $0x740] sm:$0xf]
        %v3887 = vld [vmem:[#allocation8 + $0x744] sm:$0xff]
        %v3888 = vld [vmem:[#allocation8 + $0x74c] sm:$0xf]
        %v3889 = vld [vmem:[#allocation8 + $0x750] sm:$0xff]
        %v3890 = vld [vmem:[#allocation8 + $0x758] sm:$0xf]
        %v3891 = vld [vmem:[#allocation8 + $0x75c] sm:$0xff]
        %v3892 = vld [vmem:[#allocation8 + $0x764] sm:$0xf]
        %v3893 = vld [vmem:[#allocation8 + $0x768] sm:$0xff]
        %v3894 = vld [vmem:[#allocation8 + $0x770] sm:$0xf]
        %v3895 = vld [vmem:[#allocation8 + $0x774] sm:$0xff]
        %v3896 = vld [vmem:[#allocation8 + $0x77c] sm:$0xf]
        %v3897 = vld [vmem:[#allocation8 + $0x780] sm:$0xff]
        %v3898 = vld [vmem:[#allocation8 + $0x788] sm:$0xf]
        %v3899 = vld [vmem:[#allocation8 + $0x78c] sm:$0xff]
        %v3900 = vld [vmem:[#allocation8 + $0x794] sm:$0xf]
        %v3901 = vld [vmem:[#allocation8 + $0x798] sm:$0xff]
        %v3902 = vld [vmem:[#allocation8 + $0x7a0] sm:$0xf]
        %v3903 = vld [vmem:[#allocation8 + $0x7a4] sm:$0xff]
        %v3904 = vld [vmem:[#allocation8 + $0x7ac] sm:$0xf]
        %v3905 = vld [vmem:[#allocation8 + $0x7b0] sm:$0xff]
        %v3906 = vld [vmem:[#allocation8 + $0x7b8] sm:$0xf]
        %v3907 = vld [vmem:[#allocation8 + $0x7bc] sm:$0xff]
        %v3908 = vld [vmem:[#allocation8 + $0x7c4] sm:$0xf]
        %v3909 = vld [vmem:[#allocation8 + $0x7c8] sm:$0xff]
        %v3910 = vld [vmem:[#allocation8 + $0x7d0] sm:$0xf]
        %v3911 = vld [vmem:[#allocation8 + $0x7d4] sm:$0xff]
        %v3912 = vld [vmem:[#allocation8 + $0x7dc] sm:$0xf]
        %v3913 = vld [vmem:[#allocation8 + $0x7e0] sm:$0xff]
        %v3914 = vld [vmem:[#allocation8 + $0x7e8] sm:$0xf]
        %v3915 = vld [vmem:[#allocation8 + $0x7ec] sm:$0xff]
        %v3916 = vld [vmem:[#allocation8 + $0x7f4] sm:$0xf]
        %v3917 = vld [vmem:[#allocation8 + $0x7f8] sm:$0xff]
        %v3918 = vld [vmem:[#allocation8 + $0x800] sm:$0xf]
        %v3919 = vld [vmem:[#allocation8 + $0x804] sm:$0xff]
        %v3920 = vld [vmem:[#allocation8 + $0x80c] sm:$0xf]
        %v3921 = vld [vmem:[#allocation8 + $0x810] sm:$0xff]
        %v3922 = vld [vmem:[#allocation8 + $0x818] sm:$0xf]
        %v3923 = vld [vmem:[#allocation8 + $0x81c] sm:$0xff]
        %v3924 = vld [vmem:[#allocation8 + $0x824] sm:$0xf]
        %v3925 = vld [vmem:[#allocation8 + $0x828] sm:$0xff]
        %v3926 = vld [vmem:[#allocation8 + $0x830] sm:$0xf]
        %v3927 = vld [vmem:[#allocation8 + $0x834] sm:$0xff]
        %v3928 = vld [vmem:[#allocation8 + $0x83c] sm:$0xf]
        %v3929 = vld [vmem:[#allocation8 + $0x840] sm:$0xff]
        %v3930 = vld [vmem:[#allocation8 + $0x848] sm:$0xf]
        %v3931 = vld [vmem:[#allocation8 + $0x84c] sm:$0xff]
        %v3932 = vld [vmem:[#allocation8 + $0x854] sm:$0xf]
        %v3933 = vld [vmem:[#allocation8 + $0x858] sm:$0xff]
        %v3934 = vld [vmem:[#allocation8 + $0x860] sm:$0xf]
        %v3935 = vld [vmem:[#allocation8 + $0x864] sm:$0xff]
        %v3936 = vld [vmem:[#allocation8 + $0x86c] sm:$0xf]
        %v3937 = vld [vmem:[#allocation8 + $0x870] sm:$0xff]
        %v3938 = vld [vmem:[#allocation8 + $0x878] sm:$0xf]
        %v3939 = vld [vmem:[#allocation8 + $0x87c] sm:$0xff]
        %v3940 = vld [vmem:[#allocation8 + $0x884] sm:$0xf]
        %v3941 = vld [vmem:[#allocation8 + $0x888] sm:$0xff]
        %v3942 = vld [vmem:[#allocation8 + $0x890] sm:$0xf]
        %v3943 = vld [vmem:[#allocation8 + $0x894] sm:$0xff]
        %v3944 = vld [vmem:[#allocation8 + $0x89c] sm:$0xf]
        %v3945 = vld [vmem:[#allocation8 + $0x8a0] sm:$0xff]
        %v3946 = vld [vmem:[#allocation8 + $0x8a8] sm:$0xf]
        %v3947 = vld [vmem:[#allocation8 + $0x8ac] sm:$0xff]
        %v3948 = vld [vmem:[#allocation8 + $0x8b4] sm:$0xf]
        %v3949 = vld [vmem:[#allocation8 + $0x8b8] sm:$0xff]
        %v3950 = vld [vmem:[#allocation8 + $0x8c0] sm:$0xf]
        %v3951 = vld [vmem:[#allocation8 + $0x8c4] sm:$0xff]
        %v3952 = vld [vmem:[#allocation8 + $0x8cc] sm:$0xf]
        %v3953 = vld [vmem:[#allocation8 + $0x8d0] sm:$0xff]
        %v3954 = vld [vmem:[#allocation8 + $0x8d8] sm:$0xf]
        %v3955 = vld [vmem:[#allocation8 + $0x8dc] sm:$0xff]
        %v3956 = vld [vmem:[#allocation8 + $0x8e4] sm:$0xf]
        %v3957 = vld [vmem:[#allocation8 + $0x8e8] sm:$0xff]
        %v3958 = vld [vmem:[#allocation8 + $0x8f0] sm:$0xf]
        %v3959 = vld [vmem:[#allocation8 + $0x8f4] sm:$0xff]
        %v3960 = vld [vmem:[#allocation8 + $0x8fc] sm:$0xf]
        %v3961 = vld [vmem:[#allocation10] sm:$0x7]
        %v3963 = vlaneseq
        %v3964 = vshrl.u32 %v3963, 7
        %v3965 = vsub.s32 0, %v3964
        %v3966 = vrot.slane %v3961, %v3965
        %v3967 = vlaneseq
        %v3968 = vshrl.u32 %v3967, 7
        %v3969 = vsub.s32 1, %v3968
        %v3970 = vrot.slane %v3961, %v3969
        %v3971 = vlaneseq
        %v3972 = vshrl.u32 %v3971, 7
        %v3973 = vsub.s32 2, %v3972
        %v3974 = vrot.slane %v3961, %v3973
        %v4362 = vunpack.c.l.b16 %v3577
        %v4363 = vunpack.c.h.b16 %v3577
        %v4364 = vunpack.c.l.b16 %v3578
        %v4365 = vunpack.c.l.b16 %v3579
        %v4366 = vunpack.c.h.b16 %v3579
        %v4367 = vunpack.c.l.b16 %v3580
        %v4368 = vunpack.c.l.b16 %v3581
        %v4369 = vunpack.c.h.b16 %v3581
        %v4370 = vunpack.c.l.b16 %v3582
        %v4371 = vunpack.c.l.b16 %v3583
        %v4372 = vunpack.c.h.b16 %v3583
        %v4373 = vunpack.c.l.b16 %v3584
        %v4374 = vunpack.c.l.b16 %v3585
        %v4375 = vunpack.c.h.b16 %v3585
        %v4376 = vunpack.c.l.b16 %v3586
        %v4377 = vunpack.c.l.b16 %v3587
        %v4378 = vunpack.c.h.b16 %v3587
        %v4379 = vunpack.c.l.b16 %v3588
        %v4380 = vunpack.c.l.b16 %v3589
        %v4381 = vunpack.c.h.b16 %v3589
        %v4382 = vunpack.c.l.b16 %v3590
        %v4383 = vunpack.c.l.b16 %v3591
        %v4384 = vunpack.c.h.b16 %v3591
        %v4385 = vunpack.c.l.b16 %v3592
        %v4386 = vunpack.c.l.b16 %v3593
        %v4387 = vunpack.c.h.b16 %v3593
        %v4388 = vunpack.c.l.b16 %v3594
        %v4389 = vunpack.c.l.b16 %v3595
        %v4390 = vunpack.c.h.b16 %v3595
        %v4391 = vunpack.c.l.b16 %v3596
        %v4392 = vunpack.c.l.b16 %v3597
        %v4393 = vunpack.c.h.b16 %v3597
        %v4394 = vunpack.c.l.b16 %v3598
        %v4395 = vunpack.c.l.b16 %v3599
        %v4396 = vunpack.c.h.b16 %v3599
        %v4397 = vunpack.c.l.b16 %v3600
        %v4398 = vunpack.c.l.b16 %v3601
        %v4399 = vunpack.c.h.b16 %v3601
        %v4400 = vunpack.c.l.b16 %v3602
        %v4401 = vunpack.c.l.b16 %v3603
        %v4402 = vunpack.c.h.b16 %v3603
        %v4403 = vunpack.c.l.b16 %v3604
        %v4404 = vunpack.c.l.b16 %v3605
        %v4405 = vunpack.c.h.b16 %v3605
        %v4406 = vunpack.c.l.b16 %v3606
        %v4407 = vunpack.c.l.b16 %v3607
        %v4408 = vunpack.c.h.b16 %v3607
        %v4409 = vunpack.c.l.b16 %v3608
        %v4410 = vunpack.c.l.b16 %v3609
        %v4411 = vunpack.c.h.b16 %v3609
        %v4412 = vunpack.c.l.b16 %v3610
        %v4413 = vunpack.c.l.b16 %v3611
        %v4414 = vunpack.c.h.b16 %v3611
        %v4415 = vunpack.c.l.b16 %v3612
        %v4416 = vunpack.c.l.b16 %v3613
        %v4417 = vunpack.c.h.b16 %v3613
        %v4418 = vunpack.c.l.b16 %v3614
        %v4419 = vunpack.c.l.b16 %v3615
        %v4420 = vunpack.c.h.b16 %v3615
        %v4421 = vunpack.c.l.b16 %v3616
        %v4422 = vunpack.c.l.b16 %v3617
        %v4423 = vunpack.c.h.b16 %v3617
        %v4424 = vunpack.c.l.b16 %v3618
        %v4425 = vunpack.c.l.b16 %v3619
        %v4426 = vunpack.c.h.b16 %v3619
        %v4427 = vunpack.c.l.b16 %v3620
        %v4428 = vunpack.c.l.b16 %v3621
        %v4429 = vunpack.c.h.b16 %v3621
        %v4430 = vunpack.c.l.b16 %v3622
        %v4431 = vunpack.c.l.b16 %v3623
        %v4432 = vunpack.c.h.b16 %v3623
        %v4433 = vunpack.c.l.b16 %v3624
        %v4434 = vunpack.c.l.b16 %v3625
        %v4435 = vunpack.c.h.b16 %v3625
        %v4436 = vunpack.c.l.b16 %v3626
        %v4437 = vunpack.c.l.b16 %v3627
        %v4438 = vunpack.c.h.b16 %v3627
        %v4439 = vunpack.c.l.b16 %v3628
        %v4440 = vunpack.c.l.b16 %v3629
        %v4441 = vunpack.c.h.b16 %v3629
        %v4442 = vunpack.c.l.b16 %v3630
        %v4443 = vunpack.c.l.b16 %v3631
        %v4444 = vunpack.c.h.b16 %v3631
        %v4445 = vunpack.c.l.b16 %v3632
        %v4446 = vunpack.c.l.b16 %v3633
        %v4447 = vunpack.c.h.b16 %v3633
        %v4448 = vunpack.c.l.b16 %v3634
        %v4449 = vunpack.c.l.b16 %v3635
        %v4450 = vunpack.c.h.b16 %v3635
        %v4451 = vunpack.c.l.b16 %v3636
        %v4452 = vunpack.c.l.b16 %v3637
        %v4453 = vunpack.c.h.b16 %v3637
        %v4454 = vunpack.c.l.b16 %v3638
        %v4455 = vunpack.c.l.b16 %v3639
        %v4456 = vunpack.c.h.b16 %v3639
        %v4457 = vunpack.c.l.b16 %v3640
        %v4458 = vunpack.c.l.b16 %v3641
        %v4459 = vunpack.c.h.b16 %v3641
        %v4460 = vunpack.c.l.b16 %v3642
        %v4461 = vunpack.c.l.b16 %v3643
        %v4462 = vunpack.c.h.b16 %v3643
        %v4463 = vunpack.c.l.b16 %v3644
        %v4464 = vunpack.c.l.b16 %v3645
        %v4465 = vunpack.c.h.b16 %v3645
        %v4466 = vunpack.c.l.b16 %v3646
        %v4467 = vunpack.c.l.b16 %v3647
        %v4468 = vunpack.c.h.b16 %v3647
        %v4469 = vunpack.c.l.b16 %v3648
        %v4470 = vunpack.c.l.b16 %v3649
        %v4471 = vunpack.c.h.b16 %v3649
        %v4472 = vunpack.c.l.b16 %v3650
        %v4473 = vunpack.c.l.b16 %v3651
        %v4474 = vunpack.c.h.b16 %v3651
        %v4475 = vunpack.c.l.b16 %v3652
        %v4476 = vunpack.c.l.b16 %v3653
        %v4477 = vunpack.c.h.b16 %v3653
        %v4478 = vunpack.c.l.b16 %v3654
        %v4479 = vunpack.c.l.b16 %v3655
        %v4480 = vunpack.c.h.b16 %v3655
        %v4481 = vunpack.c.l.b16 %v3656
        %v4482 = vunpack.c.l.b16 %v3657
        %v4483 = vunpack.c.h.b16 %v3657
        %v4484 = vunpack.c.l.b16 %v3658
        %v4485 = vunpack.c.l.b16 %v3659
        %v4486 = vunpack.c.h.b16 %v3659
        %v4487 = vunpack.c.l.b16 %v3660
        %v4488 = vunpack.c.l.b16 %v3661
        %v4489 = vunpack.c.h.b16 %v3661
        %v4490 = vunpack.c.l.b16 %v3662
        %v4491 = vunpack.c.l.b16 %v3663
        %v4492 = vunpack.c.h.b16 %v3663
        %v4493 = vunpack.c.l.b16 %v3664
        %v4494 = vunpack.c.l.b16 %v3665
        %v4495 = vunpack.c.h.b16 %v3665
        %v4496 = vunpack.c.l.b16 %v3666
        %v4497 = vunpack.c.l.b16 %v3667
        %v4498 = vunpack.c.h.b16 %v3667
        %v4499 = vunpack.c.l.b16 %v3668
        %v4500 = vunpack.c.l.b16 %v3669
        %v4501 = vunpack.c.h.b16 %v3669
        %v4502 = vunpack.c.l.b16 %v3670
        %v4503 = vunpack.c.l.b16 %v3671
        %v4504 = vunpack.c.h.b16 %v3671
        %v4505 = vunpack.c.l.b16 %v3672
        %v4506 = vunpack.c.l.b16 %v3673
        %v4507 = vunpack.c.h.b16 %v3673
        %v4508 = vunpack.c.l.b16 %v3674
        %v4509 = vunpack.c.l.b16 %v3675
        %v4510 = vunpack.c.h.b16 %v3675
        %v4511 = vunpack.c.l.b16 %v3676
        %v4512 = vunpack.c.l.b16 %v3677
        %v4513 = vunpack.c.h.b16 %v3677
        %v4514 = vunpack.c.l.b16 %v3678
        %v4515 = vunpack.c.l.b16 %v3679
        %v4516 = vunpack.c.h.b16 %v3679
        %v4517 = vunpack.c.l.b16 %v3680
        %v4518 = vunpack.c.l.b16 %v3681
        %v4519 = vunpack.c.h.b16 %v3681
        %v4520 = vunpack.c.l.b16 %v3682
        %v4521 = vunpack.c.l.b16 %v3683
        %v4522 = vunpack.c.h.b16 %v3683
        %v4523 = vunpack.c.l.b16 %v3684
        %v4524 = vunpack.c.l.b16 %v3685
        %v4525 = vunpack.c.h.b16 %v3685
        %v4526 = vunpack.c.l.b16 %v3686
        %v4527 = vunpack.c.l.b16 %v3687
        %v4528 = vunpack.c.h.b16 %v3687
        %v4529 = vunpack.c.l.b16 %v3688
        %v4530 = vunpack.c.l.b16 %v3689
        %v4531 = vunpack.c.h.b16 %v3689
        %v4532 = vunpack.c.l.b16 %v3690
        %v4533 = vunpack.c.l.b16 %v3691
        %v4534 = vunpack.c.h.b16 %v3691
        %v4535 = vunpack.c.l.b16 %v3692
        %v4536 = vunpack.c.l.b16 %v3693
        %v4537 = vunpack.c.h.b16 %v3693
        %v4538 = vunpack.c.l.b16 %v3694
        %v4539 = vunpack.c.l.b16 %v3695
        %v4540 = vunpack.c.h.b16 %v3695
        %v4541 = vunpack.c.l.b16 %v3696
        %v4542 = vunpack.c.l.b16 %v3697
        %v4543 = vunpack.c.h.b16 %v3697
        %v4544 = vunpack.c.l.b16 %v3698
        %v4545 = vunpack.c.l.b16 %v3699
        %v4546 = vunpack.c.h.b16 %v3699
        %v4547 = vunpack.c.l.b16 %v3700
        %v4548 = vunpack.c.l.b16 %v3701
        %v4549 = vunpack.c.h.b16 %v3701
        %v4550 = vunpack.c.l.b16 %v3702
        %v4551 = vunpack.c.l.b16 %v3703
        %v4552 = vunpack.c.h.b16 %v3703
        %v4553 = vunpack.c.l.b16 %v3704
        %v4554 = vunpack.c.l.b16 %v3705
        %v4555 = vunpack.c.h.b16 %v3705
        %v4556 = vunpack.c.l.b16 %v3706
        %v4557 = vunpack.c.l.b16 %v3707
        %v4558 = vunpack.c.h.b16 %v3707
        %v4559 = vunpack.c.l.b16 %v3708
        %v4560 = vunpack.c.l.b16 %v3709
        %v4561 = vunpack.c.h.b16 %v3709
        %v4562 = vunpack.c.l.b16 %v3710
        %v4563 = vunpack.c.l.b16 %v3711
        %v4564 = vunpack.c.h.b16 %v3711
        %v4565 = vunpack.c.l.b16 %v3712
        %v4566 = vunpack.c.l.b16 %v3713
        %v4567 = vunpack.c.h.b16 %v3713
        %v4568 = vunpack.c.l.b16 %v3714
        %v4569 = vunpack.c.l.b16 %v3715
        %v4570 = vunpack.c.h.b16 %v3715
        %v4571 = vunpack.c.l.b16 %v3716
        %v4572 = vunpack.c.l.b16 %v3717
        %v4573 = vunpack.c.h.b16 %v3717
        %v4574 = vunpack.c.l.b16 %v3718
        %v4575 = vunpack.c.l.b16 %v3719
        %v4576 = vunpack.c.h.b16 %v3719
        %v4577 = vunpack.c.l.b16 %v3720
        %v4578 = vunpack.c.l.b16 %v3721
        %v4579 = vunpack.c.h.b16 %v3721
        %v4580 = vunpack.c.l.b16 %v3722
        %v4581 = vunpack.c.l.b16 %v3723
        %v4582 = vunpack.c.h.b16 %v3723
        %v4583 = vunpack.c.l.b16 %v3724
        %v4584 = vunpack.c.l.b16 %v3725
        %v4585 = vunpack.c.h.b16 %v3725
        %v4586 = vunpack.c.l.b16 %v3726
        %v4587 = vunpack.c.l.b16 %v3727
        %v4588 = vunpack.c.h.b16 %v3727
        %v4589 = vunpack.c.l.b16 %v3728
        %v4590 = vunpack.c.l.b16 %v3729
        %v4591 = vunpack.c.h.b16 %v3729
        %v4592 = vunpack.c.l.b16 %v3730
        %v4593 = vunpack.c.l.b16 %v3731
        %v4594 = vunpack.c.h.b16 %v3731
        %v4595 = vunpack.c.l.b16 %v3732
        %v4596 = vunpack.c.l.b16 %v3733
        %v4597 = vunpack.c.h.b16 %v3733
        %v4598 = vunpack.c.l.b16 %v3734
        %v4599 = vunpack.c.l.b16 %v3735
        %v4600 = vunpack.c.h.b16 %v3735
        %v4601 = vunpack.c.l.b16 %v3736
        %v4602 = vunpack.c.l.b16 %v3737
        %v4603 = vunpack.c.h.b16 %v3737
        %v4604 = vunpack.c.l.b16 %v3738
        %v4605 = vunpack.c.l.b16 %v3739
        %v4606 = vunpack.c.h.b16 %v3739
        %v4607 = vunpack.c.l.b16 %v3740
        %v4608 = vunpack.c.l.b16 %v3741
        %v4609 = vunpack.c.h.b16 %v3741
        %v4610 = vunpack.c.l.b16 %v3742
        %v4611 = vunpack.c.l.b16 %v3743
        %v4612 = vunpack.c.h.b16 %v3743
        %v4613 = vunpack.c.l.b16 %v3744
        %v4614 = vunpack.c.l.b16 %v3745
        %v4615 = vunpack.c.h.b16 %v3745
        %v4616 = vunpack.c.l.b16 %v3746
        %v4617 = vunpack.c.l.b16 %v3747
        %v4618 = vunpack.c.h.b16 %v3747
        %v4619 = vunpack.c.l.b16 %v3748
        %v4620 = vunpack.c.l.b16 %v3749
        %v4621 = vunpack.c.h.b16 %v3749
        %v4622 = vunpack.c.l.b16 %v3750
        %v4623 = vunpack.c.l.b16 %v3751
        %v4624 = vunpack.c.h.b16 %v3751
        %v4625 = vunpack.c.l.b16 %v3752
        %v4626 = vunpack.c.l.b16 %v3753
        %v4627 = vunpack.c.h.b16 %v3753
        %v4628 = vunpack.c.l.b16 %v3754
        %v4629 = vunpack.c.l.b16 %v3755
        %v4630 = vunpack.c.h.b16 %v3755
        %v4631 = vunpack.c.l.b16 %v3756
        %v4632 = vunpack.c.l.b16 %v3757
        %v4633 = vunpack.c.h.b16 %v3757
        %v4634 = vunpack.c.l.b16 %v3758
        %v4635 = vunpack.c.l.b16 %v3759
        %v4636 = vunpack.c.h.b16 %v3759
        %v4637 = vunpack.c.l.b16 %v3760
        %v4638 = vunpack.c.l.b16 %v3761
        %v4639 = vunpack.c.h.b16 %v3761
        %v4640 = vunpack.c.l.b16 %v3762
        %v4641 = vunpack.c.l.b16 %v3763
        %v4642 = vunpack.c.h.b16 %v3763
        %v4643 = vunpack.c.l.b16 %v3764
        %v4644 = vunpack.c.l.b16 %v3765
        %v4645 = vunpack.c.h.b16 %v3765
        %v4646 = vunpack.c.l.b16 %v3766
        %v4647 = vunpack.c.l.b16 %v3767
        %v4648 = vunpack.c.h.b16 %v3767
        %v4649 = vunpack.c.l.b16 %v3768
        %v4650 = vunpack.c.l.b16 %v3769
        %v4651 = vunpack.c.h.b16 %v3769
        %v4652 = vunpack.c.l.b16 %v3770
        %v4653 = vunpack.c.l.b16 %v3771
        %v4654 = vunpack.c.h.b16 %v3771
        %v4655 = vunpack.c.l.b16 %v3772
        %v4656 = vunpack.c.l.b16 %v3773
        %v4657 = vunpack.c.h.b16 %v3773
        %v4658 = vunpack.c.l.b16 %v3774
        %v4659 = vunpack.c.l.b16 %v3775
        %v4660 = vunpack.c.h.b16 %v3775
        %v4661 = vunpack.c.l.b16 %v3776
        %v4662 = vunpack.c.l.b16 %v3777
        %v4663 = vunpack.c.h.b16 %v3777
        %v4664 = vunpack.c.l.b16 %v3778
        %v4665 = vunpack.c.l.b16 %v3779
        %v4666 = vunpack.c.h.b16 %v3779
        %v4667 = vunpack.c.l.b16 %v3780
        %v4668 = vunpack.c.l.b16 %v3781
        %v4669 = vunpack.c.h.b16 %v3781
        %v4670 = vunpack.c.l.b16 %v3782
        %v4671 = vunpack.c.l.b16 %v3783
        %v4672 = vunpack.c.h.b16 %v3783
        %v4673 = vunpack.c.l.b16 %v3784
        %v4674 = vunpack.c.l.b16 %v3785
        %v4675 = vunpack.c.h.b16 %v3785
        %v4676 = vunpack.c.l.b16 %v3786
        %v4677 = vunpack.c.l.b16 %v3787
        %v4678 = vunpack.c.h.b16 %v3787
        %v4679 = vunpack.c.l.b16 %v3788
        %v4680 = vunpack.c.l.b16 %v3789
        %v4681 = vunpack.c.h.b16 %v3789
        %v4682 = vunpack.c.l.b16 %v3790
        %v4683 = vunpack.c.l.b16 %v3791
        %v4684 = vunpack.c.h.b16 %v3791
        %v4685 = vunpack.c.l.b16 %v3792
        %v4686 = vunpack.c.l.b16 %v3793
        %v4687 = vunpack.c.h.b16 %v3793
        %v4688 = vunpack.c.l.b16 %v3794
        %v4689 = vunpack.c.l.b16 %v3795
        %v4690 = vunpack.c.h.b16 %v3795
        %v4691 = vunpack.c.l.b16 %v3796
        %v4692 = vunpack.c.l.b16 %v3797
        %v4693 = vunpack.c.h.b16 %v3797
        %v4694 = vunpack.c.l.b16 %v3798
        %v4695 = vunpack.c.l.b16 %v3799
        %v4696 = vunpack.c.h.b16 %v3799
        %v4697 = vunpack.c.l.b16 %v3800
        %v4698 = vunpack.c.l.b16 %v3801
        %v4699 = vunpack.c.h.b16 %v3801
        %v4700 = vunpack.c.l.b16 %v3802
        %v4701 = vunpack.c.l.b16 %v3803
        %v4702 = vunpack.c.h.b16 %v3803
        %v4703 = vunpack.c.l.b16 %v3804
        %v4704 = vunpack.c.l.b16 %v3805
        %v4705 = vunpack.c.h.b16 %v3805
        %v4706 = vunpack.c.l.b16 %v3806
        %v4707 = vunpack.c.l.b16 %v3807
        %v4708 = vunpack.c.h.b16 %v3807
        %v4709 = vunpack.c.l.b16 %v3808
        %v4710 = vunpack.c.l.b16 %v3809
        %v4711 = vunpack.c.h.b16 %v3809
        %v4712 = vunpack.c.l.b16 %v3810
        %v4713 = vunpack.c.l.b16 %v3811
        %v4714 = vunpack.c.h.b16 %v3811
        %v4715 = vunpack.c.l.b16 %v3812
        %v4716 = vunpack.c.l.b16 %v3813
        %v4717 = vunpack.c.h.b16 %v3813
        %v4718 = vunpack.c.l.b16 %v3814
        %v4719 = vunpack.c.l.b16 %v3815
        %v4720 = vunpack.c.h.b16 %v3815
        %v4721 = vunpack.c.l.b16 %v3816
        %v4722 = vunpack.c.l.b16 %v3817
        %v4723 = vunpack.c.h.b16 %v3817
        %v4724 = vunpack.c.l.b16 %v3818
        %v4725 = vunpack.c.l.b16 %v3819
        %v4726 = vunpack.c.h.b16 %v3819
        %v4727 = vunpack.c.l.b16 %v3820
        %v4728 = vunpack.c.l.b16 %v3821
        %v4729 = vunpack.c.h.b16 %v3821
        %v4730 = vunpack.c.l.b16 %v3822
        %v4731 = vunpack.c.l.b16 %v3823
        %v4732 = vunpack.c.h.b16 %v3823
        %v4733 = vunpack.c.l.b16 %v3824
        %v4734 = vunpack.c.l.b16 %v3825
        %v4735 = vunpack.c.h.b16 %v3825
        %v4736 = vunpack.c.l.b16 %v3826
        %v4737 = vunpack.c.l.b16 %v3827
        %v4738 = vunpack.c.h.b16 %v3827
        %v4739 = vunpack.c.l.b16 %v3828
        %v4740 = vunpack.c.l.b16 %v3829
        %v4741 = vunpack.c.h.b16 %v3829
        %v4742 = vunpack.c.l.b16 %v3830
        %v4743 = vunpack.c.l.b16 %v3831
        %v4744 = vunpack.c.h.b16 %v3831
        %v4745 = vunpack.c.l.b16 %v3832
        %v4746 = vunpack.c.l.b16 %v3833
        %v4747 = vunpack.c.h.b16 %v3833
        %v4748 = vunpack.c.l.b16 %v3834
        %v4749 = vunpack.c.l.b16 %v3835
        %v4750 = vunpack.c.h.b16 %v3835
        %v4751 = vunpack.c.l.b16 %v3836
        %v4752 = vunpack.c.l.b16 %v3837
        %v4753 = vunpack.c.h.b16 %v3837
        %v4754 = vunpack.c.l.b16 %v3838
        %v4755 = vunpack.c.l.b16 %v3839
        %v4756 = vunpack.c.h.b16 %v3839
        %v4757 = vunpack.c.l.b16 %v3840
        %v4758 = vunpack.c.l.b16 %v3841
        %v4759 = vunpack.c.h.b16 %v3841
        %v4760 = vunpack.c.l.b16 %v3842
        %v4761 = vunpack.c.l.b16 %v3843
        %v4762 = vunpack.c.h.b16 %v3843
        %v4763 = vunpack.c.l.b16 %v3844
        %v4764 = vunpack.c.l.b16 %v3845
        %v4765 = vunpack.c.h.b16 %v3845
        %v4766 = vunpack.c.l.b16 %v3846
        %v4767 = vunpack.c.l.b16 %v3847
        %v4768 = vunpack.c.h.b16 %v3847
        %v4769 = vunpack.c.l.b16 %v3848
        %v4770 = vunpack.c.l.b16 %v3849
        %v4771 = vunpack.c.h.b16 %v3849
        %v4772 = vunpack.c.l.b16 %v3850
        %v4773 = vunpack.c.l.b16 %v3851
        %v4774 = vunpack.c.h.b16 %v3851
        %v4775 = vunpack.c.l.b16 %v3852
        %v4776 = vunpack.c.l.b16 %v3853
        %v4777 = vunpack.c.h.b16 %v3853
        %v4778 = vunpack.c.l.b16 %v3854
        %v4779 = vunpack.c.l.b16 %v3855
        %v4780 = vunpack.c.h.b16 %v3855
        %v4781 = vunpack.c.l.b16 %v3856
        %v4782 = vunpack.c.l.b16 %v3857
        %v4783 = vunpack.c.h.b16 %v3857
        %v4784 = vunpack.c.l.b16 %v3858
        %v4785 = vunpack.c.l.b16 %v3859
        %v4786 = vunpack.c.h.b16 %v3859
        %v4787 = vunpack.c.l.b16 %v3860
        %v4788 = vunpack.c.l.b16 %v3861
        %v4789 = vunpack.c.h.b16 %v3861
        %v4790 = vunpack.c.l.b16 %v3862
        %v4791 = vunpack.c.l.b16 %v3863
        %v4792 = vunpack.c.h.b16 %v3863
        %v4793 = vunpack.c.l.b16 %v3864
        %v4794 = vunpack.c.l.b16 %v3865
        %v4795 = vunpack.c.h.b16 %v3865
        %v4796 = vunpack.c.l.b16 %v3866
        %v4797 = vunpack.c.l.b16 %v3867
        %v4798 = vunpack.c.h.b16 %v3867
        %v4799 = vunpack.c.l.b16 %v3868
        %v4800 = vunpack.c.l.b16 %v3869
        %v4801 = vunpack.c.h.b16 %v3869
        %v4802 = vunpack.c.l.b16 %v3870
        %v4803 = vunpack.c.l.b16 %v3871
        %v4804 = vunpack.c.h.b16 %v3871
        %v4805 = vunpack.c.l.b16 %v3872
        %v4806 = vunpack.c.l.b16 %v3873
        %v4807 = vunpack.c.h.b16 %v3873
        %v4808 = vunpack.c.l.b16 %v3874
        %v4809 = vunpack.c.l.b16 %v3875
        %v4810 = vunpack.c.h.b16 %v3875
        %v4811 = vunpack.c.l.b16 %v3876
        %v4812 = vunpack.c.l.b16 %v3877
        %v4813 = vunpack.c.h.b16 %v3877
        %v4814 = vunpack.c.l.b16 %v3878
        %v4815 = vunpack.c.l.b16 %v3879
        %v4816 = vunpack.c.h.b16 %v3879
        %v4817 = vunpack.c.l.b16 %v3880
        %v4818 = vunpack.c.l.b16 %v3881
        %v4819 = vunpack.c.h.b16 %v3881
        %v4820 = vunpack.c.l.b16 %v3882
        %v4821 = vunpack.c.l.b16 %v3883
        %v4822 = vunpack.c.h.b16 %v3883
        %v4823 = vunpack.c.l.b16 %v3884
        %v4824 = vunpack.c.l.b16 %v3885
        %v4825 = vunpack.c.h.b16 %v3885
        %v4826 = vunpack.c.l.b16 %v3886
        %v4827 = vunpack.c.l.b16 %v3887
        %v4828 = vunpack.c.h.b16 %v3887
        %v4829 = vunpack.c.l.b16 %v3888
        %v4830 = vunpack.c.l.b16 %v3889
        %v4831 = vunpack.c.h.b16 %v3889
        %v4832 = vunpack.c.l.b16 %v3890
        %v4833 = vunpack.c.l.b16 %v3891
        %v4834 = vunpack.c.h.b16 %v3891
        %v4835 = vunpack.c.l.b16 %v3892
        %v4836 = vunpack.c.l.b16 %v3893
        %v4837 = vunpack.c.h.b16 %v3893
        %v4838 = vunpack.c.l.b16 %v3894
        %v4839 = vunpack.c.l.b16 %v3895
        %v4840 = vunpack.c.h.b16 %v3895
        %v4841 = vunpack.c.l.b16 %v3896
        %v4842 = vunpack.c.l.b16 %v3897
        %v4843 = vunpack.c.h.b16 %v3897
        %v4844 = vunpack.c.l.b16 %v3898
        %v4845 = vunpack.c.l.b16 %v3899
        %v4846 = vunpack.c.h.b16 %v3899
        %v4847 = vunpack.c.l.b16 %v3900
        %v4848 = vunpack.c.l.b16 %v3901
        %v4849 = vunpack.c.h.b16 %v3901
        %v4850 = vunpack.c.l.b16 %v3902
        %v4851 = vunpack.c.l.b16 %v3903
        %v4852 = vunpack.c.h.b16 %v3903
        %v4853 = vunpack.c.l.b16 %v3904
        %v4854 = vunpack.c.l.b16 %v3905
        %v4855 = vunpack.c.h.b16 %v3905
        %v4856 = vunpack.c.l.b16 %v3906
        %v4857 = vunpack.c.l.b16 %v3907
        %v4858 = vunpack.c.h.b16 %v3907
        %v4859 = vunpack.c.l.b16 %v3908
        %v4860 = vunpack.c.l.b16 %v3909
        %v4861 = vunpack.c.h.b16 %v3909
        %v4862 = vunpack.c.l.b16 %v3910
        %v4863 = vunpack.c.l.b16 %v3911
        %v4864 = vunpack.c.h.b16 %v3911
        %v4865 = vunpack.c.l.b16 %v3912
        %v4866 = vunpack.c.l.b16 %v3913
        %v4867 = vunpack.c.h.b16 %v3913
        %v4868 = vunpack.c.l.b16 %v3914
        %v4869 = vunpack.c.l.b16 %v3915
        %v4870 = vunpack.c.h.b16 %v3915
        %v4871 = vunpack.c.l.b16 %v3916
        %v4872 = vunpack.c.l.b16 %v3917
        %v4873 = vunpack.c.h.b16 %v3917
        %v4874 = vunpack.c.l.b16 %v3918
        %v4875 = vunpack.c.l.b16 %v3919
        %v4876 = vunpack.c.h.b16 %v3919
        %v4877 = vunpack.c.l.b16 %v3920
        %v4878 = vunpack.c.l.b16 %v3921
        %v4879 = vunpack.c.h.b16 %v3921
        %v4880 = vunpack.c.l.b16 %v3922
        %v4881 = vunpack.c.l.b16 %v3923
        %v4882 = vunpack.c.h.b16 %v3923
        %v4883 = vunpack.c.l.b16 %v3924
        %v4884 = vunpack.c.l.b16 %v3925
        %v4885 = vunpack.c.h.b16 %v3925
        %v4886 = vunpack.c.l.b16 %v3926
        %v4887 = vunpack.c.l.b16 %v3927
        %v4888 = vunpack.c.h.b16 %v3927
        %v4889 = vunpack.c.l.b16 %v3928
        %v4890 = vunpack.c.l.b16 %v3929
        %v4891 = vunpack.c.h.b16 %v3929
        %v4892 = vunpack.c.l.b16 %v3930
        %v4893 = vunpack.c.l.b16 %v3931
        %v4894 = vunpack.c.h.b16 %v3931
        %v4895 = vunpack.c.l.b16 %v3932
        %v4896 = vunpack.c.l.b16 %v3933
        %v4897 = vunpack.c.h.b16 %v3933
        %v4898 = vunpack.c.l.b16 %v3934
        %v4899 = vunpack.c.l.b16 %v3935
        %v4900 = vunpack.c.h.b16 %v3935
        %v4901 = vunpack.c.l.b16 %v3936
        %v4902 = vunpack.c.l.b16 %v3937
        %v4903 = vunpack.c.h.b16 %v3937
        %v4904 = vunpack.c.l.b16 %v3938
        %v4905 = vunpack.c.l.b16 %v3939
        %v4906 = vunpack.c.h.b16 %v3939
        %v4907 = vunpack.c.l.b16 %v3940
        %v4908 = vunpack.c.l.b16 %v3941
        %v4909 = vunpack.c.h.b16 %v3941
        %v4910 = vunpack.c.l.b16 %v3942
        %v4911 = vunpack.c.l.b16 %v3943
        %v4912 = vunpack.c.h.b16 %v3943
        %v4913 = vunpack.c.l.b16 %v3944
        %v4914 = vunpack.c.l.b16 %v3945
        %v4915 = vunpack.c.h.b16 %v3945
        %v4916 = vunpack.c.l.b16 %v3946
        %v4917 = vunpack.c.l.b16 %v3947
        %v4918 = vunpack.c.h.b16 %v3947
        %v4919 = vunpack.c.l.b16 %v3948
        %v4920 = vunpack.c.l.b16 %v3949
        %v4921 = vunpack.c.h.b16 %v3949
        %v4922 = vunpack.c.l.b16 %v3950
        %v4923 = vunpack.c.l.b16 %v3951
        %v4924 = vunpack.c.h.b16 %v3951
        %v4925 = vunpack.c.l.b16 %v3952
        %v4926 = vunpack.c.l.b16 %v3953
        %v4927 = vunpack.c.h.b16 %v3953
        %v4928 = vunpack.c.l.b16 %v3954
        %v4929 = vunpack.c.l.b16 %v3955
        %v4930 = vunpack.c.h.b16 %v3955
        %v4931 = vunpack.c.l.b16 %v3956
        %v4932 = vunpack.c.l.b16 %v3957
        %v4933 = vunpack.c.h.b16 %v3957
        %v4934 = vunpack.c.l.b16 %v3958
        %v4935 = vunpack.c.l.b16 %v3959
        %v4936 = vunpack.c.h.b16 %v3959
        %v4937 = vunpack.c.l.b16 %v3960
        %v4938 = vpack.c.b16 %v4365, %v4362
        %v4939 = vpack.c.b16 %v4366, %v4363
        %v4940 = vpack.c.b16 %v4367, %v4364
        %v4941 = vpack.c.b16 %v4371, %v4368
        %v4942 = vpack.c.b16 %v4372, %v4369
        %v4943 = vpack.c.b16 %v4373, %v4370
        %v4944 = vpack.c.b16 %v4377, %v4374
        %v4945 = vpack.c.b16 %v4378, %v4375
        %v4946 = vpack.c.b16 %v4379, %v4376
        %v4947 = vpack.c.b16 %v4383, %v4380
        %v4948 = vpack.c.b16 %v4384, %v4381
        %v4949 = vpack.c.b16 %v4385, %v4382
        %v4950 = vpack.c.b16 %v4389, %v4386
        %v4951 = vpack.c.b16 %v4390, %v4387
        %v4952 = vpack.c.b16 %v4391, %v4388
        %v4953 = vpack.c.b16 %v4395, %v4392
        %v4954 = vpack.c.b16 %v4396, %v4393
        %v4955 = vpack.c.b16 %v4397, %v4394
        %v4956 = vpack.c.b16 %v4401, %v4398
        %v4957 = vpack.c.b16 %v4402, %v4399
        %v4958 = vpack.c.b16 %v4403, %v4400
        %v4959 = vpack.c.b16 %v4407, %v4404
        %v4960 = vpack.c.b16 %v4408, %v4405
        %v4961 = vpack.c.b16 %v4409, %v4406
        %v4962 = vpack.c.b16 %v4413, %v4410
        %v4963 = vpack.c.b16 %v4414, %v4411
        %v4964 = vpack.c.b16 %v4415, %v4412
        %v4965 = vpack.c.b16 %v4419, %v4416
        %v4966 = vpack.c.b16 %v4420, %v4417
        %v4967 = vpack.c.b16 %v4421, %v4418
        %v4968 = vpack.c.b16 %v4425, %v4422
        %v4969 = vpack.c.b16 %v4426, %v4423
        %v4970 = vpack.c.b16 %v4427, %v4424
        %v4971 = vpack.c.b16 %v4431, %v4428
        %v4972 = vpack.c.b16 %v4432, %v4429
        %v4973 = vpack.c.b16 %v4433, %v4430
        %v4974 = vpack.c.b16 %v4437, %v4434
        %v4975 = vpack.c.b16 %v4438, %v4435
        %v4976 = vpack.c.b16 %v4439, %v4436
        %v4977 = vpack.c.b16 %v4443, %v4440
        %v4978 = vpack.c.b16 %v4444, %v4441
        %v4979 = vpack.c.b16 %v4445, %v4442
        %v4980 = vpack.c.b16 %v4449, %v4446
        %v4981 = vpack.c.b16 %v4450, %v4447
        %v4982 = vpack.c.b16 %v4451, %v4448
        %v4983 = vpack.c.b16 %v4455, %v4452
        %v4984 = vpack.c.b16 %v4456, %v4453
        %v4985 = vpack.c.b16 %v4457, %v4454
        %v4986 = vpack.c.b16 %v4461, %v4458
        %v4987 = vpack.c.b16 %v4462, %v4459
        %v4988 = vpack.c.b16 %v4463, %v4460
        %v4989 = vpack.c.b16 %v4467, %v4464
        %v4990 = vpack.c.b16 %v4468, %v4465
        %v4991 = vpack.c.b16 %v4469, %v4466
        %v4992 = vpack.c.b16 %v4473, %v4470
        %v4993 = vpack.c.b16 %v4474, %v4471
        %v4994 = vpack.c.b16 %v4475, %v4472
        %v4995 = vpack.c.b16 %v4479, %v4476
        %v4996 = vpack.c.b16 %v4480, %v4477
        %v4997 = vpack.c.b16 %v4481, %v4478
        %v4998 = vpack.c.b16 %v4485, %v4482
        %v4999 = vpack.c.b16 %v4486, %v4483
        %v5000 = vpack.c.b16 %v4487, %v4484
        %v5001 = vpack.c.b16 %v4491, %v4488
        %v5002 = vpack.c.b16 %v4492, %v4489
        %v5003 = vpack.c.b16 %v4493, %v4490
        %v5004 = vpack.c.b16 %v4497, %v4494
        %v5005 = vpack.c.b16 %v4498, %v4495
        %v5006 = vpack.c.b16 %v4499, %v4496
        %v5007 = vpack.c.b16 %v4503, %v4500
        %v5008 = vpack.c.b16 %v4504, %v4501
        %v5009 = vpack.c.b16 %v4505, %v4502
        %v5010 = vpack.c.b16 %v4509, %v4506
        %v5011 = vpack.c.b16 %v4510, %v4507
        %v5012 = vpack.c.b16 %v4511, %v4508
        %v5013 = vpack.c.b16 %v4515, %v4512
        %v5014 = vpack.c.b16 %v4516, %v4513
        %v5015 = vpack.c.b16 %v4517, %v4514
        %v5016 = vpack.c.b16 %v4521, %v4518
        %v5017 = vpack.c.b16 %v4522, %v4519
        %v5018 = vpack.c.b16 %v4523, %v4520
        %v5019 = vpack.c.b16 %v4527, %v4524
        %v5020 = vpack.c.b16 %v4528, %v4525
        %v5021 = vpack.c.b16 %v4529, %v4526
        %v5022 = vpack.c.b16 %v4533, %v4530
        %v5023 = vpack.c.b16 %v4534, %v4531
        %v5024 = vpack.c.b16 %v4535, %v4532
        %v5025 = vpack.c.b16 %v4539, %v4536
        %v5026 = vpack.c.b16 %v4540, %v4537
        %v5027 = vpack.c.b16 %v4541, %v4538
        %v5028 = vpack.c.b16 %v4545, %v4542
        %v5029 = vpack.c.b16 %v4546, %v4543
        %v5030 = vpack.c.b16 %v4547, %v4544
        %v5031 = vpack.c.b16 %v4551, %v4548
        %v5032 = vpack.c.b16 %v4552, %v4549
        %v5033 = vpack.c.b16 %v4553, %v4550
        %v5034 = vpack.c.b16 %v4557, %v4554
        %v5035 = vpack.c.b16 %v4558, %v4555
        %v5036 = vpack.c.b16 %v4559, %v4556
        %v5037 = vpack.c.b16 %v4563, %v4560
        %v5038 = vpack.c.b16 %v4564, %v4561
        %v5039 = vpack.c.b16 %v4565, %v4562
        %v5040 = vpack.c.b16 %v4569, %v4566
        %v5041 = vpack.c.b16 %v4570, %v4567
        %v5042 = vpack.c.b16 %v4571, %v4568
        %v5043 = vpack.c.b16 %v4575, %v4572
        %v5044 = vpack.c.b16 %v4576, %v4573
        %v5045 = vpack.c.b16 %v4577, %v4574
        %v5046 = vpack.c.b16 %v4581, %v4578
        %v5047 = vpack.c.b16 %v4582, %v4579
        %v5048 = vpack.c.b16 %v4583, %v4580
        %v5049 = vpack.c.b16 %v4587, %v4584
        %v5050 = vpack.c.b16 %v4588, %v4585
        %v5051 = vpack.c.b16 %v4589, %v4586
        %v5052 = vpack.c.b16 %v4593, %v4590
        %v5053 = vpack.c.b16 %v4594, %v4591
        %v5054 = vpack.c.b16 %v4595, %v4592
        %v5055 = vpack.c.b16 %v4599, %v4596
        %v5056 = vpack.c.b16 %v4600, %v4597
        %v5057 = vpack.c.b16 %v4601, %v4598
        %v5058 = vpack.c.b16 %v4605, %v4602
        %v5059 = vpack.c.b16 %v4606, %v4603
        %v5060 = vpack.c.b16 %v4607, %v4604
        %v5061 = vpack.c.b16 %v4611, %v4608
        %v5062 = vpack.c.b16 %v4612, %v4609
        %v5063 = vpack.c.b16 %v4613, %v4610
        %v5064 = vpack.c.b16 %v4617, %v4614
        %v5065 = vpack.c.b16 %v4618, %v4615
        %v5066 = vpack.c.b16 %v4619, %v4616
        %v5067 = vpack.c.b16 %v4623, %v4620
        %v5068 = vpack.c.b16 %v4624, %v4621
        %v5069 = vpack.c.b16 %v4625, %v4622
        %v5070 = vpack.c.b16 %v4629, %v4626
        %v5071 = vpack.c.b16 %v4630, %v4627
        %v5072 = vpack.c.b16 %v4631, %v4628
        %v5073 = vpack.c.b16 %v4635, %v4632
        %v5074 = vpack.c.b16 %v4636, %v4633
        %v5075 = vpack.c.b16 %v4637, %v4634
        %v5076 = vpack.c.b16 %v4641, %v4638
        %v5077 = vpack.c.b16 %v4642, %v4639
        %v5078 = vpack.c.b16 %v4643, %v4640
        %v5079 = vpack.c.b16 %v4647, %v4644
        %v5080 = vpack.c.b16 %v4648, %v4645
        %v5081 = vpack.c.b16 %v4649, %v4646
        %v5082 = vpack.c.b16 %v4653, %v4650
        %v5083 = vpack.c.b16 %v4654, %v4651
        %v5084 = vpack.c.b16 %v4655, %v4652
        %v5085 = vpack.c.b16 %v4659, %v4656
        %v5086 = vpack.c.b16 %v4660, %v4657
        %v5087 = vpack.c.b16 %v4661, %v4658
        %v5088 = vpack.c.b16 %v4665, %v4662
        %v5089 = vpack.c.b16 %v4666, %v4663
        %v5090 = vpack.c.b16 %v4667, %v4664
        %v5091 = vpack.c.b16 %v4671, %v4668
        %v5092 = vpack.c.b16 %v4672, %v4669
        %v5093 = vpack.c.b16 %v4673, %v4670
        %v5094 = vpack.c.b16 %v4677, %v4674
        %v5095 = vpack.c.b16 %v4678, %v4675
        %v5096 = vpack.c.b16 %v4679, %v4676
        %v5097 = vpack.c.b16 %v4683, %v4680
        %v5098 = vpack.c.b16 %v4684, %v4681
        %v5099 = vpack.c.b16 %v4685, %v4682
        %v5100 = vpack.c.b16 %v4689, %v4686
        %v5101 = vpack.c.b16 %v4690, %v4687
        %v5102 = vpack.c.b16 %v4691, %v4688
        %v5103 = vpack.c.b16 %v4695, %v4692
        %v5104 = vpack.c.b16 %v4696, %v4693
        %v5105 = vpack.c.b16 %v4697, %v4694
        %v5106 = vpack.c.b16 %v4701, %v4698
        %v5107 = vpack.c.b16 %v4702, %v4699
        %v5108 = vpack.c.b16 %v4703, %v4700
        %v5109 = vpack.c.b16 %v4707, %v4704
        %v5110 = vpack.c.b16 %v4708, %v4705
        %v5111 = vpack.c.b16 %v4709, %v4706
        %v5112 = vpack.c.b16 %v4713, %v4710
        %v5113 = vpack.c.b16 %v4714, %v4711
        %v5114 = vpack.c.b16 %v4715, %v4712
        %v5115 = vpack.c.b16 %v4719, %v4716
        %v5116 = vpack.c.b16 %v4720, %v4717
        %v5117 = vpack.c.b16 %v4721, %v4718
        %v5118 = vpack.c.b16 %v4725, %v4722
        %v5119 = vpack.c.b16 %v4726, %v4723
        %v5120 = vpack.c.b16 %v4727, %v4724
        %v5121 = vpack.c.b16 %v4731, %v4728
        %v5122 = vpack.c.b16 %v4732, %v4729
        %v5123 = vpack.c.b16 %v4733, %v4730
        %v5124 = vpack.c.b16 %v4737, %v4734
        %v5125 = vpack.c.b16 %v4738, %v4735
        %v5126 = vpack.c.b16 %v4739, %v4736
        %v5127 = vpack.c.b16 %v4743, %v4740
        %v5128 = vpack.c.b16 %v4744, %v4741
        %v5129 = vpack.c.b16 %v4745, %v4742
        %v5130 = vpack.c.b16 %v4749, %v4746
        %v5131 = vpack.c.b16 %v4750, %v4747
        %v5132 = vpack.c.b16 %v4751, %v4748
        %v5133 = vpack.c.b16 %v4755, %v4752
        %v5134 = vpack.c.b16 %v4756, %v4753
        %v5135 = vpack.c.b16 %v4757, %v4754
        %v5136 = vpack.c.b16 %v4761, %v4758
        %v5137 = vpack.c.b16 %v4762, %v4759
        %v5138 = vpack.c.b16 %v4763, %v4760
        %v5139 = vpack.c.b16 %v4767, %v4764
        %v5140 = vpack.c.b16 %v4768, %v4765
        %v5141 = vpack.c.b16 %v4769, %v4766
        %v5142 = vpack.c.b16 %v4773, %v4770
        %v5143 = vpack.c.b16 %v4774, %v4771
        %v5144 = vpack.c.b16 %v4775, %v4772
        %v5145 = vpack.c.b16 %v4779, %v4776
        %v5146 = vpack.c.b16 %v4780, %v4777
        %v5147 = vpack.c.b16 %v4781, %v4778
        %v5148 = vpack.c.b16 %v4785, %v4782
        %v5149 = vpack.c.b16 %v4786, %v4783
        %v5150 = vpack.c.b16 %v4787, %v4784
        %v5151 = vpack.c.b16 %v4791, %v4788
        %v5152 = vpack.c.b16 %v4792, %v4789
        %v5153 = vpack.c.b16 %v4793, %v4790
        %v5154 = vpack.c.b16 %v4797, %v4794
        %v5155 = vpack.c.b16 %v4798, %v4795
        %v5156 = vpack.c.b16 %v4799, %v4796
        %v5157 = vpack.c.b16 %v4803, %v4800
        %v5158 = vpack.c.b16 %v4804, %v4801
        %v5159 = vpack.c.b16 %v4805, %v4802
        %v5160 = vpack.c.b16 %v4809, %v4806
        %v5161 = vpack.c.b16 %v4810, %v4807
        %v5162 = vpack.c.b16 %v4811, %v4808
        %v5163 = vpack.c.b16 %v4815, %v4812
        %v5164 = vpack.c.b16 %v4816, %v4813
        %v5165 = vpack.c.b16 %v4817, %v4814
        %v5166 = vpack.c.b16 %v4821, %v4818
        %v5167 = vpack.c.b16 %v4822, %v4819
        %v5168 = vpack.c.b16 %v4823, %v4820
        %v5169 = vpack.c.b16 %v4827, %v4824
        %v5170 = vpack.c.b16 %v4828, %v4825
        %v5171 = vpack.c.b16 %v4829, %v4826
        %v5172 = vpack.c.b16 %v4833, %v4830
        %v5173 = vpack.c.b16 %v4834, %v4831
        %v5174 = vpack.c.b16 %v4835, %v4832
        %v5175 = vpack.c.b16 %v4839, %v4836
        %v5176 = vpack.c.b16 %v4840, %v4837
        %v5177 = vpack.c.b16 %v4841, %v4838
        %v5178 = vpack.c.b16 %v4845, %v4842
        %v5179 = vpack.c.b16 %v4846, %v4843
        %v5180 = vpack.c.b16 %v4847, %v4844
        %v5181 = vpack.c.b16 %v4851, %v4848
        %v5182 = vpack.c.b16 %v4852, %v4849
        %v5183 = vpack.c.b16 %v4853, %v4850
        %v5184 = vpack.c.b16 %v4857, %v4854
        %v5185 = vpack.c.b16 %v4858, %v4855
        %v5186 = vpack.c.b16 %v4859, %v4856
        %v5187 = vpack.c.b16 %v4863, %v4860
        %v5188 = vpack.c.b16 %v4864, %v4861
        %v5189 = vpack.c.b16 %v4865, %v4862
        %v5190 = vpack.c.b16 %v4869, %v4866
        %v5191 = vpack.c.b16 %v4870, %v4867
        %v5192 = vpack.c.b16 %v4871, %v4868
        %v5193 = vpack.c.b16 %v4875, %v4872
        %v5194 = vpack.c.b16 %v4876, %v4873
        %v5195 = vpack.c.b16 %v4877, %v4874
        %v5196 = vpack.c.b16 %v4881, %v4878
        %v5197 = vpack.c.b16 %v4882, %v4879
        %v5198 = vpack.c.b16 %v4883, %v4880
        %v5199 = vpack.c.b16 %v4887, %v4884
        %v5200 = vpack.c.b16 %v4888, %v4885
        %v5201 = vpack.c.b16 %v4889, %v4886
        %v5202 = vpack.c.b16 %v4893, %v4890
        %v5203 = vpack.c.b16 %v4894, %v4891
        %v5204 = vpack.c.b16 %v4895, %v4892
        %v5205 = vpack.c.b16 %v4899, %v4896
        %v5206 = vpack.c.b16 %v4900, %v4897
        %v5207 = vpack.c.b16 %v4901, %v4898
        %v5208 = vpack.c.b16 %v4905, %v4902
        %v5209 = vpack.c.b16 %v4906, %v4903
        %v5210 = vpack.c.b16 %v4907, %v4904
        %v5211 = vpack.c.b16 %v4911, %v4908
        %v5212 = vpack.c.b16 %v4912, %v4909
        %v5213 = vpack.c.b16 %v4913, %v4910
        %v5214 = vpack.c.b16 %v4917, %v4914
        %v5215 = vpack.c.b16 %v4918, %v4915
        %v5216 = vpack.c.b16 %v4919, %v4916
        %v5217 = vpack.c.b16 %v4923, %v4920
        %v5218 = vpack.c.b16 %v4924, %v4921
        %v5219 = vpack.c.b16 %v4925, %v4922
        %v5220 = vpack.c.b16 %v4929, %v4926
        %v5221 = vpack.c.b16 %v4930, %v4927
        %v5222 = vpack.c.b16 %v4931, %v4928
        %v5223 = vpack.c.b16 %v4935, %v4932
        %v5224 = vpack.c.b16 %v4936, %v4933
        %v5225 = vpack.c.b16 %v4937, %v4934
        %5514 = vmatprep.subr.bf16.mxu0 %v4939
        %5515 = vmatpush1.bf16.msra.mxu0 %v4938
        %5516 = vmatprep.subr.bf16.mxu0 %v4942
        %5517 = vmatpush1.bf16.msra.mxu0 %v4941
        %5518 = vmatprep.subr.bf16.mxu0 %v4945
        %5519 = vmatpush1.bf16.msra.mxu0 %v4944
        %5520 = vmatprep.subr.bf16.mxu0 %v4948
        %5521 = vmatpush1.bf16.msra.mxu0 %v4947
        %5522 = vmatprep.subr.bf16.mxu0 %v4951
        %5523 = vmatpush1.bf16.msra.mxu0 %v4950
        %5524 = vmatprep.subr.bf16.mxu0 %v4954
        %5525 = vmatpush1.bf16.msra.mxu0 %v4953
        %5526 = vmatprep.subr.bf16.mxu0 %v4957
        %5527 = vmatpush1.bf16.msra.mxu0 %v4956
        %5528 = vmatprep.subr.bf16.mxu0 %v4960
        %5529 = vmatpush1.bf16.msra.mxu0 %v4959
        %5530 = vmatprep.subr.bf16.mxu0 %v4963
        %5531 = vmatpush1.bf16.msra.mxu0 %v4962
        %5532 = vmatprep.subr.bf16.mxu0 %v4966
        %5533 = vmatpush1.bf16.msra.mxu0 %v4965
        %5534 = vmatprep.subr.bf16.mxu0 %v4969
        %5535 = vmatpush1.bf16.msra.mxu0 %v4968
        %5536 = vmatprep.subr.bf16.mxu0 %v4972
        %5537 = vmatpush1.bf16.msra.mxu0 %v4971
        %5538 = vmatprep.subr.bf16.mxu0 %v4975
        %5539 = vmatpush1.bf16.msra.mxu0 %v4974
        %5540 = vmatprep.subr.bf16.mxu0 %v4978
        %5541 = vmatpush1.bf16.msra.mxu0 %v4977
        %5542 = vmatprep.subr.bf16.mxu0 %v4981
        %5543 = vmatpush1.bf16.msra.mxu0 %v4980
        %5544 = vmatprep.subr.bf16.mxu0 %v4984
        %5545 = vmatpush1.bf16.msra.mxu0 %v4983
        %5546 = vmatprep.mubr.bf16.mxu0 %v3530
        %5547 = vmatmul.mubr.bf16.gmra.mrb[0].mxu0 %v3529
        %v5548 = vpop.f32.mrb[0].mxu0
        %v5549 = vadd.f32 %v3966, %v5548
        %v5550 = vpop.f32.mrb[0].mxu0
        %v5551 = vadd.f32 %v3970, %v5550
        %v5552 = vpop.f32.mrb[0].mxu0
        %v5553 = vadd.f32 %v3966, %v5552
        %v5554 = vpop.f32.mrb[0].mxu0
        %v5555 = vadd.f32 %v3970, %v5554
        %5556 = vmatprep.mubr.bf16.mxu0 %v3542
        %5557 = vmatmul.mubr.bf16.gmra.mrb[0].mxu0 %v3541
        %v5558 = vpop.f32.mrb[0].mxu0
        %v5559 = vadd.f32 %v3966, %v5558
        %v5560 = vpop.f32.mrb[0].mxu0
        %v5561 = vadd.f32 %v3970, %v5560
        %v5562 = vpop.f32.mrb[0].mxu0
        %v5563 = vadd.f32 %v3966, %v5562
        %v5564 = vpop.f32.mrb[0].mxu0
        %v5565 = vadd.f32 %v3970, %v5564
        %5566 = vmatprep.mubr.bf16.mxu0 %v3554
        %5567 = vmatmul.mubr.bf16.gmra.mrb[0].mxu0 %v3553
        %v5568 = vpop.f32.mrb[0].mxu0
        %v5569 = vadd.f32 %v3966, %v5568
        %v5570 = vpop.f32.mrb[0].mxu0
        %v5571 = vadd.f32 %v3970, %v5570
        %v5572 = vpop.f32.mrb[0].mxu0
        %v5573 = vadd.f32 %v3966, %v5572
        %v5574 = vpop.f32.mrb[0].mxu0
        %v5575 = vadd.f32 %v3970, %v5574
        %5576 = vmatprep.mubr.bf16.mxu0 %v3566
        %5577 = vmatmul.mubr.bf16.gmra.mrb[0].mxu0 %v3565
        %v5578 = vpop.f32.mrb[0].mxu0
        %v5579 = vadd.f32 %v3966, %v5578
        %v5580 = vpop.f32.mrb[0].mxu0
        %v5581 = vadd.f32 %v3970, %v5580
        %v5582 = vpop.f32.mrb[0].mxu0
        %v5583 = vadd.f32 %v3966, %v5582
        %v5584 = vpop.f32.mrb[0].mxu0
        %v5585 = vadd.f32 %v3970, %v5584
        %5586 = vdwg.mxu0
        %5587 = vmatprep.subr.bf16.mxu0 %v4987
        %5588 = vmatpush1.bf16.msra.mxu0 %v4986
        %5589 = vmatprep.subr.bf16.mxu0 %v4990
        %5590 = vmatpush1.bf16.msra.mxu0 %v4989
        %5591 = vmatprep.subr.bf16.mxu0 %v4993
        %5592 = vmatpush1.bf16.msra.mxu0 %v4992
        %5593 = vmatprep.subr.bf16.mxu0 %v4996
        %5594 = vmatpush1.bf16.msra.mxu0 %v4995
        %5595 = vmatprep.subr.bf16.mxu0 %v4999
        %5596 = vmatpush1.bf16.msra.mxu0 %v4998
        %5597 = vmatprep.subr.bf16.mxu0 %v5002
        %5598 = vmatpush1.bf16.msra.mxu0 %v5001
        %5599 = vmatprep.subr.bf16.mxu0 %v5005
        %5600 = vmatpush1.bf16.msra.mxu0 %v5004
        %5601 = vmatprep.subr.bf16.mxu0 %v5008
        %5602 = vmatpush1.bf16.msra.mxu0 %v5007
        %5603 = vmatprep.subr.bf16.mxu0 %v5011
        %5604 = vmatpush1.bf16.msra.mxu0 %v5010
        %5605 = vmatprep.subr.bf16.mxu0 %v5014
        %5606 = vmatpush1.bf16.msra.mxu0 %v5013
        %5607 = vmatprep.subr.bf16.mxu0 %v5017
        %5608 = vmatpush1.bf16.msra.mxu0 %v5016
        %5609 = vmatprep.subr.bf16.mxu0 %v5020
        %5610 = vmatpush1.bf16.msra.mxu0 %v5019
        %5611 = vmatprep.subr.bf16.mxu0 %v5023
        %5612 = vmatpush1.bf16.msra.mxu0 %v5022
        %5613 = vmatprep.subr.bf16.mxu0 %v5026
        %5614 = vmatpush1.bf16.msra.mxu0 %v5025
        %5615 = vmatprep.subr.bf16.mxu0 %v5029
        %5616 = vmatpush1.bf16.msra.mxu0 %v5028
        %5617 = vmatprep.subr.bf16.mxu0 %v5032
        %5618 = vmatpush1.bf16.msra.mxu0 %v5031
        %5619 = vmatprep.mubr.bf16.mxu0 %v3532
        %5620 = vmatmul.mubr.bf16.gmra.mrb[0].mxu0 %v3531
        %v5621 = vpop.f32.mrb[0].mxu0
        %v5622 = vadd.f32 %v5549, %v5621
        %v5623 = vpop.f32.mrb[0].mxu0
        %v5624 = vadd.f32 %v5551, %v5623
        %v5625 = vpop.f32.mrb[0].mxu0
        %v5626 = vadd.f32 %v5553, %v5625
        %v5627 = vpop.f32.mrb[0].mxu0
        %v5628 = vadd.f32 %v5555, %v5627
        %5629 = vmatprep.mubr.bf16.mxu0 %v3544
        %5630 = vmatmul.mubr.bf16.gmra.mrb[0].mxu0 %v3543
        %v5631 = vpop.f32.mrb[0].mxu0
        %v5632 = vadd.f32 %v5559, %v5631
        %v5633 = vpop.f32.mrb[0].mxu0
        %v5634 = vadd.f32 %v5561, %v5633
        %v5635 = vpop.f32.mrb[0].mxu0
        %v5636 = vadd.f32 %v5563, %v5635
        %v5637 = vpop.f32.mrb[0].mxu0
        %v5638 = vadd.f32 %v5565, %v5637
        %5639 = vmatprep.mubr.bf16.mxu0 %v3556
        %5640 = vmatmul.mubr.bf16.gmra.mrb[0].mxu0 %v3555
        %v5641 = vpop.f32.mrb[0].mxu0
        %v5642 = vadd.f32 %v5569, %v5641
        %v5643 = vpop.f32.mrb[0].mxu0
        %v5644 = vadd.f32 %v5571, %v5643
        %v5645 = vpop.f32.mrb[0].mxu0
        %v5646 = vadd.f32 %v5573, %v5645
        %v5647 = vpop.f32.mrb[0].mxu0
        %v5648 = vadd.f32 %v5575, %v5647
        %5649 = vmatprep.mubr.bf16.mxu0 %v3568
        %5650 = vmatmul.mubr.bf16.gmra.mrb[0].mxu0 %v3567
        %v5651 = vpop.f32.mrb[0].mxu0
        %v5652 = vadd.f32 %v5579, %v5651
        %v5653 = vpop.f32.mrb[0].mxu0
        %v5654 = vadd.f32 %v5581, %v5653
        %v5655 = vpop.f32.mrb[0].mxu0
        %v5656 = vadd.f32 %v5583, %v5655
        %v5657 = vpop.f32.mrb[0].mxu0
        %v5658 = vadd.f32 %v5585, %v5657
        %5659 = vdwg.mxu0
        %5660 = vmatprep.subr.bf16.mxu0 %v5035
        %5661 = vmatpush1.bf16.msra.mxu0 %v5034
        %5662 = vmatprep.subr.bf16.mxu0 %v5038
        %5663 = vmatpush1.bf16.msra.mxu0 %v5037
        %5664 = vmatprep.subr.bf16.mxu0 %v5041
        %5665 = vmatpush1.bf16.msra.mxu0 %v5040
        %5666 = vmatprep.subr.bf16.mxu0 %v5044
        %5667 = vmatpush1.bf16.msra.mxu0 %v5043
        %5668 = vmatprep.subr.bf16.mxu0 %v5047
        %5669 = vmatpush1.bf16.msra.mxu0 %v5046
        %5670 = vmatprep.subr.bf16.mxu0 %v5050
        %5671 = vmatpush1.bf16.msra.mxu0 %v5049
        %5672 = vmatprep.subr.bf16.mxu0 %v5053
        %5673 = vmatpush1.bf16.msra.mxu0 %v5052
        %5674 = vmatprep.subr.bf16.mxu0 %v5056
        %5675 = vmatpush1.bf16.msra.mxu0 %v5055
        %5676 = vmatprep.subr.bf16.mxu0 %v5059
        %5677 = vmatpush1.bf16.msra.mxu0 %v5058
        %5678 = vmatprep.subr.bf16.mxu0 %v5062
        %5679 = vmatpush1.bf16.msra.mxu0 %v5061
        %5680 = vmatprep.subr.bf16.mxu0 %v5065
        %5681 = vmatpush1.bf16.msra.mxu0 %v5064
        %5682 = vmatprep.subr.bf16.mxu0 %v5068
        %5683 = vmatpush1.bf16.msra.mxu0 %v5067
        %5684 = vmatprep.subr.bf16.mxu0 %v5071
        %5685 = vmatpush1.bf16.msra.mxu0 %v5070
        %5686 = vmatprep.subr.bf16.mxu0 %v5074
        %5687 = vmatpush1.bf16.msra.mxu0 %v5073
        %5688 = vmatprep.subr.bf16.mxu0 %v5077
        %5689 = vmatpush1.bf16.msra.mxu0 %v5076
        %5690 = vmatprep.subr.bf16.mxu0 %v5080
        %5691 = vmatpush1.bf16.msra.mxu0 %v5079
        %5692 = vmatprep.mubr.bf16.mxu0 %v3534
        %5693 = vmatmul.mubr.bf16.gmra.mrb[0].mxu0 %v3533
        %v5694 = vpop.f32.mrb[0].mxu0
        %v5695 = vadd.f32 %v5622, %v5694
        %v5696 = vpop.f32.mrb[0].mxu0
        %v5697 = vadd.f32 %v5624, %v5696
        %v5698 = vpop.f32.mrb[0].mxu0
        %v5699 = vadd.f32 %v5626, %v5698
        %v5700 = vpop.f32.mrb[0].mxu0
        %v5701 = vadd.f32 %v5628, %v5700
        %5702 = vmatprep.mubr.bf16.mxu0 %v3546
        %5703 = vmatmul.mubr.bf16.gmra.mrb[0].mxu0 %v3545
        %v5704 = vpop.f32.mrb[0].mxu0
        %v5705 = vadd.f32 %v5632, %v5704
        %v5706 = vpop.f32.mrb[0].mxu0
        %v5707 = vadd.f32 %v5634, %v5706
        %v5708 = vpop.f32.mrb[0].mxu0
        %v5709 = vadd.f32 %v5636, %v5708
        %v5710 = vpop.f32.mrb[0].mxu0
        %v5711 = vadd.f32 %v5638, %v5710
        %5712 = vmatprep.mubr.bf16.mxu0 %v3558
        %5713 = vmatmul.mubr.bf16.gmra.mrb[0].mxu0 %v3557
        %v5714 = vpop.f32.mrb[0].mxu0
        %v5715 = vadd.f32 %v5642, %v5714
        %v5716 = vpop.f32.mrb[0].mxu0
        %v5717 = vadd.f32 %v5644, %v5716
        %v5718 = vpop.f32.mrb[0].mxu0
        %v5719 = vadd.f32 %v5646, %v5718
        %v5720 = vpop.f32.mrb[0].mxu0
        %v5721 = vadd.f32 %v5648, %v5720
        %5722 = vmatprep.mubr.bf16.mxu0 %v3570
        %5723 = vmatmul.mubr.bf16.gmra.mrb[0].mxu0 %v3569
        %v5724 = vpop.f32.mrb[0].mxu0
        %v5725 = vadd.f32 %v5652, %v5724
        %v5726 = vpop.f32.mrb[0].mxu0
        %v5727 = vadd.f32 %v5654, %v5726
        %v5728 = vpop.f32.mrb[0].mxu0
        %v5729 = vadd.f32 %v5656, %v5728
        %v5730 = vpop.f32.mrb[0].mxu0
        %v5731 = vadd.f32 %v5658, %v5730
        %5732 = vdwg.mxu0
        %5733 = vmatprep.subr.bf16.mxu0 %v5083
        %5734 = vmatpush1.bf16.msra.mxu0 %v5082
        %5735 = vmatprep.subr.bf16.mxu0 %v5086
        %5736 = vmatpush1.bf16.msra.mxu0 %v5085
        %5737 = vmatprep.subr.bf16.mxu0 %v5089
        %5738 = vmatpush1.bf16.msra.mxu0 %v5088
        %5739 = vmatprep.subr.bf16.mxu0 %v5092
        %5740 = vmatpush1.bf16.msra.mxu0 %v5091
        %5741 = vmatprep.subr.bf16.mxu0 %v5095
        %5742 = vmatpush1.bf16.msra.mxu0 %v5094
        %5743 = vmatprep.subr.bf16.mxu0 %v5098
        %5744 = vmatpush1.bf16.msra.mxu0 %v5097
        %5745 = vmatprep.subr.bf16.mxu0 %v5101
        %5746 = vmatpush1.bf16.msra.mxu0 %v5100
        %5747 = vmatprep.subr.bf16.mxu0 %v5104
        %5748 = vmatpush1.bf16.msra.mxu0 %v5103
        %5749 = vmatprep.subr.bf16.mxu0 %v5107
        %5750 = vmatpush1.bf16.msra.mxu0 %v5106
        %5751 = vmatprep.subr.bf16.mxu0 %v5110
        %5752 = vmatpush1.bf16.msra.mxu0 %v5109
        %5753 = vmatprep.subr.bf16.mxu0 %v5113
        %5754 = vmatpush1.bf16.msra.mxu0 %v5112
        %5755 = vmatprep.subr.bf16.mxu0 %v5116
        %5756 = vmatpush1.bf16.msra.mxu0 %v5115
        %5757 = vmatprep.subr.bf16.mxu0 %v5119
        %5758 = vmatpush1.bf16.msra.mxu0 %v5118
        %5759 = vmatprep.subr.bf16.mxu0 %v5122
        %5760 = vmatpush1.bf16.msra.mxu0 %v5121
        %5761 = vmatprep.subr.bf16.mxu0 %v5125
        %5762 = vmatpush1.bf16.msra.mxu0 %v5124
        %5763 = vmatprep.subr.bf16.mxu0 %v5128
        %5764 = vmatpush1.bf16.msra.mxu0 %v5127
        %5765 = vmatprep.mubr.bf16.mxu0 %v3536
        %5766 = vmatmul.mubr.bf16.gmra.mrb[0].mxu0 %v3535
        %v5767 = vpop.f32.mrb[0].mxu0
        %v5768 = vadd.f32 %v5695, %v5767
        %v5769 = vpop.f32.mrb[0].mxu0
        %v5770 = vadd.f32 %v5697, %v5769
        %v5771 = vpop.f32.mrb[0].mxu0
        %v5772 = vadd.f32 %v5699, %v5771
        %v5773 = vpop.f32.mrb[0].mxu0
        %v5774 = vadd.f32 %v5701, %v5773
        %5775 = vmatprep.mubr.bf16.mxu0 %v3548
        %5776 = vmatmul.mubr.bf16.gmra.mrb[0].mxu0 %v3547
        %v5777 = vpop.f32.mrb[0].mxu0
        %v5778 = vadd.f32 %v5705, %v5777
        %v5779 = vpop.f32.mrb[0].mxu0
        %v5780 = vadd.f32 %v5707, %v5779
        %v5781 = vpop.f32.mrb[0].mxu0
        %v5782 = vadd.f32 %v5709, %v5781
        %v5783 = vpop.f32.mrb[0].mxu0
        %v5784 = vadd.f32 %v5711, %v5783
        %5785 = vmatprep.mubr.bf16.mxu0 %v3560
        %5786 = vmatmul.mubr.bf16.gmra.mrb[0].mxu0 %v3559
        %v5787 = vpop.f32.mrb[0].mxu0
        %v5788 = vadd.f32 %v5715, %v5787
        %v5789 = vpop.f32.mrb[0].mxu0
        %v5790 = vadd.f32 %v5717, %v5789
        %v5791 = vpop.f32.mrb[0].mxu0
        %v5792 = vadd.f32 %v5719, %v5791
        %v5793 = vpop.f32.mrb[0].mxu0
        %v5794 = vadd.f32 %v5721, %v5793
        %5795 = vmatprep.mubr.bf16.mxu0 %v3572
        %5796 = vmatmul.mubr.bf16.gmra.mrb[0].mxu0 %v3571
        %v5797 = vpop.f32.mrb[0].mxu0
        %v5798 = vadd.f32 %v5725, %v5797
        %v5799 = vpop.f32.mrb[0].mxu0
        %v5800 = vadd.f32 %v5727, %v5799
        %v5801 = vpop.f32.mrb[0].mxu0
        %v5802 = vadd.f32 %v5729, %v5801
        %v5803 = vpop.f32.mrb[0].mxu0
        %v5804 = vadd.f32 %v5731, %v5803
        %5805 = vdwg.mxu0
        %5806 = vmatprep.subr.bf16.mxu0 %v5131
        %5807 = vmatpush1.bf16.msra.mxu0 %v5130
        %5808 = vmatprep.subr.bf16.mxu0 %v5134
        %5809 = vmatpush1.bf16.msra.mxu0 %v5133
        %5810 = vmatprep.subr.bf16.mxu0 %v5137
        %5811 = vmatpush1.bf16.msra.mxu0 %v5136
        %5812 = vmatprep.subr.bf16.mxu0 %v5140
        %5813 = vmatpush1.bf16.msra.mxu0 %v5139
        %5814 = vmatprep.subr.bf16.mxu0 %v5143
        %5815 = vmatpush1.bf16.msra.mxu0 %v5142
        %5816 = vmatprep.subr.bf16.mxu0 %v5146
        %5817 = vmatpush1.bf16.msra.mxu0 %v5145
        %5818 = vmatprep.subr.bf16.mxu0 %v5149
        %5819 = vmatpush1.bf16.msra.mxu0 %v5148
        %5820 = vmatprep.subr.bf16.mxu0 %v5152
        %5821 = vmatpush1.bf16.msra.mxu0 %v5151
        %5822 = vmatprep.subr.bf16.mxu0 %v5155
        %5823 = vmatpush1.bf16.msra.mxu0 %v5154
        %5824 = vmatprep.subr.bf16.mxu0 %v5158
        %5825 = vmatpush1.bf16.msra.mxu0 %v5157
        %5826 = vmatprep.subr.bf16.mxu0 %v5161
        %5827 = vmatpush1.bf16.msra.mxu0 %v5160
        %5828 = vmatprep.subr.bf16.mxu0 %v5164
        %5829 = vmatpush1.bf16.msra.mxu0 %v5163
        %5830 = vmatprep.subr.bf16.mxu0 %v5167
        %5831 = vmatpush1.bf16.msra.mxu0 %v5166
        %5832 = vmatprep.subr.bf16.mxu0 %v5170
        %5833 = vmatpush1.bf16.msra.mxu0 %v5169
        %5834 = vmatprep.subr.bf16.mxu0 %v5173
        %5835 = vmatpush1.bf16.msra.mxu0 %v5172
        %5836 = vmatprep.subr.bf16.mxu0 %v5176
        %5837 = vmatpush1.bf16.msra.mxu0 %v5175
        %5838 = vmatprep.mubr.bf16.mxu0 %v3538
        %5839 = vmatmul.mubr.bf16.gmra.mrb[0].mxu0 %v3537
        %v5840 = vpop.f32.mrb[0].mxu0
        %v5841 = vadd.f32 %v5768, %v5840
        %v5842 = vpop.f32.mrb[0].mxu0
        %v5843 = vadd.f32 %v5770, %v5842
        %v5844 = vpop.f32.mrb[0].mxu0
        %v5845 = vadd.f32 %v5772, %v5844
        %v5846 = vpop.f32.mrb[0].mxu0
        %v5847 = vadd.f32 %v5774, %v5846
        %5848 = vmatprep.mubr.bf16.mxu0 %v3550
        %5849 = vmatmul.mubr.bf16.gmra.mrb[0].mxu0 %v3549
        %v5850 = vpop.f32.mrb[0].mxu0
        %v5851 = vadd.f32 %v5778, %v5850
        %v5852 = vpop.f32.mrb[0].mxu0
        %v5853 = vadd.f32 %v5780, %v5852
        %v5854 = vpop.f32.mrb[0].mxu0
        %v5855 = vadd.f32 %v5782, %v5854
        %v5856 = vpop.f32.mrb[0].mxu0
        %v5857 = vadd.f32 %v5784, %v5856
        %5858 = vmatprep.mubr.bf16.mxu0 %v3562
        %5859 = vmatmul.mubr.bf16.gmra.mrb[0].mxu0 %v3561
        %v5860 = vpop.f32.mrb[0].mxu0
        %v5861 = vadd.f32 %v5788, %v5860
        %v5862 = vpop.f32.mrb[0].mxu0
        %v5863 = vadd.f32 %v5790, %v5862
        %v5864 = vpop.f32.mrb[0].mxu0
        %v5865 = vadd.f32 %v5792, %v5864
        %v5866 = vpop.f32.mrb[0].mxu0
        %v5867 = vadd.f32 %v5794, %v5866
        %5868 = vmatprep.mubr.bf16.mxu0 %v3574
        %5869 = vmatmul.mubr.bf16.gmra.mrb[0].mxu0 %v3573
        %v5870 = vpop.f32.mrb[0].mxu0
        %v5871 = vadd.f32 %v5798, %v5870
        %v5872 = vpop.f32.mrb[0].mxu0
        %v5873 = vadd.f32 %v5800, %v5872
        %v5874 = vpop.f32.mrb[0].mxu0
        %v5875 = vadd.f32 %v5802, %v5874
        %v5876 = vpop.f32.mrb[0].mxu0
        %v5877 = vadd.f32 %v5804, %v5876
        %5878 = vdwg.mxu0
        %5879 = vmatprep.subr.bf16.mxu0 %v5179
        %5880 = vmatpush1.bf16.msra.mxu0 %v5178
        %5881 = vmatprep.subr.bf16.mxu0 %v5182
        %5882 = vmatpush1.bf16.msra.mxu0 %v5181
        %5883 = vmatprep.subr.bf16.mxu0 %v5185
        %5884 = vmatpush1.bf16.msra.mxu0 %v5184
        %5885 = vmatprep.subr.bf16.mxu0 %v5188
        %5886 = vmatpush1.bf16.msra.mxu0 %v5187
        %5887 = vmatprep.subr.bf16.mxu0 %v5191
        %5888 = vmatpush1.bf16.msra.mxu0 %v5190
        %5889 = vmatprep.subr.bf16.mxu0 %v5194
        %5890 = vmatpush1.bf16.msra.mxu0 %v5193
        %5891 = vmatprep.subr.bf16.mxu0 %v5197
        %5892 = vmatpush1.bf16.msra.mxu0 %v5196
        %5893 = vmatprep.subr.bf16.mxu0 %v5200
        %5894 = vmatpush1.bf16.msra.mxu0 %v5199
        %5895 = vmatprep.subr.bf16.mxu0 %v5203
        %5896 = vmatpush1.bf16.msra.mxu0 %v5202
        %5897 = vmatprep.subr.bf16.mxu0 %v5206
        %5898 = vmatpush1.bf16.msra.mxu0 %v5205
        %5899 = vmatprep.subr.bf16.mxu0 %v5209
        %5900 = vmatpush1.bf16.msra.mxu0 %v5208
        %5901 = vmatprep.subr.bf16.mxu0 %v5212
        %5902 = vmatpush1.bf16.msra.mxu0 %v5211
        %5903 = vmatprep.subr.bf16.mxu0 %v5215
        %5904 = vmatpush1.bf16.msra.mxu0 %v5214
        %5905 = vmatprep.subr.bf16.mxu0 %v5218
        %5906 = vmatpush1.bf16.msra.mxu0 %v5217
        %5907 = vmatprep.subr.bf16.mxu0 %v5221
        %5908 = vmatpush1.bf16.msra.mxu0 %v5220
        %5909 = vmatprep.subr.bf16.mxu0 %v5224
        %5910 = vmatpush1.bf16.msra.mxu0 %v5223
        %5911 = vmatprep.mubr.bf16.mxu0 %v3540
        %5912 = vmatmul.mubr.bf16.gmra.mrb[0].mxu0 %v3539
        %v5913 = vpop.f32.mrb[0].mxu0
        %v5914 = vadd.f32 %v5841, %v5913
        %v5915 = vpop.f32.mrb[0].mxu0
        %v5916 = vadd.f32 %v5843, %v5915
        %v5917 = vpop.f32.mrb[0].mxu0
        %v5918 = vadd.f32 %v5845, %v5917
        %v5919 = vpop.f32.mrb[0].mxu0
        %v5920 = vadd.f32 %v5847, %v5919
        %5921 = vmatprep.mubr.bf16.mxu0 %v3552
        %5922 = vmatmul.mubr.bf16.gmra.mrb[0].mxu0 %v3551
        %v5923 = vpop.f32.mrb[0].mxu0
        %v5924 = vadd.f32 %v5851, %v5923
        %v5925 = vpop.f32.mrb[0].mxu0
        %v5926 = vadd.f32 %v5853, %v5925
        %v5927 = vpop.f32.mrb[0].mxu0
        %v5928 = vadd.f32 %v5855, %v5927
        %v5929 = vpop.f32.mrb[0].mxu0
        %v5930 = vadd.f32 %v5857, %v5929
        %5931 = vmatprep.mubr.bf16.mxu0 %v3564
        %5932 = vmatmul.mubr.bf16.gmra.mrb[0].mxu0 %v3563
        %v5933 = vpop.f32.mrb[0].mxu0
        %v5934 = vadd.f32 %v5861, %v5933
        %v5935 = vpop.f32.mrb[0].mxu0
        %v5936 = vadd.f32 %v5863, %v5935
        %v5937 = vpop.f32.mrb[0].mxu0
        %v5938 = vadd.f32 %v5865, %v5937
        %v5939 = vpop.f32.mrb[0].mxu0
        %v5940 = vadd.f32 %v5867, %v5939
        %5941 = vmatprep.mubr.bf16.mxu0 %v3576
        %5942 = vmatmul.mubr.bf16.gmra.mrb[0].mxu0 %v3575
        %v5943 = vpop.f32.mrb[0].mxu0
        %v5944 = vadd.f32 %v5871, %v5943
        %v5945 = vpop.f32.mrb[0].mxu0
        %v5946 = vadd.f32 %v5873, %v5945
        %v5947 = vpop.f32.mrb[0].mxu0
        %v5948 = vadd.f32 %v5875, %v5947
        %v5949 = vpop.f32.mrb[0].mxu0
        %v5950 = vadd.f32 %v5877, %v5949
        %5951 = vdwg.mxu0
        %5952 = vmatprep.subr.bf16.mxu0 0
        %5953 = vmatpush1.bf16.msra.mxu0 %v4940
        %5954 = vmatprep.subr.bf16.mxu0 0
        %5955 = vmatpush1.bf16.msra.mxu0 %v4943
        %5956 = vmatprep.subr.bf16.mxu0 0
        %5957 = vmatpush1.bf16.msra.mxu0 %v4946
        %5958 = vmatprep.subr.bf16.mxu0 0
        %5959 = vmatpush1.bf16.msra.mxu0 %v4949
        %5960 = vmatprep.subr.bf16.mxu0 0
        %5961 = vmatpush1.bf16.msra.mxu0 %v4952
        %5962 = vmatprep.subr.bf16.mxu0 0
        %5963 = vmatpush1.bf16.msra.mxu0 %v4955
        %5964 = vmatprep.subr.bf16.mxu0 0
        %5965 = vmatpush1.bf16.msra.mxu0 %v4958
        %5966 = vmatprep.subr.bf16.mxu0 0
        %5967 = vmatpush1.bf16.msra.mxu0 %v4961
        %5968 = vmatprep.subr.bf16.mxu0 0
        %5969 = vmatpush1.bf16.msra.mxu0 %v4964
        %5970 = vmatprep.subr.bf16.mxu0 0
        %5971 = vmatpush1.bf16.msra.mxu0 %v4967
        %5972 = vmatprep.subr.bf16.mxu0 0
        %5973 = vmatpush1.bf16.msra.mxu0 %v4970
        %5974 = vmatprep.subr.bf16.mxu0 0
        %5975 = vmatpush1.bf16.msra.mxu0 %v4973
        %5976 = vmatprep.subr.bf16.mxu0 0
        %5977 = vmatpush1.bf16.msra.mxu0 %v4976
        %5978 = vmatprep.subr.bf16.mxu0 0
        %5979 = vmatpush1.bf16.msra.mxu0 %v4979
        %5980 = vmatprep.subr.bf16.mxu0 0
        %5981 = vmatpush1.bf16.msra.mxu0 %v4982
        %5982 = vmatprep.subr.bf16.mxu0 0
        %5983 = vmatpush1.bf16.msra.mxu0 %v4985
        %5984 = vmatprep.mubr.bf16.mxu0 %v3530
        %5985 = vmatmul.mubr.bf16.gmra.mrb[0].mxu0 %v3529
        %v5986 = vpop.f32.mrb[0].mxu0
        %v5987 = vadd.f32 %v3974, %v5986
        %v5988 = vpop.f32.mrb[0].mxu0
        %v5989 = vpop.f32.mrb[0].mxu0
        %v5990 = vadd.f32 %v3974, %v5989
        %v5991 = vpop.f32.mrb[0].mxu0
        %5992 = vmatprep.mubr.bf16.mxu0 %v3542
        %5993 = vmatmul.mubr.bf16.gmra.mrb[0].mxu0 %v3541
        %v5994 = vpop.f32.mrb[0].mxu0
        %v5995 = vadd.f32 %v3974, %v5994
        %v5996 = vpop.f32.mrb[0].mxu0
        %v5997 = vpop.f32.mrb[0].mxu0
        %v5998 = vadd.f32 %v3974, %v5997
        %v5999 = vpop.f32.mrb[0].mxu0
        %6000 = vmatprep.mubr.bf16.mxu0 %v3554
        %6001 = vmatmul.mubr.bf16.gmra.mrb[0].mxu0 %v3553
        %v6002 = vpop.f32.mrb[0].mxu0
        %v6003 = vadd.f32 %v3974, %v6002
        %v6004 = vpop.f32.mrb[0].mxu0
        %v6005 = vpop.f32.mrb[0].mxu0
        %v6006 = vadd.f32 %v3974, %v6005
        %v6007 = vpop.f32.mrb[0].mxu0
        %6008 = vmatprep.mubr.bf16.mxu0 %v3566
        %6009 = vmatmul.mubr.bf16.gmra.mrb[0].mxu0 %v3565
        %v6010 = vpop.f32.mrb[0].mxu0
        %v6011 = vadd.f32 %v3974, %v6010
        %v6012 = vpop.f32.mrb[0].mxu0
        %v6013 = vpop.f32.mrb[0].mxu0
        %v6014 = vadd.f32 %v3974, %v6013
        %v6015 = vpop.f32.mrb[0].mxu0
        %6016 = vdwg.mxu0
        %6017 = vmatprep.subr.bf16.mxu0 0
        %6018 = vmatpush1.bf16.msra.mxu0 %v4988
        %6019 = vmatprep.subr.bf16.mxu0 0
        %6020 = vmatpush1.bf16.msra.mxu0 %v4991
        %6021 = vmatprep.subr.bf16.mxu0 0
        %6022 = vmatpush1.bf16.msra.mxu0 %v4994
        %6023 = vmatprep.subr.bf16.mxu0 0
        %6024 = vmatpush1.bf16.msra.mxu0 %v4997
        %6025 = vmatprep.subr.bf16.mxu0 0
        %6026 = vmatpush1.bf16.msra.mxu0 %v5000
        %6027 = vmatprep.subr.bf16.mxu0 0
        %6028 = vmatpush1.bf16.msra.mxu0 %v5003
        %6029 = vmatprep.subr.bf16.mxu0 0
        %6030 = vmatpush1.bf16.msra.mxu0 %v5006
        %6031 = vmatprep.subr.bf16.mxu0 0
        %6032 = vmatpush1.bf16.msra.mxu0 %v5009
        %6033 = vmatprep.subr.bf16.mxu0 0
        %6034 = vmatpush1.bf16.msra.mxu0 %v5012
        %6035 = vmatprep.subr.bf16.mxu0 0
        %6036 = vmatpush1.bf16.msra.mxu0 %v5015
        %6037 = vmatprep.subr.bf16.mxu0 0
        %6038 = vmatpush1.bf16.msra.mxu0 %v5018
        %6039 = vmatprep.subr.bf16.mxu0 0
        %6040 = vmatpush1.bf16.msra.mxu0 %v5021
        %6041 = vmatprep.subr.bf16.mxu0 0
        %6042 = vmatpush1.bf16.msra.mxu0 %v5024
        %6043 = vmatprep.subr.bf16.mxu0 0
        %6044 = vmatpush1.bf16.msra.mxu0 %v5027
        %6045 = vmatprep.subr.bf16.mxu0 0
        %6046 = vmatpush1.bf16.msra.mxu0 %v5030
        %6047 = vmatprep.subr.bf16.mxu0 0
        %6048 = vmatpush1.bf16.msra.mxu0 %v5033
        %6049 = vmatprep.mubr.bf16.mxu0 %v3532
        %6050 = vmatmul.mubr.bf16.gmra.mrb[0].mxu0 %v3531
        %v6051 = vpop.f32.mrb[0].mxu0
        %v6052 = vadd.f32 %v5987, %v6051
        %v6053 = vpop.f32.mrb[0].mxu0
        %v6054 = vpop.f32.mrb[0].mxu0
        %v6055 = vadd.f32 %v5990, %v6054
        %v6056 = vpop.f32.mrb[0].mxu0
        %6057 = vmatprep.mubr.bf16.mxu0 %v3544
        %6058 = vmatmul.mubr.bf16.gmra.mrb[0].mxu0 %v3543
        %v6059 = vpop.f32.mrb[0].mxu0
        %v6060 = vadd.f32 %v5995, %v6059
        %v6061 = vpop.f32.mrb[0].mxu0
        %v6062 = vpop.f32.mrb[0].mxu0
        %v6063 = vadd.f32 %v5998, %v6062
        %v6064 = vpop.f32.mrb[0].mxu0
        %6065 = vmatprep.mubr.bf16.mxu0 %v3556
        %6066 = vmatmul.mubr.bf16.gmra.mrb[0].mxu0 %v3555
        %v6067 = vpop.f32.mrb[0].mxu0
        %v6068 = vadd.f32 %v6003, %v6067
        %v6069 = vpop.f32.mrb[0].mxu0
        %v6070 = vpop.f32.mrb[0].mxu0
        %v6071 = vadd.f32 %v6006, %v6070
        %v6072 = vpop.f32.mrb[0].mxu0
        %6073 = vmatprep.mubr.bf16.mxu0 %v3568
        %6074 = vmatmul.mubr.bf16.gmra.mrb[0].mxu0 %v3567
        %v6075 = vpop.f32.mrb[0].mxu0
        %v6076 = vadd.f32 %v6011, %v6075
        %v6077 = vpop.f32.mrb[0].mxu0
        %v6078 = vpop.f32.mrb[0].mxu0
        %v6079 = vadd.f32 %v6014, %v6078
        %v6080 = vpop.f32.mrb[0].mxu0
        %6081 = vdwg.mxu0
        %6082 = vmatprep.subr.bf16.mxu0 0
        %6083 = vmatpush1.bf16.msra.mxu0 %v5036
        %6084 = vmatprep.subr.bf16.mxu0 0
        %6085 = vmatpush1.bf16.msra.mxu0 %v5039
        %6086 = vmatprep.subr.bf16.mxu0 0
        %6087 = vmatpush1.bf16.msra.mxu0 %v5042
        %6088 = vmatprep.subr.bf16.mxu0 0
        %6089 = vmatpush1.bf16.msra.mxu0 %v5045
        %6090 = vmatprep.subr.bf16.mxu0 0
        %6091 = vmatpush1.bf16.msra.mxu0 %v5048
        %6092 = vmatprep.subr.bf16.mxu0 0
        %6093 = vmatpush1.bf16.msra.mxu0 %v5051
        %6094 = vmatprep.subr.bf16.mxu0 0
        %6095 = vmatpush1.bf16.msra.mxu0 %v5054
        %6096 = vmatprep.subr.bf16.mxu0 0
        %6097 = vmatpush1.bf16.msra.mxu0 %v5057
        %6098 = vmatprep.subr.bf16.mxu0 0
        %6099 = vmatpush1.bf16.msra.mxu0 %v5060
        %6100 = vmatprep.subr.bf16.mxu0 0
        %6101 = vmatpush1.bf16.msra.mxu0 %v5063
        %6102 = vmatprep.subr.bf16.mxu0 0
        %6103 = vmatpush1.bf16.msra.mxu0 %v5066
        %6104 = vmatprep.subr.bf16.mxu0 0
        %6105 = vmatpush1.bf16.msra.mxu0 %v5069
        %6106 = vmatprep.subr.bf16.mxu0 0
        %6107 = vmatpush1.bf16.msra.mxu0 %v5072
        %6108 = vmatprep.subr.bf16.mxu0 0
        %6109 = vmatpush1.bf16.msra.mxu0 %v5075
        %6110 = vmatprep.subr.bf16.mxu0 0
        %6111 = vmatpush1.bf16.msra.mxu0 %v5078
        %6112 = vmatprep.subr.bf16.mxu0 0
        %6113 = vmatpush1.bf16.msra.mxu0 %v5081
        %6114 = vmatprep.mubr.bf16.mxu0 %v3534
        %6115 = vmatmul.mubr.bf16.gmra.mrb[0].mxu0 %v3533
        %v6116 = vpop.f32.mrb[0].mxu0
        %v6117 = vadd.f32 %v6052, %v6116
        %v6118 = vpop.f32.mrb[0].mxu0
        %v6119 = vpop.f32.mrb[0].mxu0
        %v6120 = vadd.f32 %v6055, %v6119
        %v6121 = vpop.f32.mrb[0].mxu0
        %6122 = vmatprep.mubr.bf16.mxu0 %v3546
        %6123 = vmatmul.mubr.bf16.gmra.mrb[0].mxu0 %v3545
        %v6124 = vpop.f32.mrb[0].mxu0
        %v6125 = vadd.f32 %v6060, %v6124
        %v6126 = vpop.f32.mrb[0].mxu0
        %v6127 = vpop.f32.mrb[0].mxu0
        %v6128 = vadd.f32 %v6063, %v6127
        %v6129 = vpop.f32.mrb[0].mxu0
        %6130 = vmatprep.mubr.bf16.mxu0 %v3558
        %6131 = vmatmul.mubr.bf16.gmra.mrb[0].mxu0 %v3557
        %v6132 = vpop.f32.mrb[0].mxu0
        %v6133 = vadd.f32 %v6068, %v6132
        %v6134 = vpop.f32.mrb[0].mxu0
        %v6135 = vpop.f32.mrb[0].mxu0
        %v6136 = vadd.f32 %v6071, %v6135
        %v6137 = vpop.f32.mrb[0].mxu0
        %6138 = vmatprep.mubr.bf16.mxu0 %v3570
        %6139 = vmatmul.mubr.bf16.gmra.mrb[0].mxu0 %v3569
        %v6140 = vpop.f32.mrb[0].mxu0
        %v6141 = vadd.f32 %v6076, %v6140
        %v6142 = vpop.f32.mrb[0].mxu0
        %v6143 = vpop.f32.mrb[0].mxu0
        %v6144 = vadd.f32 %v6079, %v6143
        %v6145 = vpop.f32.mrb[0].mxu0
        %6146 = vdwg.mxu0
        %6147 = vmatprep.subr.bf16.mxu0 0
        %6148 = vmatpush1.bf16.msra.mxu0 %v5084
        %6149 = vmatprep.subr.bf16.mxu0 0
        %6150 = vmatpush1.bf16.msra.mxu0 %v5087
        %6151 = vmatprep.subr.bf16.mxu0 0
        %6152 = vmatpush1.bf16.msra.mxu0 %v5090
        %6153 = vmatprep.subr.bf16.mxu0 0
        %6154 = vmatpush1.bf16.msra.mxu0 %v5093
        %6155 = vmatprep.subr.bf16.mxu0 0
        %6156 = vmatpush1.bf16.msra.mxu0 %v5096
        %6157 = vmatprep.subr.bf16.mxu0 0
        %6158 = vmatpush1.bf16.msra.mxu0 %v5099
        %6159 = vmatprep.subr.bf16.mxu0 0
        %6160 = vmatpush1.bf16.msra.mxu0 %v5102
        %6161 = vmatprep.subr.bf16.mxu0 0
        %6162 = vmatpush1.bf16.msra.mxu0 %v5105
        %6163 = vmatprep.subr.bf16.mxu0 0
        %6164 = vmatpush1.bf16.msra.mxu0 %v5108
        %6165 = vmatprep.subr.bf16.mxu0 0
        %6166 = vmatpush1.bf16.msra.mxu0 %v5111
        %6167 = vmatprep.subr.bf16.mxu0 0
        %6168 = vmatpush1.bf16.msra.mxu0 %v5114
        %6169 = vmatprep.subr.bf16.mxu0 0
        %6170 = vmatpush1.bf16.msra.mxu0 %v5117
        %6171 = vmatprep.subr.bf16.mxu0 0
        %6172 = vmatpush1.bf16.msra.mxu0 %v5120
        %6173 = vmatprep.subr.bf16.mxu0 0
        %6174 = vmatpush1.bf16.msra.mxu0 %v5123
        %6175 = vmatprep.subr.bf16.mxu0 0
        %6176 = vmatpush1.bf16.msra.mxu0 %v5126
        %6177 = vmatprep.subr.bf16.mxu0 0
        %6178 = vmatpush1.bf16.msra.mxu0 %v5129
        %6179 = vmatprep.mubr.bf16.mxu0 %v3536
        %6180 = vmatmul.mubr.bf16.gmra.mrb[0].mxu0 %v3535
        %v6181 = vpop.f32.mrb[0].mxu0
        %v6182 = vadd.f32 %v6117, %v6181
        %v6183 = vpop.f32.mrb[0].mxu0
        %v6184 = vpop.f32.mrb[0].mxu0
        %v6185 = vadd.f32 %v6120, %v6184
        %v6186 = vpop.f32.mrb[0].mxu0
        %6187 = vmatprep.mubr.bf16.mxu0 %v3548
        %6188 = vmatmul.mubr.bf16.gmra.mrb[0].mxu0 %v3547
        %v6189 = vpop.f32.mrb[0].mxu0
        %v6190 = vadd.f32 %v6125, %v6189
        %v6191 = vpop.f32.mrb[0].mxu0
        %v6192 = vpop.f32.mrb[0].mxu0
        %v6193 = vadd.f32 %v6128, %v6192
        %v6194 = vpop.f32.mrb[0].mxu0
        %6195 = vmatprep.mubr.bf16.mxu0 %v3560
        %6196 = vmatmul.mubr.bf16.gmra.mrb[0].mxu0 %v3559
        %v6197 = vpop.f32.mrb[0].mxu0
        %v6198 = vadd.f32 %v6133, %v6197
        %v6199 = vpop.f32.mrb[0].mxu0
        %v6200 = vpop.f32.mrb[0].mxu0
        %v6201 = vadd.f32 %v6136, %v6200
        %v6202 = vpop.f32.mrb[0].mxu0
        %6203 = vmatprep.mubr.bf16.mxu0 %v3572
        %6204 = vmatmul.mubr.bf16.gmra.mrb[0].mxu0 %v3571
        %v6205 = vpop.f32.mrb[0].mxu0
        %v6206 = vadd.f32 %v6141, %v6205
        %v6207 = vpop.f32.mrb[0].mxu0
        %v6208 = vpop.f32.mrb[0].mxu0
        %v6209 = vadd.f32 %v6144, %v6208
        %v6210 = vpop.f32.mrb[0].mxu0
        %6211 = vdwg.mxu0
        %6212 = vmatprep.subr.bf16.mxu0 0
        %6213 = vmatpush1.bf16.msra.mxu0 %v5132
        %6214 = vmatprep.subr.bf16.mxu0 0
        %6215 = vmatpush1.bf16.msra.mxu0 %v5135
        %6216 = vmatprep.subr.bf16.mxu0 0
        %6217 = vmatpush1.bf16.msra.mxu0 %v5138
        %6218 = vmatprep.subr.bf16.mxu0 0
        %6219 = vmatpush1.bf16.msra.mxu0 %v5141
        %6220 = vmatprep.subr.bf16.mxu0 0
        %6221 = vmatpush1.bf16.msra.mxu0 %v5144
        %6222 = vmatprep.subr.bf16.mxu0 0
        %6223 = vmatpush1.bf16.msra.mxu0 %v5147
        %6224 = vmatprep.subr.bf16.mxu0 0
        %6225 = vmatpush1.bf16.msra.mxu0 %v5150
        %6226 = vmatprep.subr.bf16.mxu0 0
        %6227 = vmatpush1.bf16.msra.mxu0 %v5153
        %6228 = vmatprep.subr.bf16.mxu0 0
        %6229 = vmatpush1.bf16.msra.mxu0 %v5156
        %6230 = vmatprep.subr.bf16.mxu0 0
        %6231 = vmatpush1.bf16.msra.mxu0 %v5159
        %6232 = vmatprep.subr.bf16.mxu0 0
        %6233 = vmatpush1.bf16.msra.mxu0 %v5162
        %6234 = vmatprep.subr.bf16.mxu0 0
        %6235 = vmatpush1.bf16.msra.mxu0 %v5165
        %6236 = vmatprep.subr.bf16.mxu0 0
        %6237 = vmatpush1.bf16.msra.mxu0 %v5168
        %6238 = vmatprep.subr.bf16.mxu0 0
        %6239 = vmatpush1.bf16.msra.mxu0 %v5171
        %6240 = vmatprep.subr.bf16.mxu0 0
        %6241 = vmatpush1.bf16.msra.mxu0 %v5174
        %6242 = vmatprep.subr.bf16.mxu0 0
        %6243 = vmatpush1.bf16.msra.mxu0 %v5177
        %6244 = vmatprep.mubr.bf16.mxu0 %v3538
        %6245 = vmatmul.mubr.bf16.gmra.mrb[0].mxu0 %v3537
        %v6246 = vpop.f32.mrb[0].mxu0
        %v6247 = vadd.f32 %v6182, %v6246
        %v6248 = vpop.f32.mrb[0].mxu0
        %v6249 = vpop.f32.mrb[0].mxu0
        %v6250 = vadd.f32 %v6185, %v6249
        %v6251 = vpop.f32.mrb[0].mxu0
        %6252 = vmatprep.mubr.bf16.mxu0 %v3550
        %6253 = vmatmul.mubr.bf16.gmra.mrb[0].mxu0 %v3549
        %v6254 = vpop.f32.mrb[0].mxu0
        %v6255 = vadd.f32 %v6190, %v6254
        %v6256 = vpop.f32.mrb[0].mxu0
        %v6257 = vpop.f32.mrb[0].mxu0
        %v6258 = vadd.f32 %v6193, %v6257
        %v6259 = vpop.f32.mrb[0].mxu0
        %6260 = vmatprep.mubr.bf16.mxu0 %v3562
        %6261 = vmatmul.mubr.bf16.gmra.mrb[0].mxu0 %v3561
        %v6262 = vpop.f32.mrb[0].mxu0
        %v6263 = vadd.f32 %v6198, %v6262
        %v6264 = vpop.f32.mrb[0].mxu0
        %v6265 = vpop.f32.mrb[0].mxu0
        %v6266 = vadd.f32 %v6201, %v6265
        %v6267 = vpop.f32.mrb[0].mxu0
        %6268 = vmatprep.mubr.bf16.mxu0 %v3574
        %6269 = vmatmul.mubr.bf16.gmra.mrb[0].mxu0 %v3573
        %v6270 = vpop.f32.mrb[0].mxu0
        %v6271 = vadd.f32 %v6206, %v6270
        %v6272 = vpop.f32.mrb[0].mxu0
        %v6273 = vpop.f32.mrb[0].mxu0
        %v6274 = vadd.f32 %v6209, %v6273
        %v6275 = vpop.f32.mrb[0].mxu0
        %6276 = vdwg.mxu0
        %6277 = vmatprep.subr.bf16.mxu0 0
        %6278 = vmatpush1.bf16.msra.mxu0 %v5180
        %6279 = vmatprep.subr.bf16.mxu0 0
        %6280 = vmatpush1.bf16.msra.mxu0 %v5183
        %6281 = vmatprep.subr.bf16.mxu0 0
        %6282 = vmatpush1.bf16.msra.mxu0 %v5186
        %6283 = vmatprep.subr.bf16.mxu0 0
        %6284 = vmatpush1.bf16.msra.mxu0 %v5189
        %6285 = vmatprep.subr.bf16.mxu0 0
        %6286 = vmatpush1.bf16.msra.mxu0 %v5192
        %6287 = vmatprep.subr.bf16.mxu0 0
        %6288 = vmatpush1.bf16.msra.mxu0 %v5195
        %6289 = vmatprep.subr.bf16.mxu0 0
        %6290 = vmatpush1.bf16.msra.mxu0 %v5198
        %6291 = vmatprep.subr.bf16.mxu0 0
        %6292 = vmatpush1.bf16.msra.mxu0 %v5201
        %6293 = vmatprep.subr.bf16.mxu0 0
        %6294 = vmatpush1.bf16.msra.mxu0 %v5204
        %6295 = vmatprep.subr.bf16.mxu0 0
        %6296 = vmatpush1.bf16.msra.mxu0 %v5207
        %6297 = vmatprep.subr.bf16.mxu0 0
        %6298 = vmatpush1.bf16.msra.mxu0 %v5210
        %6299 = vmatprep.subr.bf16.mxu0 0
        %6300 = vmatpush1.bf16.msra.mxu0 %v5213
        %6301 = vmatprep.subr.bf16.mxu0 0
        %6302 = vmatpush1.bf16.msra.mxu0 %v5216
        %6303 = vmatprep.subr.bf16.mxu0 0
        %6304 = vmatpush1.bf16.msra.mxu0 %v5219
        %6305 = vmatprep.subr.bf16.mxu0 0
        %6306 = vmatpush1.bf16.msra.mxu0 %v5222
        %6307 = vmatprep.subr.bf16.mxu0 0
        %6308 = vmatpush1.bf16.msra.mxu0 %v5225
        %6309 = vmatprep.mubr.bf16.mxu0 %v3540
        %6310 = vmatmul.mubr.bf16.gmra.mrb[0].mxu0 %v3539
        %v6311 = vpop.f32.mrb[0].mxu0
        %v6312 = vadd.f32 %v6247, %v6311
        %v6313 = vpop.f32.mrb[0].mxu0
        %v6314 = vpop.f32.mrb[0].mxu0
        %v6315 = vadd.f32 %v6250, %v6314
        %v6316 = vpop.f32.mrb[0].mxu0
        %6317 = vmatprep.mubr.bf16.mxu0 %v3552
        %6318 = vmatmul.mubr.bf16.gmra.mrb[0].mxu0 %v3551
        %v6319 = vpop.f32.mrb[0].mxu0
        %v6320 = vadd.f32 %v6255, %v6319
        %v6321 = vpop.f32.mrb[0].mxu0
        %v6322 = vpop.f32.mrb[0].mxu0
        %v6323 = vadd.f32 %v6258, %v6322
        %v6324 = vpop.f32.mrb[0].mxu0
        %6325 = vmatprep.mubr.bf16.mxu0 %v3564
        %6326 = vmatmul.mubr.bf16.gmra.mrb[0].mxu0 %v3563
        %v6327 = vpop.f32.mrb[0].mxu0
        %v6328 = vadd.f32 %v6263, %v6327
        %v6329 = vpop.f32.mrb[0].mxu0
        %v6330 = vpop.f32.mrb[0].mxu0
        %v6331 = vadd.f32 %v6266, %v6330
        %v6332 = vpop.f32.mrb[0].mxu0
        %6333 = vmatprep.mubr.bf16.mxu0 %v3576
        %6334 = vmatmul.mubr.bf16.gmra.mrb[0].mxu0 %v3575
        %v6335 = vpop.f32.mrb[0].mxu0
        %v6336 = vadd.f32 %v6271, %v6335
        %v6337 = vpop.f32.mrb[0].mxu0
        %v6338 = vpop.f32.mrb[0].mxu0
        %v6339 = vadd.f32 %v6274, %v6338
        %v6340 = vpop.f32.mrb[0].mxu0
        %6341 = vdwg.mxu0
        %6342 = vst [vmem:[%s297] sm:$0xff] %v5914
        %6343 = vst [vmem:[%s297 + $0x8] sm:$0xff] %v5916
        %6344 = vst [vmem:[%s297 + $0x10] sm:$0xff] %v6312
        %6345 = vst [vmem:[%s297 + $0x18] sm:$0xff] %v5918
        %6346 = vst [vmem:[%s297 + $0x20] sm:$0xff] %v5920
        %6347 = vst [vmem:[%s297 + $0x28] sm:$0xff] %v6315
        %6348 = vst [vmem:[%s297 + $0x30] sm:$0xff] %v5924
        %6349 = vst [vmem:[%s297 + $0x38] sm:$0xff] %v5926
        %6350 = vst [vmem:[%s297 + $0x40] sm:$0xff] %v6320
        %6351 = vst [vmem:[%s297 + $0x48] sm:$0xff] %v5928
        %6352 = vst [vmem:[%s297 + $0x50] sm:$0xff] %v5930
        %6353 = vst [vmem:[%s297 + $0x58] sm:$0xff] %v6323
        %6354 = vst [vmem:[%s297 + $0x60] sm:$0xff] %v5934
        %6355 = vst [vmem:[%s297 + $0x68] sm:$0xff] %v5936
        %6356 = vst [vmem:[%s297 + $0x70] sm:$0xff] %v6328
        %6357 = vst [vmem:[%s297 + $0x78] sm:$0xff] %v5938
        %6358 = vst [vmem:[%s297 + $0x80] sm:$0xff] %v5940
        %6359 = vst [vmem:[%s297 + $0x88] sm:$0xff] %v6331
        %6360 = vst [vmem:[%s297 + $0x90] sm:$0xff] %v5944
        %6361 = vst [vmem:[%s297 + $0x98] sm:$0xff] %v5946
        %6362 = vst [vmem:[%s297 + $0xa0] sm:$0xff] %v6336
        %6363 = vst [vmem:[%s297 + $0xa8] sm:$0xff] %v5948
        %6364 = vst [vmem:[%s297 + $0xb0] sm:$0xff] %v5950
        %6365 = vst [vmem:[%s297 + $0xb8] sm:$0xff] %v6339
        %s6366 = sand.u32 %s142, 1
        %s6367 = scalar_lea.sflag [#allocation4], %s6366
        %s6368 = sand.u32 %s142, 1
        %s6369 = smul.addr %s6368, 192
        %s6370 = scalar_lea.vmem [#allocation11], %s6369
        // Predicated region
        $region61: #{tpu_custom_call.1} parent=39 // pred_check
          %p6371 = pneg %p152
        $region62: #{tpu_custom_call.1} parent=39 // pred_check_branch
          %6373 = sbr.rel (%p6371) target = $region64
        $region63: #{tpu_custom_call.1} parent=39 // pred_region
          %s6374 = smul.u32 8, %s24
          %s6376 = ssub.s32 3072, 3072
          %6377 = vsyncadd %s6367, %s6376
          %s6378 = smul.addr %s6374, 3
          %s6379 = smul.addr %s6378, 128
          %s6380 = scalar_lea.hbm %s5, %s6379
          %s6381 = sshll.u32 %s6370, 4
          %s6382 = int_to_ptr.vmem [resolvable:$true] %s6381
          %6387 = dma.vmem_to_hbm [thread:$0]  %s6382, 3072, %s6380, %s6367, 384, 384, 24
        $region64: #{tpu_custom_call.1} parent=39 // pred_fallthru
          _
      $region40: #{tpu_custom_call.1} parent=5 // pred_fallthru
        _
      %p6388 = scmp.le.s32.totalorder 2, %s19
      // Predicated region
      $region65: #{tpu_custom_call.1} parent=5 // pred_check
        %p6389 = pneg %p6388
      $region66: #{tpu_custom_call.1} parent=5 // pred_check_branch
        %6391 = sbr.rel (%p6389) target = $region68
      $region67: #{tpu_custom_call.1} parent=5 // pred_region
        %s6392 = ssub.s32 %s19, 2
        // Predicated region
        $region69: #{tpu_custom_call.1} parent=67 // pred_check
          %p6393 = pneg %p158
        $region70: #{tpu_custom_call.1} parent=67 // pred_check_branch
          %6395 = sbr.rel (%p6393) target = $region72
        $region71: #{tpu_custom_call.1} parent=67 // pred_region
          %s6396 = sand.u32 %s143, 1
          %s6397 = scalar_lea.sflag [#allocation4], %s6396
          %s6398 = sand.u32 %s143, 1
          %s6399 = smul.addr %s6398, 192
          %s6400 = scalar_lea.vmem [#allocation11], %s6399
          %6401 = dma.done %s6397, 3072
        $region72: #{tpu_custom_call.1} parent=67 // pred_fallthru
          _
      $region68: #{tpu_custom_call.1} parent=5 // pred_fallthru
        _
    $region6: #{tpu_custom_call.1} parent=1 // loop_footer
      %s23 = sadd.s32 1, %s19
    $region7: #{tpu_custom_call.1} parent=1 // loop_footer_branch
      %18 = sbr.rel target = $region3
    $region8: #{tpu_custom_call.1} parent=1 // loop_exit
      _
    %6402 = vsyncpa [#allocation3], 1
    %s6403 = scalar_lea.sflag [#allocation3], 1
    %6404 = vsyncpa %s6403, 1
    %6405 = vsyncpa [#allocation6], 1
    %6406 = vsyncpa [#allocation9], 1
    %6407 = vsyncpa [#allocation4], 1
    %s6408 = scalar_lea.sflag [#allocation4], 1
    %6409 = vsyncpa %s6408, 1

</llo_original>
